<compile_context>
chip_gen: v7x
topology: tpu7x:2x2x1
jax: 0.10.0
libtpu: 0.0.40
codegen_flags: <defaults>
</compile_context>

<pallas_src>
from types import SimpleNamespace

import numpy as np
import jax
import jax.numpy as jnp
from jax.experimental import pallas as pl
from jax.experimental.pallas import tpu as pltpu


# ---------------------------------------------------------------------------
# Pong config (matches the PyTorch module's `pc`)
# ---------------------------------------------------------------------------
pc = SimpleNamespace(
    layer1=SimpleNamespace(channels=8, kernel_size=4, stride=2),
    layer2=SimpleNamespace(channels=16, kernel_size=3, stride=2),
    layer3=SimpleNamespace(channels=16, kernel_size=3, stride=1),
    input_size_fc1=16,   # 16 channels * 1 * 1 spatial after the conv stack on 16x16 input
)
NUM_FRAMES = 4
NUM_ACTIONS = 2
IN_HW = 16
FC1_OUT = 512


def _conv_out(n, k, s):
    return (n - k) // s + 1


OH1 = _conv_out(IN_HW, pc.layer1.kernel_size, pc.layer1.stride)   # 7
OH2 = _conv_out(OH1, pc.layer2.kernel_size, pc.layer2.stride)     # 3
OH3 = _conv_out(OH2, pc.layer3.kernel_size, pc.layer3.stride)     # 1
S1, S2, S3 = OH1 * OH1, OH2 * OH2, OH3 * OH3                      # 49, 9, 1
K1 = NUM_FRAMES * pc.layer1.kernel_size ** 2                      # 64
T2 = pc.layer2.kernel_size ** 2                                   # 9
T3 = pc.layer3.kernel_size ** 2                                   # 9
C1, C2, C3 = pc.layer1.channels, pc.layer2.channels, pc.layer3.channels
assert C3 * S3 == pc.input_size_fc1


# ---------------------------------------------------------------------------
# Fused Pallas kernel: conv1/2/3 + fc1 + fc2 + softmax for one sample
# ---------------------------------------------------------------------------
def _pong_fused_kernel(col1_ref, w1_ref, b1_ref,
                       g2_ref, w2_ref, b2_ref,
                       g3_ref, w3_ref, b3_ref,
                       wf1_ref, bf1_ref, wf2_ref, bf2_ref,
                       o_ref):
    f32 = jnp.float32

    # ---- conv1: (wrapper-built) im2col patches @ W1 + b1, ReLU
    col1 = col1_ref[0]                                                  # [S1, K1]
    h1 = jnp.dot(col1, w1_ref[...], preferred_element_type=f32) + b1_ref[...]
    h1 = jnp.maximum(h1, 0.0)                                           # [S1, C1] channels-last

    # ---- conv2: per-tap gather via constant 0/1 matrices, then per-tap weight matmul
    acc2 = jnp.zeros((S2, C2), f32)
    for t in range(T2):
        p_t = jnp.dot(g2_ref[t], h1, preferred_element_type=f32)        # [S2, C1]
        acc2 = acc2 + jnp.dot(p_t, w2_ref[t], preferred_element_type=f32)
    h2 = jnp.maximum(acc2 + b2_ref[...], 0.0)                           # [S2, C2]

    # ---- conv3 (output spatial is 1x1 -> result IS the fc1 flatten vector)
    acc3 = jnp.zeros((S3, C3), f32)
    for t in range(T3):
        r_t = jnp.dot(g3_ref[t], h2, preferred_element_type=f32)        # [1, C2]
        acc3 = acc3 + jnp.dot(r_t, w3_ref[t], preferred_element_type=f32)
    h3 = jnp.maximum(acc3 + b3_ref[...], 0.0)                           # [1, C3]

    # ---- fc1 + ReLU (lane-dense 512-wide intermediate)
    h4 = jnp.dot(h3, wf1_ref[...], preferred_element_type=f32) + bf1_ref[...]
    h4 = jnp.maximum(h4, 0.0)                                           # [1, 512]

    # ---- fc2 + softmax (== F.softmax(..., dim=1) on a 2-D tensor)
    logits = jnp.dot(h4, wf2_ref[...], preferred_element_type=f32) + bf2_ref[...]  # [1, 2]
    m = jnp.max(logits, axis=-1, keepdims=True)
    e = jnp.exp(logits - m)
    inv = pl.reciprocal(jnp.sum(e, axis=-1, keepdims=True), approx=True)
    o_ref[0] = (e * inv).astype(o_ref.dtype)


# ---------------------------------------------------------------------------
# Compile-time constants: 0/1 gather matrices expressing im2col as matmuls
# ---------------------------------------------------------------------------
def _gather_matrices(in_hw, k, stride):
    """g[t, q, p] = 1 iff input position p feeds output position q at kernel tap t."""
    oh = _conv_out(in_hw, k, stride)
    g = np.zeros((k * k, oh * oh, in_hw * in_hw), np.float32)
    for i in range(k):
        for j in range(k):
            t = i * k + j
            for oy in range(oh):
                for ox in range(oh):
                    g[t, oy * oh + ox, (stride * oy + i) * in_hw + (stride * ox + j)] = 1.0
    return jnp.asarray(g)


def _im2col_conv1(x):
    """x: [B, C, H, W] -> [B, S1, C*k*k] with column order (c, i, j) (matches weight pack)."""
    B, C, H, _ = x.shape
    k, s = pc.layer1.kernel_size, pc.layer1.stride
    oh = _conv_out(H, k, s)
    cols = []
    for i in range(k):
        for j in range(k):
            cols.append(x[:, :, i:i + s * oh:s, j:j + s * oh:s])        # [B, C, oh, oh]
    col = jnp.stack(cols, axis=2)                                       # [B, C, k*k, oh, oh]
    col = col.reshape(B, C * k * k, oh * oh)                            # (c-major, tap-minor)
    return jnp.transpose(col, (0, 2, 1))                                # [B, oh*oh, C*k*k]


# ---------------------------------------------------------------------------
# Parameter init (PyTorch-style uniform) and packing into kernel layouts
# ---------------------------------------------------------------------------
def _init_conv(key, oc, ic, k):
    kw_key, kb_key = jax.random.split(key)
    bound = 1.0 / np.sqrt(ic * k * k)
    w = jax.random.uniform(kw_key, (oc, ic, k, k), jnp.float32, -bound, bound)
    b = jax.random.uniform(kb_key, (oc,), jnp.float32, -bound, bound)
    return w, b


def _init_linear(key, in_f, out_f):
    kw_key, kb_key = jax.random.split(key)
    bound = 1.0 / np.sqrt(in_f)
    w = jax.random.uniform(kw_key, (in_f, out_f), jnp.float32, -bound, bound)  # stored (K, N)
    b = jax.random.uniform(kb_key, (out_f,), jnp.float32, -bound, bound)
    return w, b


def init_params(key):
    k1, k2, k3, k4, k5 = jax.random.split(key, 5)
    return {
        "conv1": _init_conv(k1, C1, NUM_FRAMES, pc.layer1.kernel_size),
        "conv2": _init_conv(k2, C2, C1, pc.layer2.kernel_size),
        "conv3": _init_conv(k3, C3, C2, pc.layer3.kernel_size),
        "fc1": _init_linear(k4, pc.input_size_fc1, FC1_OUT),
        "fc2": _init_linear(k5, FC1_OUT, NUM_ACTIONS),
    }


def pack_kernel_args(params):
    w1, b1 = params["conv1"]
    w2, b2 = params["conv2"]
    w3, b3 = params["conv3"]
    wf1, bf1 = params["fc1"]
    wf2, bf2 = params["fc2"]
    w1m = w1.reshape(C1, K1).T                                          # [K1, C1], rows (c,i,j)
    w2t = jnp.transpose(w2, (2, 3, 1, 0)).reshape(T2, C1, C2)           # [tap, cin, cout]
    w3t = jnp.transpose(w3, (2, 3, 1, 0)).reshape(T3, C2, C3)           # [tap, cin, cout]
    g2 = _gather_matrices(OH1, pc.layer2.kernel_size, pc.layer2.stride)  # [9, 9, 49]
    g3 = _gather_matrices(OH2, pc.layer3.kernel_size, pc.layer3.stride)  # [9, 1, 9]
    return (w1m, b1.reshape(1, C1),
            g2, w2t, b2.reshape(1, C2),
            g3, w3t, b3.reshape(1, C3),
            wf1, bf1.reshape(1, FC1_OUT),
            wf2, bf2.reshape(1, NUM_ACTIONS))


# ---------------------------------------------------------------------------
# Forward pass: one pallas_call for the whole network
# ---------------------------------------------------------------------------
def pong_forward_probs(kernel_args, state):
    """state: [B, num_frames, H, W] (NCHW) -> action probabilities [B, num_actions]."""
    B = state.shape[0]
    col1 = _im2col_conv1(state)                                         # [B, S1, K1]

    def _const_spec(a):
        zeros = (0,) * a.ndim
        return pl.BlockSpec(a.shape, lambda b, _z=zeros: _z)

    in_specs = [pl.BlockSpec((1, S1, K1), lambda b: (b, 0, 0))]
    in_specs += [_const_spec(a) for a in kernel_args]
    out_specs = pl.BlockSpec((1, 1, NUM_ACTIONS), lambda b: (b, 0, 0))

    probs = pl.pallas_call(
        _pong_fused_kernel,
        out_shape=jax.ShapeDtypeStruct((B, 1, NUM_ACTIONS), jnp.float32),
        grid=(B,),
        in_specs=in_specs,
        out_specs=out_specs,
        compiler_params=pltpu.CompilerParams(dimension_semantics=("parallel",)),
    )(col1, *kernel_args)
    return probs.reshape(B, NUM_ACTIONS)


# ---------------------------------------------------------------------------
# Pure-JAX reference (for a correctness check of the fused kernel)
# ---------------------------------------------------------------------------
def reference_probs(params, state):
    x = state
    for name, cfg in (("conv1", pc.layer1), ("conv2", pc.layer2), ("conv3", pc.layer3)):
        w, b = params[name]
        x = jax.lax.conv_general_dilated(
            x, w, window_strides=(cfg.stride, cfg.stride), padding="VALID",
            dimension_numbers=("NCHW", "OIHW", "NCHW"))
        x = jnp.maximum(x + b.reshape(1, -1, 1, 1), 0.0)
    x = x.reshape(x.shape[0], -1)
    wf1, bf1 = params["fc1"]
    x = jnp.maximum(x @ wf1 + bf1, 0.0)
    wf2, bf2 = params["fc2"]
    logits = x @ wf2 + bf2
    return jax.nn.softmax(logits, axis=-1)


# ---------------------------------------------------------------------------
if __name__ == "__main__":
    key = jax.random.PRNGKey(0)
    pkey, xkey = jax.random.split(key)
    params = init_params(pkey)
    kernel_args = pack_kernel_args(params)

    # forward() in the PyTorch module squeezes dim 0 and samples one action -> batch 1.
    state = jax.random.normal(xkey, (1, NUM_FRAMES, IN_HW, IN_HW), jnp.float32)

    forward = jax.jit(pong_forward_probs)
    probs = jax.block_until_ready(forward(kernel_args, state))

    # Correctness check vs pure-JAX reference (loose tol: approx softmax reciprocal).
    ref = jax.block_until_ready(reference_probs(params, state))
    np.testing.assert_allclose(np.asarray(probs), np.asarray(ref), atol=2e-2, rtol=0)

    # Host-side action sampling + log-prob (matches the PyTorch forward semantics;
    # np.random.choice has no device equivalent).
    p = np.asarray(probs)[0]                      # prob_actions.squeeze(0)
    p = p / p.sum()                               # guard fp round-off for np.random.choice
    rng = np.random.default_rng(0)                # deterministic stand-in
    action = int(rng.choice([0, 1], p=p))
    log_prob = jnp.log(probs[0])[action]
    jax.block_until_ready(log_prob)

    assert probs.shape == (1, NUM_ACTIONS)
    assert np.isfinite(np.asarray(log_prob))
    print("KERNEL_OK")
</pallas_src>

<mosaic_0001>
module attributes {stable_mosaic.version = 11 : i64} {
  func.func @_pong_fused_kernel(%arg0: i32, %arg1: memref<1x49x64xf32, #tpu.memory_space<vmem>>, %arg2: memref<64x8xf32, #tpu.memory_space<vmem>>, %arg3: memref<1x8xf32, #tpu.memory_space<vmem>>, %arg4: memref<9x9x49xf32, #tpu.memory_space<vmem>>, %arg5: memref<9x8x16xf32, #tpu.memory_space<vmem>>, %arg6: memref<1x16xf32, #tpu.memory_space<vmem>>, %arg7: memref<9x1x9xf32, #tpu.memory_space<vmem>>, %arg8: memref<9x16x16xf32, #tpu.memory_space<vmem>>, %arg9: memref<1x16xf32, #tpu.memory_space<vmem>>, %arg10: memref<16x512xf32, #tpu.memory_space<vmem>>, %arg11: memref<1x512xf32, #tpu.memory_space<vmem>>, %arg12: memref<512x2xf32, #tpu.memory_space<vmem>>, %arg13: memref<1x2xf32, #tpu.memory_space<vmem>>, %arg14: memref<1x1x2xf32, #tpu.memory_space<vmem>>) attributes {dimension_semantics = [#tpu.dimension_semantics<parallel>], iteration_bounds = array<i64: 1>, scalar_prefetch = 0 : i64, scratch_operands = 0 : i64, tpu.core_type = #tpu.core_type<tc>, window_params = [{transform_indices = @transform_0, window_bounds = array<i64: 1, 49, 64>}, {pipeline_mode = #tpu.pipeline_mode<synchronous>, transform_indices = @transform_1, window_bounds = array<i64: 64, 8>}, {pipeline_mode = #tpu.pipeline_mode<synchronous>, transform_indices = @transform_2, window_bounds = array<i64: 1, 8>}, {pipeline_mode = #tpu.pipeline_mode<synchronous>, transform_indices = @transform_3, window_bounds = array<i64: 9, 9, 49>}, {pipeline_mode = #tpu.pipeline_mode<synchronous>, transform_indices = @transform_4, window_bounds = array<i64: 9, 8, 16>}, {pipeline_mode = #tpu.pipeline_mode<synchronous>, transform_indices = @transform_5, window_bounds = array<i64: 1, 16>}, {pipeline_mode = #tpu.pipeline_mode<synchronous>, transform_indices = @transform_6, window_bounds = array<i64: 9, 1, 9>}, {pipeline_mode = #tpu.pipeline_mode<synchronous>, transform_indices = @transform_7, window_bounds = array<i64: 9, 16, 16>}, {pipeline_mode = #tpu.pipeline_mode<synchronous>, transform_indices = @transform_8, window_bounds = array<i64: 1, 16>}, {pipeline_mode = #tpu.pipeline_mode<synchronous>, transform_indices = @transform_9, window_bounds = array<i64: 16, 512>}, {pipeline_mode = #tpu.pipeline_mode<synchronous>, transform_indices = @transform_10, window_bounds = array<i64: 1, 512>}, {pipeline_mode = #tpu.pipeline_mode<synchronous>, transform_indices = @transform_11, window_bounds = array<i64: 512, 2>}, {pipeline_mode = #tpu.pipeline_mode<synchronous>, transform_indices = @transform_12, window_bounds = array<i64: 1, 2>}, {transform_indices = @transform_13, window_bounds = array<i64: 1, 1, 2>}]} {
    %c0 = arith.constant 0 : index
    %c0_0 = arith.constant 0 : index
    %c0_1 = arith.constant 0 : index
    %0 = vector.load %arg1[%c0, %c0_0, %c0_1] : memref<1x49x64xf32, #tpu.memory_space<vmem>>, vector<1x49x64xf32>
    %1 = vector.shape_cast %0 : vector<1x49x64xf32> to vector<49x64xf32>
    %c0_2 = arith.constant 0 : index
    %c0_3 = arith.constant 0 : index
    %2 = vector.load %arg2[%c0_2, %c0_3] : memref<64x8xf32, #tpu.memory_space<vmem>>, vector<64x8xf32>
    %cst = arith.constant dense<0.000000e+00> : vector<49x8xf32>
    %3 = tpu.matmul %1, %2, %cst {dimension_numbers = #tpu.dot_dimension_numbers<[1], [0], [0], [1], [0, 0, 1, 1], [], []>} : vector<49x64xf32>, vector<64x8xf32>, vector<49x8xf32> -> vector<49x8xf32>
    %c0_4 = arith.constant 0 : index
    %c0_5 = arith.constant 0 : index
    %4 = vector.load %arg3[%c0_4, %c0_5] : memref<1x8xf32, #tpu.memory_space<vmem>>, vector<1x8xf32>
    %5 = vector.broadcast %4 : vector<1x8xf32> to vector<49x8xf32>
    %6 = arith.addf %3, %5 : vector<49x8xf32>
    %cst_6 = arith.constant 0.000000e+00 : f32
    %7 = vector.broadcast %cst_6 : f32 to vector<49x8xf32>
    %8 = arith.maximumf %6, %7 : vector<49x8xf32>
    %cst_7 = arith.constant 0.000000e+00 : f32
    %9 = vector.broadcast %cst_7 : f32 to vector<9x16xf32>
    %c0_8 = arith.constant 0 : index
    %c0_9 = arith.constant 0 : index
    %c0_10 = arith.constant 0 : index
    %10 = vector.load %arg4[%c0_8, %c0_9, %c0_10] : memref<9x9x49xf32, #tpu.memory_space<vmem>>, vector<1x9x49xf32>
    %11 = vector.shape_cast %10 : vector<1x9x49xf32> to vector<9x49xf32>
    %cst_11 = arith.constant dense<0.000000e+00> : vector<9x8xf32>
    %12 = tpu.matmul %11, %8, %cst_11 {dimension_numbers = #tpu.dot_dimension_numbers<[1], [0], [0], [1], [0, 0, 1, 1], [], []>} : vector<9x49xf32>, vector<49x8xf32>, vector<9x8xf32> -> vector<9x8xf32>
    %c0_12 = arith.constant 0 : index
    %c0_13 = arith.constant 0 : index
    %c0_14 = arith.constant 0 : index
    %13 = vector.load %arg5[%c0_12, %c0_13, %c0_14] : memref<9x8x16xf32, #tpu.memory_space<vmem>>, vector<1x8x16xf32>
    %14 = vector.shape_cast %13 : vector<1x8x16xf32> to vector<8x16xf32>
    %cst_15 = arith.constant dense<0.000000e+00> : vector<9x16xf32>
    %15 = tpu.matmul %12, %14, %cst_15 {dimension_numbers = #tpu.dot_dimension_numbers<[1], [0], [0], [1], [0, 0, 1, 1], [], []>} : vector<9x8xf32>, vector<8x16xf32>, vector<9x16xf32> -> vector<9x16xf32>
    %16 = arith.addf %9, %15 : vector<9x16xf32>
    %c1 = arith.constant 1 : index
    %c0_16 = arith.constant 0 : index
    %c0_17 = arith.constant 0 : index
    %17 = vector.load %arg4[%c1, %c0_16, %c0_17] : memref<9x9x49xf32, #tpu.memory_space<vmem>>, vector<1x9x49xf32>
    %18 = vector.shape_cast %17 : vector<1x9x49xf32> to vector<9x49xf32>
    %cst_18 = arith.constant dense<0.000000e+00> : vector<9x8xf32>
    %19 = tpu.matmul %18, %8, %cst_18 {dimension_numbers = #tpu.dot_dimension_numbers<[1], [0], [0], [1], [0, 0, 1, 1], [], []>} : vector<9x49xf32>, vector<49x8xf32>, vector<9x8xf32> -> vector<9x8xf32>
    %c1_19 = arith.constant 1 : index
    %c0_20 = arith.constant 0 : index
    %c0_21 = arith.constant 0 : index
    %20 = vector.load %arg5[%c1_19, %c0_20, %c0_21] : memref<9x8x16xf32, #tpu.memory_space<vmem>>, vector<1x8x16xf32>
    %21 = vector.shape_cast %20 : vector<1x8x16xf32> to vector<8x16xf32>
    %cst_22 = arith.constant dense<0.000000e+00> : vector<9x16xf32>
    %22 = tpu.matmul %19, %21, %cst_22 {dimension_numbers = #tpu.dot_dimension_numbers<[1], [0], [0], [1], [0, 0, 1, 1], [], []>} : vector<9x8xf32>, vector<8x16xf32>, vector<9x16xf32> -> vector<9x16xf32>
    %23 = arith.addf %16, %22 : vector<9x16xf32>
    %c2 = arith.constant 2 : index
    %c0_23 = arith.constant 0 : index
    %c0_24 = arith.constant 0 : index
    %24 = vector.load %arg4[%c2, %c0_23, %c0_24] : memref<9x9x49xf32, #tpu.memory_space<vmem>>, vector<1x9x49xf32>
    %25 = vector.shape_cast %24 : vector<1x9x49xf32> to vector<9x49xf32>
    %cst_25 = arith.constant dense<0.000000e+00> : vector<9x8xf32>
    %26 = tpu.matmul %25, %8, %cst_25 {dimension_numbers = #tpu.dot_dimension_numbers<[1], [0], [0], [1], [0, 0, 1, 1], [], []>} : vector<9x49xf32>, vector<49x8xf32>, vector<9x8xf32> -> vector<9x8xf32>
    %c2_26 = arith.constant 2 : index
    %c0_27 = arith.constant 0 : index
    %c0_28 = arith.constant 0 : index
    %27 = vector.load %arg5[%c2_26, %c0_27, %c0_28] : memref<9x8x16xf32, #tpu.memory_space<vmem>>, vector<1x8x16xf32>
    %28 = vector.shape_cast %27 : vector<1x8x16xf32> to vector<8x16xf32>
    %cst_29 = arith.constant dense<0.000000e+00> : vector<9x16xf32>
    %29 = tpu.matmul %26, %28, %cst_29 {dimension_numbers = #tpu.dot_dimension_numbers<[1], [0], [0], [1], [0, 0, 1, 1], [], []>} : vector<9x8xf32>, vector<8x16xf32>, vector<9x16xf32> -> vector<9x16xf32>
    %30 = arith.addf %23, %29 : vector<9x16xf32>
    %c3 = arith.constant 3 : index
    %c0_30 = arith.constant 0 : index
    %c0_31 = arith.constant 0 : index
    %31 = vector.load %arg4[%c3, %c0_30, %c0_31] : memref<9x9x49xf32, #tpu.memory_space<vmem>>, vector<1x9x49xf32>
    %32 = vector.shape_cast %31 : vector<1x9x49xf32> to vector<9x49xf32>
    %cst_32 = arith.constant dense<0.000000e+00> : vector<9x8xf32>
    %33 = tpu.matmul %32, %8, %cst_32 {dimension_numbers = #tpu.dot_dimension_numbers<[1], [0], [0], [1], [0, 0, 1, 1], [], []>} : vector<9x49xf32>, vector<49x8xf32>, vector<9x8xf32> -> vector<9x8xf32>
    %c3_33 = arith.constant 3 : index
    %c0_34 = arith.constant 0 : index
    %c0_35 = arith.constant 0 : index
    %34 = vector.load %arg5[%c3_33, %c0_34, %c0_35] : memref<9x8x16xf32, #tpu.memory_space<vmem>>, vector<1x8x16xf32>
    %35 = vector.shape_cast %34 : vector<1x8x16xf32> to vector<8x16xf32>
    %cst_36 = arith.constant dense<0.000000e+00> : vector<9x16xf32>
    %36 = tpu.matmul %33, %35, %cst_36 {dimension_numbers = #tpu.dot_dimension_numbers<[1], [0], [0], [1], [0, 0, 1, 1], [], []>} : vector<9x8xf32>, vector<8x16xf32>, vector<9x16xf32> -> vector<9x16xf32>
    %37 = arith.addf %30, %36 : vector<9x16xf32>
    %c4 = arith.constant 4 : index
    %c0_37 = arith.constant 0 : index
    %c0_38 = arith.constant 0 : index
    %38 = vector.load %arg4[%c4, %c0_37, %c0_38] : memref<9x9x49xf32, #tpu.memory_space<vmem>>, vector<1x9x49xf32>
    %39 = vector.shape_cast %38 : vector<1x9x49xf32> to vector<9x49xf32>
    %cst_39 = arith.constant dense<0.000000e+00> : vector<9x8xf32>
    %40 = tpu.matmul %39, %8, %cst_39 {dimension_numbers = #tpu.dot_dimension_numbers<[1], [0], [0], [1], [0, 0, 1, 1], [], []>} : vector<9x49xf32>, vector<49x8xf32>, vector<9x8xf32> -> vector<9x8xf32>
    %c4_40 = arith.constant 4 : index
    %c0_41 = arith.constant 0 : index
    %c0_42 = arith.constant 0 : index
    %41 = vector.load %arg5[%c4_40, %c0_41, %c0_42] : memref<9x8x16xf32, #tpu.memory_space<vmem>>, vector<1x8x16xf32>
    %42 = vector.shape_cast %41 : vector<1x8x16xf32> to vector<8x16xf32>
    %cst_43 = arith.constant dense<0.000000e+00> : vector<9x16xf32>
    %43 = tpu.matmul %40, %42, %cst_43 {dimension_numbers = #tpu.dot_dimension_numbers<[1], [0], [0], [1], [0, 0, 1, 1], [], []>} : vector<9x8xf32>, vector<8x16xf32>, vector<9x16xf32> -> vector<9x16xf32>
    %44 = arith.addf %37, %43 : vector<9x16xf32>
    %c5 = arith.constant 5 : index
    %c0_44 = arith.constant 0 : index
    %c0_45 = arith.constant 0 : index
    %45 = vector.load %arg4[%c5, %c0_44, %c0_45] : memref<9x9x49xf32, #tpu.memory_space<vmem>>, vector<1x9x49xf32>
    %46 = vector.shape_cast %45 : vector<1x9x49xf32> to vector<9x49xf32>
    %cst_46 = arith.constant dense<0.000000e+00> : vector<9x8xf32>
    %47 = tpu.matmul %46, %8, %cst_46 {dimension_numbers = #tpu.dot_dimension_numbers<[1], [0], [0], [1], [0, 0, 1, 1], [], []>} : vector<9x49xf32>, vector<49x8xf32>, vector<9x8xf32> -> vector<9x8xf32>
    %c5_47 = arith.constant 5 : index
    %c0_48 = arith.constant 0 : index
    %c0_49 = arith.constant 0 : index
    %48 = vector.load %arg5[%c5_47, %c0_48, %c0_49] : memref<9x8x16xf32, #tpu.memory_space<vmem>>, vector<1x8x16xf32>
    %49 = vector.shape_cast %48 : vector<1x8x16xf32> to vector<8x16xf32>
    %cst_50 = arith.constant dense<0.000000e+00> : vector<9x16xf32>
    %50 = tpu.matmul %47, %49, %cst_50 {dimension_numbers = #tpu.dot_dimension_numbers<[1], [0], [0], [1], [0, 0, 1, 1], [], []>} : vector<9x8xf32>, vector<8x16xf32>, vector<9x16xf32> -> vector<9x16xf32>
    %51 = arith.addf %44, %50 : vector<9x16xf32>
    %c6 = arith.constant 6 : index
    %c0_51 = arith.constant 0 : index
    %c0_52 = arith.constant 0 : index
    %52 = vector.load %arg4[%c6, %c0_51, %c0_52] : memref<9x9x49xf32, #tpu.memory_space<vmem>>, vector<1x9x49xf32>
    %53 = vector.shape_cast %52 : vector<1x9x49xf32> to vector<9x49xf32>
    %cst_53 = arith.constant dense<0.000000e+00> : vector<9x8xf32>
    %54 = tpu.matmul %53, %8, %cst_53 {dimension_numbers = #tpu.dot_dimension_numbers<[1], [0], [0], [1], [0, 0, 1, 1], [], []>} : vector<9x49xf32>, vector<49x8xf32>, vector<9x8xf32> -> vector<9x8xf32>
    %c6_54 = arith.constant 6 : index
    %c0_55 = arith.constant 0 : index
    %c0_56 = arith.constant 0 : index
    %55 = vector.load %arg5[%c6_54, %c0_55, %c0_56] : memref<9x8x16xf32, #tpu.memory_space<vmem>>, vector<1x8x16xf32>
    %56 = vector.shape_cast %55 : vector<1x8x16xf32> to vector<8x16xf32>
    %cst_57 = arith.constant dense<0.000000e+00> : vector<9x16xf32>
    %57 = tpu.matmul %54, %56, %cst_57 {dimension_numbers = #tpu.dot_dimension_numbers<[1], [0], [0], [1], [0, 0, 1, 1], [], []>} : vector<9x8xf32>, vector<8x16xf32>, vector<9x16xf32> -> vector<9x16xf32>
    %58 = arith.addf %51, %57 : vector<9x16xf32>
    %c7 = arith.constant 7 : index
    %c0_58 = arith.constant 0 : index
    %c0_59 = arith.constant 0 : index
    %59 = vector.load %arg4[%c7, %c0_58, %c0_59] : memref<9x9x49xf32, #tpu.memory_space<vmem>>, vector<1x9x49xf32>
    %60 = vector.shape_cast %59 : vector<1x9x49xf32> to vector<9x49xf32>
    %cst_60 = arith.constant dense<0.000000e+00> : vector<9x8xf32>
    %61 = tpu.matmul %60, %8, %cst_60 {dimension_numbers = #tpu.dot_dimension_numbers<[1], [0], [0], [1], [0, 0, 1, 1], [], []>} : vector<9x49xf32>, vector<49x8xf32>, vector<9x8xf32> -> vector<9x8xf32>
    %c7_61 = arith.constant 7 : index
    %c0_62 = arith.constant 0 : index
    %c0_63 = arith.constant 0 : index
    %62 = vector.load %arg5[%c7_61, %c0_62, %c0_63] : memref<9x8x16xf32, #tpu.memory_space<vmem>>, vector<1x8x16xf32>
    %63 = vector.shape_cast %62 : vector<1x8x16xf32> to vector<8x16xf32>
    %cst_64 = arith.constant dense<0.000000e+00> : vector<9x16xf32>
    %64 = tpu.matmul %61, %63, %cst_64 {dimension_numbers = #tpu.dot_dimension_numbers<[1], [0], [0], [1], [0, 0, 1, 1], [], []>} : vector<9x8xf32>, vector<8x16xf32>, vector<9x16xf32> -> vector<9x16xf32>
    %65 = arith.addf %58, %64 : vector<9x16xf32>
    %c8 = arith.constant 8 : index
    %c0_65 = arith.constant 0 : index
    %c0_66 = arith.constant 0 : index
    %66 = vector.load %arg4[%c8, %c0_65, %c0_66] : memref<9x9x49xf32, #tpu.memory_space<vmem>>, vector<1x9x49xf32>
    %67 = vector.shape_cast %66 : vector<1x9x49xf32> to vector<9x49xf32>
    %cst_67 = arith.constant dense<0.000000e+00> : vector<9x8xf32>
    %68 = tpu.matmul %67, %8, %cst_67 {dimension_numbers = #tpu.dot_dimension_numbers<[1], [0], [0], [1], [0, 0, 1, 1], [], []>} : vector<9x49xf32>, vector<49x8xf32>, vector<9x8xf32> -> vector<9x8xf32>
    %c8_68 = arith.constant 8 : index
    %c0_69 = arith.constant 0 : index
    %c0_70 = arith.constant 0 : index
    %69 = vector.load %arg5[%c8_68, %c0_69, %c0_70] : memref<9x8x16xf32, #tpu.memory_space<vmem>>, vector<1x8x16xf32>
    %70 = vector.shape_cast %69 : vector<1x8x16xf32> to vector<8x16xf32>
    %cst_71 = arith.constant dense<0.000000e+00> : vector<9x16xf32>
    %71 = tpu.matmul %68, %70, %cst_71 {dimension_numbers = #tpu.dot_dimension_numbers<[1], [0], [0], [1], [0, 0, 1, 1], [], []>} : vector<9x8xf32>, vector<8x16xf32>, vector<9x16xf32> -> vector<9x16xf32>
    %72 = arith.addf %65, %71 : vector<9x16xf32>
    %c0_72 = arith.constant 0 : index
    %c0_73 = arith.constant 0 : index
    %73 = vector.load %arg6[%c0_72, %c0_73] : memref<1x16xf32, #tpu.memory_space<vmem>>, vector<1x16xf32>
    %74 = vector.broadcast %73 : vector<1x16xf32> to vector<9x16xf32>
    %75 = arith.addf %72, %74 : vector<9x16xf32>
    %cst_74 = arith.constant 0.000000e+00 : f32
    %76 = vector.broadcast %cst_74 : f32 to vector<9x16xf32>
    %77 = arith.maximumf %75, %76 : vector<9x16xf32>
    %cst_75 = arith.constant 0.000000e+00 : f32
    %78 = vector.broadcast %cst_75 : f32 to vector<1x16xf32>
    %c0_76 = arith.constant 0 : index
    %c0_77 = arith.constant 0 : index
    %c0_78 = arith.constant 0 : index
    %79 = vector.load %arg7[%c0_76, %c0_77, %c0_78] : memref<9x1x9xf32, #tpu.memory_space<vmem>>, vector<1x1x9xf32>
    %80 = vector.shape_cast %79 : vector<1x1x9xf32> to vector<1x9xf32>
    %cst_79 = arith.constant dense<0.000000e+00> : vector<1x16xf32>
    %81 = tpu.matmul %80, %77, %cst_79 {dimension_numbers = #tpu.dot_dimension_numbers<[1], [0], [0], [1], [0, 0, 1, 1], [], []>} : vector<1x9xf32>, vector<9x16xf32>, vector<1x16xf32> -> vector<1x16xf32>
    %c0_80 = arith.constant 0 : index
    %c0_81 = arith.constant 0 : index
    %c0_82 = arith.constant 0 : index
    %82 = vector.load %arg8[%c0_80, %c0_81, %c0_82] : memref<9x16x16xf32, #tpu.memory_space<vmem>>, vector<1x16x16xf32>
    %83 = vector.shape_cast %82 : vector<1x16x16xf32> to vector<16x16xf32>
    %cst_83 = arith.constant dense<0.000000e+00> : vector<1x16xf32>
    %84 = tpu.matmul %81, %83, %cst_83 {dimension_numbers = #tpu.dot_dimension_numbers<[1], [0], [0], [1], [0, 0, 1, 1], [], []>} : vector<1x16xf32>, vector<16x16xf32>, vector<1x16xf32> -> vector<1x16xf32>
    %85 = arith.addf %78, %84 : vector<1x16xf32>
    %c1_84 = arith.constant 1 : index
    %c0_85 = arith.constant 0 : index
    %c0_86 = arith.constant 0 : index
    %86 = vector.load %arg7[%c1_84, %c0_85, %c0_86] : memref<9x1x9xf32, #tpu.memory_space<vmem>>, vector<1x1x9xf32>
    %87 = vector.shape_cast %86 : vector<1x1x9xf32> to vector<1x9xf32>
    %cst_87 = arith.constant dense<0.000000e+00> : vector<1x16xf32>
    %88 = tpu.matmul %87, %77, %cst_87 {dimension_numbers = #tpu.dot_dimension_numbers<[1], [0], [0], [1], [0, 0, 1, 1], [], []>} : vector<1x9xf32>, vector<9x16xf32>, vector<1x16xf32> -> vector<1x16xf32>
    %c1_88 = arith.constant 1 : index
    %c0_89 = arith.constant 0 : index
    %c0_90 = arith.constant 0 : index
    %89 = vector.load %arg8[%c1_88, %c0_89, %c0_90] : memref<9x16x16xf32, #tpu.memory_space<vmem>>, vector<1x16x16xf32>
    %90 = vector.shape_cast %89 : vector<1x16x16xf32> to vector<16x16xf32>
    %cst_91 = arith.constant dense<0.000000e+00> : vector<1x16xf32>
    %91 = tpu.matmul %88, %90, %cst_91 {dimension_numbers = #tpu.dot_dimension_numbers<[1], [0], [0], [1], [0, 0, 1, 1], [], []>} : vector<1x16xf32>, vector<16x16xf32>, vector<1x16xf32> -> vector<1x16xf32>
    %92 = arith.addf %85, %91 : vector<1x16xf32>
    %c2_92 = arith.constant 2 : index
    %c0_93 = arith.constant 0 : index
    %c0_94 = arith.constant 0 : index
    %93 = vector.load %arg7[%c2_92, %c0_93, %c0_94] : memref<9x1x9xf32, #tpu.memory_space<vmem>>, vector<1x1x9xf32>
    %94 = vector.shape_cast %93 : vector<1x1x9xf32> to vector<1x9xf32>
    %cst_95 = arith.constant dense<0.000000e+00> : vector<1x16xf32>
    %95 = tpu.matmul %94, %77, %cst_95 {dimension_numbers = #tpu.dot_dimension_numbers<[1], [0], [0], [1], [0, 0, 1, 1], [], []>} : vector<1x9xf32>, vector<9x16xf32>, vector<1x16xf32> -> vector<1x16xf32>
    %c2_96 = arith.constant 2 : index
    %c0_97 = arith.constant 0 : index
    %c0_98 = arith.constant 0 : index
    %96 = vector.load %arg8[%c2_96, %c0_97, %c0_98] : memref<9x16x16xf32, #tpu.memory_space<vmem>>, vector<1x16x16xf32>
    %97 = vector.shape_cast %96 : vector<1x16x16xf32> to vector<16x16xf32>
    %cst_99 = arith.constant dense<0.000000e+00> : vector<1x16xf32>
    %98 = tpu.matmul %95, %97, %cst_99 {dimension_numbers = #tpu.dot_dimension_numbers<[1], [0], [0], [1], [0, 0, 1, 1], [], []>} : vector<1x16xf32>, vector<16x16xf32>, vector<1x16xf32> -> vector<1x16xf32>
    %99 = arith.addf %92, %98 : vector<1x16xf32>
    %c3_100 = arith.constant 3 : index
    %c0_101 = arith.constant 0 : index
    %c0_102 = arith.constant 0 : index
    %100 = vector.load %arg7[%c3_100, %c0_101, %c0_102] : memref<9x1x9xf32, #tpu.memory_space<vmem>>, vector<1x1x9xf32>
    %101 = vector.shape_cast %100 : vector<1x1x9xf32> to vector<1x9xf32>
    %cst_103 = arith.constant dense<0.000000e+00> : vector<1x16xf32>
    %102 = tpu.matmul %101, %77, %cst_103 {dimension_numbers = #tpu.dot_dimension_numbers<[1], [0], [0], [1], [0, 0, 1, 1], [], []>} : vector<1x9xf32>, vector<9x16xf32>, vector<1x16xf32> -> vector<1x16xf32>
    %c3_104 = arith.constant 3 : index
    %c0_105 = arith.constant 0 : index
    %c0_106 = arith.constant 0 : index
    %103 = vector.load %arg8[%c3_104, %c0_105, %c0_106] : memref<9x16x16xf32, #tpu.memory_space<vmem>>, vector<1x16x16xf32>
    %104 = vector.shape_cast %103 : vector<1x16x16xf32> to vector<16x16xf32>
    %cst_107 = arith.constant dense<0.000000e+00> : vector<1x16xf32>
    %105 = tpu.matmul %102, %104, %cst_107 {dimension_numbers = #tpu.dot_dimension_numbers<[1], [0], [0], [1], [0, 0, 1, 1], [], []>} : vector<1x16xf32>, vector<16x16xf32>, vector<1x16xf32> -> vector<1x16xf32>
    %106 = arith.addf %99, %105 : vector<1x16xf32>
    %c4_108 = arith.constant 4 : index
    %c0_109 = arith.constant 0 : index
    %c0_110 = arith.constant 0 : index
    %107 = vector.load %arg7[%c4_108, %c0_109, %c0_110] : memref<9x1x9xf32, #tpu.memory_space<vmem>>, vector<1x1x9xf32>
    %108 = vector.shape_cast %107 : vector<1x1x9xf32> to vector<1x9xf32>
    %cst_111 = arith.constant dense<0.000000e+00> : vector<1x16xf32>
    %109 = tpu.matmul %108, %77, %cst_111 {dimension_numbers = #tpu.dot_dimension_numbers<[1], [0], [0], [1], [0, 0, 1, 1], [], []>} : vector<1x9xf32>, vector<9x16xf32>, vector<1x16xf32> -> vector<1x16xf32>
    %c4_112 = arith.constant 4 : index
    %c0_113 = arith.constant 0 : index
    %c0_114 = arith.constant 0 : index
    %110 = vector.load %arg8[%c4_112, %c0_113, %c0_114] : memref<9x16x16xf32, #tpu.memory_space<vmem>>, vector<1x16x16xf32>
    %111 = vector.shape_cast %110 : vector<1x16x16xf32> to vector<16x16xf32>
    %cst_115 = arith.constant dense<0.000000e+00> : vector<1x16xf32>
    %112 = tpu.matmul %109, %111, %cst_115 {dimension_numbers = #tpu.dot_dimension_numbers<[1], [0], [0], [1], [0, 0, 1, 1], [], []>} : vector<1x16xf32>, vector<16x16xf32>, vector<1x16xf32> -> vector<1x16xf32>
    %113 = arith.addf %106, %112 : vector<1x16xf32>
    %c5_116 = arith.constant 5 : index
    %c0_117 = arith.constant 0 : index
    %c0_118 = arith.constant 0 : index
    %114 = vector.load %arg7[%c5_116, %c0_117, %c0_118] : memref<9x1x9xf32, #tpu.memory_space<vmem>>, vector<1x1x9xf32>
    %115 = vector.shape_cast %114 : vector<1x1x9xf32> to vector<1x9xf32>
    %cst_119 = arith.constant dense<0.000000e+00> : vector<1x16xf32>
    %116 = tpu.matmul %115, %77, %cst_119 {dimension_numbers = #tpu.dot_dimension_numbers<[1], [0], [0], [1], [0, 0, 1, 1], [], []>} : vector<1x9xf32>, vector<9x16xf32>, vector<1x16xf32> -> vector<1x16xf32>
    %c5_120 = arith.constant 5 : index
    %c0_121 = arith.constant 0 : index
    %c0_122 = arith.constant 0 : index
    %117 = vector.load %arg8[%c5_120, %c0_121, %c0_122] : memref<9x16x16xf32, #tpu.memory_space<vmem>>, vector<1x16x16xf32>
    %118 = vector.shape_cast %117 : vector<1x16x16xf32> to vector<16x16xf32>
    %cst_123 = arith.constant dense<0.000000e+00> : vector<1x16xf32>
    %119 = tpu.matmul %116, %118, %cst_123 {dimension_numbers = #tpu.dot_dimension_numbers<[1], [0], [0], [1], [0, 0, 1, 1], [], []>} : vector<1x16xf32>, vector<16x16xf32>, vector<1x16xf32> -> vector<1x16xf32>
    %120 = arith.addf %113, %119 : vector<1x16xf32>
    %c6_124 = arith.constant 6 : index
    %c0_125 = arith.constant 0 : index
    %c0_126 = arith.constant 0 : index
    %121 = vector.load %arg7[%c6_124, %c0_125, %c0_126] : memref<9x1x9xf32, #tpu.memory_space<vmem>>, vector<1x1x9xf32>
    %122 = vector.shape_cast %121 : vector<1x1x9xf32> to vector<1x9xf32>
    %cst_127 = arith.constant dense<0.000000e+00> : vector<1x16xf32>
    %123 = tpu.matmul %122, %77, %cst_127 {dimension_numbers = #tpu.dot_dimension_numbers<[1], [0], [0], [1], [0, 0, 1, 1], [], []>} : vector<1x9xf32>, vector<9x16xf32>, vector<1x16xf32> -> vector<1x16xf32>
    %c6_128 = arith.constant 6 : index
    %c0_129 = arith.constant 0 : index
    %c0_130 = arith.constant 0 : index
    %124 = vector.load %arg8[%c6_128, %c0_129, %c0_130] : memref<9x16x16xf32, #tpu.memory_space<vmem>>, vector<1x16x16xf32>
    %125 = vector.shape_cast %124 : vector<1x16x16xf32> to vector<16x16xf32>
    %cst_131 = arith.constant dense<0.000000e+00> : vector<1x16xf32>
    %126 = tpu.matmul %123, %125, %cst_131 {dimension_numbers = #tpu.dot_dimension_numbers<[1], [0], [0], [1], [0, 0, 1, 1], [], []>} : vector<1x16xf32>, vector<16x16xf32>, vector<1x16xf32> -> vector<1x16xf32>
    %127 = arith.addf %120, %126 : vector<1x16xf32>
    %c7_132 = arith.constant 7 : index
    %c0_133 = arith.constant 0 : index
    %c0_134 = arith.constant 0 : index
    %128 = vector.load %arg7[%c7_132, %c0_133, %c0_134] : memref<9x1x9xf32, #tpu.memory_space<vmem>>, vector<1x1x9xf32>
    %129 = vector.shape_cast %128 : vector<1x1x9xf32> to vector<1x9xf32>
    %cst_135 = arith.constant dense<0.000000e+00> : vector<1x16xf32>
    %130 = tpu.matmul %129, %77, %cst_135 {dimension_numbers = #tpu.dot_dimension_numbers<[1], [0], [0], [1], [0, 0, 1, 1], [], []>} : vector<1x9xf32>, vector<9x16xf32>, vector<1x16xf32> -> vector<1x16xf32>
    %c7_136 = arith.constant 7 : index
    %c0_137 = arith.constant 0 : index
    %c0_138 = arith.constant 0 : index
    %131 = vector.load %arg8[%c7_136, %c0_137, %c0_138] : memref<9x16x16xf32, #tpu.memory_space<vmem>>, vector<1x16x16xf32>
    %132 = vector.shape_cast %131 : vector<1x16x16xf32> to vector<16x16xf32>
    %cst_139 = arith.constant dense<0.000000e+00> : vector<1x16xf32>
    %133 = tpu.matmul %130, %132, %cst_139 {dimension_numbers = #tpu.dot_dimension_numbers<[1], [0], [0], [1], [0, 0, 1, 1], [], []>} : vector<1x16xf32>, vector<16x16xf32>, vector<1x16xf32> -> vector<1x16xf32>
    %134 = arith.addf %127, %133 : vector<1x16xf32>
    %c8_140 = arith.constant 8 : index
    %c0_141 = arith.constant 0 : index
    %c0_142 = arith.constant 0 : index
    %135 = vector.load %arg7[%c8_140, %c0_141, %c0_142] : memref<9x1x9xf32, #tpu.memory_space<vmem>>, vector<1x1x9xf32>
    %136 = vector.shape_cast %135 : vector<1x1x9xf32> to vector<1x9xf32>
    %cst_143 = arith.constant dense<0.000000e+00> : vector<1x16xf32>
    %137 = tpu.matmul %136, %77, %cst_143 {dimension_numbers = #tpu.dot_dimension_numbers<[1], [0], [0], [1], [0, 0, 1, 1], [], []>} : vector<1x9xf32>, vector<9x16xf32>, vector<1x16xf32> -> vector<1x16xf32>
    %c8_144 = arith.constant 8 : index
    %c0_145 = arith.constant 0 : index
    %c0_146 = arith.constant 0 : index
    %138 = vector.load %arg8[%c8_144, %c0_145, %c0_146] : memref<9x16x16xf32, #tpu.memory_space<vmem>>, vector<1x16x16xf32>
    %139 = vector.shape_cast %138 : vector<1x16x16xf32> to vector<16x16xf32>
    %cst_147 = arith.constant dense<0.000000e+00> : vector<1x16xf32>
    %140 = tpu.matmul %137, %139, %cst_147 {dimension_numbers = #tpu.dot_dimension_numbers<[1], [0], [0], [1], [0, 0, 1, 1], [], []>} : vector<1x16xf32>, vector<16x16xf32>, vector<1x16xf32> -> vector<1x16xf32>
    %141 = arith.addf %134, %140 : vector<1x16xf32>
    %c0_148 = arith.constant 0 : index
    %c0_149 = arith.constant 0 : index
    %142 = vector.load %arg9[%c0_148, %c0_149] : memref<1x16xf32, #tpu.memory_space<vmem>>, vector<1x16xf32>
    %143 = arith.addf %141, %142 : vector<1x16xf32>
    %cst_150 = arith.constant 0.000000e+00 : f32
    %144 = vector.broadcast %cst_150 : f32 to vector<1x16xf32>
    %145 = arith.maximumf %143, %144 : vector<1x16xf32>
    %c0_151 = arith.constant 0 : index
    %c0_152 = arith.constant 0 : index
    %146 = vector.load %arg10[%c0_151, %c0_152] : memref<16x512xf32, #tpu.memory_space<vmem>>, vector<16x512xf32>
    %cst_153 = arith.constant dense<0.000000e+00> : vector<1x512xf32>
    %147 = tpu.matmul %145, %146, %cst_153 {dimension_numbers = #tpu.dot_dimension_numbers<[1], [0], [0], [1], [0, 0, 1, 1], [], []>} : vector<1x16xf32>, vector<16x512xf32>, vector<1x512xf32> -> vector<1x512xf32>
    %c0_154 = arith.constant 0 : index
    %c0_155 = arith.constant 0 : index
    %148 = vector.load %arg11[%c0_154, %c0_155] : memref<1x512xf32, #tpu.memory_space<vmem>>, vector<1x512xf32>
    %149 = arith.addf %147, %148 : vector<1x512xf32>
    %cst_156 = arith.constant 0.000000e+00 : f32
    %150 = vector.broadcast %cst_156 : f32 to vector<1x512xf32>
    %151 = arith.maximumf %149, %150 : vector<1x512xf32>
    %c0_157 = arith.constant 0 : index
    %c0_158 = arith.constant 0 : index
    %152 = vector.load %arg12[%c0_157, %c0_158] : memref<512x2xf32, #tpu.memory_space<vmem>>, vector<512x2xf32>
    %cst_159 = arith.constant dense<0.000000e+00> : vector<1x2xf32>
    %153 = tpu.matmul %151, %152, %cst_159 {dimension_numbers = #tpu.dot_dimension_numbers<[1], [0], [0], [1], [0, 0, 1, 1], [], []>} : vector<1x512xf32>, vector<512x2xf32>, vector<1x2xf32> -> vector<1x2xf32>
    %c0_160 = arith.constant 0 : index
    %c0_161 = arith.constant 0 : index
    %154 = vector.load %arg13[%c0_160, %c0_161] : memref<1x2xf32, #tpu.memory_space<vmem>>, vector<1x2xf32>
    %155 = arith.addf %153, %154 : vector<1x2xf32>
    %cst_162 = arith.constant dense<0xFF800000> : vector<1xf32>
    %156 = vector.multi_reduction <maximumf>, %155, %cst_162 [1] : vector<1x2xf32> to vector<1xf32>
    %157 = vector.shape_cast %156 : vector<1xf32> to vector<1x1xf32>
    %158 = vector.broadcast %157 : vector<1x1xf32> to vector<1x2xf32>
    %159 = arith.subf %155, %158 : vector<1x2xf32>
    %160 = math.exp %159 : vector<1x2xf32>
    %cst_163 = arith.constant dense<0.000000e+00> : vector<1xf32>
    %161 = vector.multi_reduction <add>, %160, %cst_163 [1] : vector<1x2xf32> to vector<1xf32>
    %162 = vector.shape_cast %161 : vector<1xf32> to vector<1x1xf32>
    %163 = tpu.reciprocal %162 {approx = true} : vector<1x1xf32> -> vector<1x1xf32>
    %164 = vector.broadcast %163 : vector<1x1xf32> to vector<1x2xf32>
    %165 = arith.mulf %160, %164 : vector<1x2xf32>
    %c0_164 = arith.constant 0 : index
    %c0_165 = arith.constant 0 : index
    %c0_166 = arith.constant 0 : index
    %166 = vector.load %arg14[%c0_164, %c0_165, %c0_166] : memref<1x1x2xf32, #tpu.memory_space<vmem>>, vector<1x1x2xf32>
    %167 = vector.shape_cast %166 : vector<1x1x2xf32> to vector<1x2xf32>
    %168 = vector.shape_cast %165 : vector<1x2xf32> to vector<1x1x2xf32>
    tpu.vector_store %arg14[%c0_164, %c0_165, %c0_166], %168 {strides = array<i32>} : memref<1x1x2xf32, #tpu.memory_space<vmem>>, vector<1x1x2xf32>,
    return
  }
  func.func @transform_0(%arg0: i32) -> (i32, i32, i32) {
    %c0_i32 = arith.constant 0 : i32
    %c0_i32_0 = arith.constant 0 : i32
    %c0_i32_1 = arith.constant 0 : i32
    return %arg0, %c0_i32, %c0_i32_0 : i32, i32, i32
  }
  func.func @transform_1(%arg0: i32) -> (i32, i32) {
    %c0_i32 = arith.constant 0 : i32
    %c0_i32_0 = arith.constant 0 : i32
    %c0_i32_1 = arith.constant 0 : i32
    return %c0_i32, %c0_i32_0 : i32, i32
  }
  func.func @transform_2(%arg0: i32) -> (i32, i32) {
    %c0_i32 = arith.constant 0 : i32
    %c0_i32_0 = arith.constant 0 : i32
    %c0_i32_1 = arith.constant 0 : i32
    return %c0_i32, %c0_i32_0 : i32, i32
  }
  func.func @transform_3(%arg0: i32) -> (i32, i32, i32) {
    %c0_i32 = arith.constant 0 : i32
    %c0_i32_0 = arith.constant 0 : i32
    %c0_i32_1 = arith.constant 0 : i32
    %c0_i32_2 = arith.constant 0 : i32
    return %c0_i32, %c0_i32_0, %c0_i32_1 : i32, i32, i32
  }
  func.func @transform_4(%arg0: i32) -> (i32, i32, i32) {
    %c0_i32 = arith.constant 0 : i32
    %c0_i32_0 = arith.constant 0 : i32
    %c0_i32_1 = arith.constant 0 : i32
    %c0_i32_2 = arith.constant 0 : i32
    return %c0_i32, %c0_i32_0, %c0_i32_1 : i32, i32, i32
  }
  func.func @transform_5(%arg0: i32) -> (i32, i32) {
    %c0_i32 = arith.constant 0 : i32
    %c0_i32_0 = arith.constant 0 : i32
    %c0_i32_1 = arith.constant 0 : i32
    return %c0_i32, %c0_i32_0 : i32, i32
  }
  func.func @transform_6(%arg0: i32) -> (i32, i32, i32) {
    %c0_i32 = arith.constant 0 : i32
    %c0_i32_0 = arith.constant 0 : i32
    %c0_i32_1 = arith.constant 0 : i32
    %c0_i32_2 = arith.constant 0 : i32
    return %c0_i32, %c0_i32_0, %c0_i32_1 : i32, i32, i32
  }
  func.func @transform_7(%arg0: i32) -> (i32, i32, i32) {
    %c0_i32 = arith.constant 0 : i32
    %c0_i32_0 = arith.constant 0 : i32
    %c0_i32_1 = arith.constant 0 : i32
    %c0_i32_2 = arith.constant 0 : i32
    return %c0_i32, %c0_i32_0, %c0_i32_1 : i32, i32, i32
  }
  func.func @transform_8(%arg0: i32) -> (i32, i32) {
    %c0_i32 = arith.constant 0 : i32
    %c0_i32_0 = arith.constant 0 : i32
    %c0_i32_1 = arith.constant 0 : i32
    return %c0_i32, %c0_i32_0 : i32, i32
  }
  func.func @transform_9(%arg0: i32) -> (i32, i32) {
    %c0_i32 = arith.constant 0 : i32
    %c0_i32_0 = arith.constant 0 : i32
    %c0_i32_1 = arith.constant 0 : i32
    return %c0_i32, %c0_i32_0 : i32, i32
  }
  func.func @transform_10(%arg0: i32) -> (i32, i32) {
    %c0_i32 = arith.constant 0 : i32
    %c0_i32_0 = arith.constant 0 : i32
    %c0_i32_1 = arith.constant 0 : i32
    return %c0_i32, %c0_i32_0 : i32, i32
  }
  func.func @transform_11(%arg0: i32) -> (i32, i32) {
    %c0_i32 = arith.constant 0 : i32
    %c0_i32_0 = arith.constant 0 : i32
    %c0_i32_1 = arith.constant 0 : i32
    return %c0_i32, %c0_i32_0 : i32, i32
  }
  func.func @transform_12(%arg0: i32) -> (i32, i32) {
    %c0_i32 = arith.constant 0 : i32
    %c0_i32_0 = arith.constant 0 : i32
    %c0_i32_1 = arith.constant 0 : i32
    return %c0_i32, %c0_i32_0 : i32, i32
  }
  func.func @transform_13(%arg0: i32) -> (i32, i32, i32) {
    %c0_i32 = arith.constant 0 : i32
    %c0_i32_0 = arith.constant 0 : i32
    %c0_i32_1 = arith.constant 0 : i32
    return %arg0, %c0_i32, %c0_i32_0 : i32, i32, i32
  }
}

</mosaic_0001>

<llo_original>
// kernel: pong_forward_probs.1
$region0: #{pong_forward_probs.1}
  #allocation0 [shape = 'u32[]', space=smem, size = 0x4, offset = 0x4, fixed_abs, tag = 'smem constant byte address 0x4 - core index']
  #allocation1 [shape = 'u32[144,128]{1,0:T(1,128)}', space=vmem, size = 0x12000, scoped, tag = 'internal scratch']
  %s0 = inlined_call_operand.vmem [shape: f32[1,49,64], index: 0, kind: input, shape index: {}]
  %s1 = inlined_call_operand.vmem [shape: f32[64,8], index: 1, kind: input, shape index: {}]
  %s2 = inlined_call_operand.vmem [shape: f32[1,8], index: 2, kind: input, shape index: {}]
  %s3 = inlined_call_operand.vmem [shape: f32[9,9,49], index: 3, kind: input, shape index: {}]
  %s4 = inlined_call_operand.vmem [shape: f32[9,8,16], index: 4, kind: input, shape index: {}]
  %s5 = inlined_call_operand.vmem [shape: f32[1,16], index: 5, kind: input, shape index: {}]
  %s6 = inlined_call_operand.vmem [shape: f32[9,1,9], index: 6, kind: input, shape index: {}]
  %s7 = inlined_call_operand.vmem [shape: f32[9,16,16], index: 7, kind: input, shape index: {}]
  %s8 = inlined_call_operand.vmem [shape: f32[1,16], index: 8, kind: input, shape index: {}]
  %s9 = inlined_call_operand.vmem [shape: f32[16,512], index: 9, kind: input, shape index: {}]
  %s10 = inlined_call_operand.vmem [shape: f32[1,512], index: 10, kind: input, shape index: {}]
  %s11 = inlined_call_operand.vmem [shape: f32[512,2], index: 11, kind: input, shape index: {}]
  %s12 = inlined_call_operand.vmem [shape: f32[1,2], index: 12, kind: input, shape index: {}]
  %s13 = inlined_call_operand.hbm [shape: f32[1,1,2], index: 13, kind: output, shape index: {}]
  %s14 = sld [smem:[#allocation0]]
  $region62: #{pong_forward_probs.1} parent=0
    _
  %s16 = ssub.s32 1, %s14
  %s17 = scalar_select 0, %s16, %s14
  $region1: #{pong_forward_probs.1} parent=0
    #allocation2 [shape = 'u8[512]{0}', space=vmem, size = 0x400, scoped, tag = 'output window, operand 0, single buffered']
    #allocation3 [shape = 's32[1]{0}', space=sflag, size = 0x4, scoped, tag = 'scoped memory for pong_forward_probs.1']
    %18 = vsyncpa [#allocation3], 0
    // Predicated region
    $region2: #{pong_forward_probs.1} parent=1 // pred_check
      _
    $region3: #{pong_forward_probs.1} parent=1 // pred_check_branch
      %20 = sbr.rel (0) target = $region5
    $region4: #{pong_forward_probs.1} parent=1 // pred_region
      _
    $region5: #{pong_forward_probs.1} parent=1 // pred_fallthru
      _
    // Predicated region
    $region6: #{pong_forward_probs.1} parent=1 // pred_check
      _
    $region7: #{pong_forward_probs.1} parent=1 // pred_check_branch
      %22 = sbr.rel (0) target = $region9
    $region8: #{pong_forward_probs.1} parent=1 // pred_region
      _
    $region9: #{pong_forward_probs.1} parent=1 // pred_fallthru
      _
    // Predicated region
    $region10: #{pong_forward_probs.1} parent=1 // pred_check
      _
    $region11: #{pong_forward_probs.1} parent=1 // pred_check_branch
      %24 = sbr.rel (0) target = $region13
    $region12: #{pong_forward_probs.1} parent=1 // pred_region
      _
    $region13: #{pong_forward_probs.1} parent=1 // pred_fallthru
      _
    // Predicated region
    $region14: #{pong_forward_probs.1} parent=1 // pred_check
      _
    $region15: #{pong_forward_probs.1} parent=1 // pred_check_branch
      %26 = sbr.rel (0) target = $region17
    $region16: #{pong_forward_probs.1} parent=1 // pred_region
      _
    $region17: #{pong_forward_probs.1} parent=1 // pred_fallthru
      _
    // Predicated region
    $region18: #{pong_forward_probs.1} parent=1 // pred_check
      _
    $region19: #{pong_forward_probs.1} parent=1 // pred_check_branch
      %28 = sbr.rel (0) target = $region21
    $region20: #{pong_forward_probs.1} parent=1 // pred_region
      _
    $region21: #{pong_forward_probs.1} parent=1 // pred_fallthru
      _
    // Predicated region
    $region22: #{pong_forward_probs.1} parent=1 // pred_check
      _
    $region23: #{pong_forward_probs.1} parent=1 // pred_check_branch
      %30 = sbr.rel (0) target = $region25
    $region24: #{pong_forward_probs.1} parent=1 // pred_region
      _
    $region25: #{pong_forward_probs.1} parent=1 // pred_fallthru
      _
    // Predicated region
    $region26: #{pong_forward_probs.1} parent=1 // pred_check
      _
    $region27: #{pong_forward_probs.1} parent=1 // pred_check_branch
      %32 = sbr.rel (0) target = $region29
    $region28: #{pong_forward_probs.1} parent=1 // pred_region
      _
    $region29: #{pong_forward_probs.1} parent=1 // pred_fallthru
      _
    // Predicated region
    $region30: #{pong_forward_probs.1} parent=1 // pred_check
      _
    $region31: #{pong_forward_probs.1} parent=1 // pred_check_branch
      %34 = sbr.rel (0) target = $region33
    $region32: #{pong_forward_probs.1} parent=1 // pred_region
      _
    $region33: #{pong_forward_probs.1} parent=1 // pred_fallthru
      _
    // Predicated region
    $region34: #{pong_forward_probs.1} parent=1 // pred_check
      _
    $region35: #{pong_forward_probs.1} parent=1 // pred_check_branch
      %36 = sbr.rel (0) target = $region37
    $region36: #{pong_forward_probs.1} parent=1 // pred_region
      _
    $region37: #{pong_forward_probs.1} parent=1 // pred_fallthru
      _
    // Predicated region
    $region38: #{pong_forward_probs.1} parent=1 // pred_check
      _
    $region39: #{pong_forward_probs.1} parent=1 // pred_check_branch
      %38 = sbr.rel (0) target = $region41
    $region40: #{pong_forward_probs.1} parent=1 // pred_region
      _
    $region41: #{pong_forward_probs.1} parent=1 // pred_fallthru
      _
    // Predicated region
    $region42: #{pong_forward_probs.1} parent=1 // pred_check
      _
    $region43: #{pong_forward_probs.1} parent=1 // pred_check_branch
      %40 = sbr.rel (0) target = $region45
    $region44: #{pong_forward_probs.1} parent=1 // pred_region
      _
    $region45: #{pong_forward_probs.1} parent=1 // pred_fallthru
      _
    // Predicated region
    $region46: #{pong_forward_probs.1} parent=1 // pred_check
      _
    $region47: #{pong_forward_probs.1} parent=1 // pred_check_branch
      %42 = sbr.rel (0) target = $region49
    $region48: #{pong_forward_probs.1} parent=1 // pred_region
      _
    $region49: #{pong_forward_probs.1} parent=1 // pred_fallthru
      _
    // Predicated region
    $region50: #{pong_forward_probs.1} parent=1 // pred_check
      _
    $region51: #{pong_forward_probs.1} parent=1 // pred_check_branch
      %44 = sbr.rel (0) target = $region53
    $region52: #{pong_forward_probs.1} parent=1 // pred_region
      _
    $region53: #{pong_forward_probs.1} parent=1 // pred_fallthru
      _
    %v45 = vld [vmem:[%s0] sm:$0xff]
    %v46 = vld [vmem:[%s0 + $0x8] sm:$0xff]
    %v47 = vld [vmem:[%s0 + $0x10] sm:$0xff]
    %v48 = vld [vmem:[%s0 + $0x18] sm:$0xff]
    %v49 = vld [vmem:[%s0 + $0x20] sm:$0xff]
    %v50 = vld [vmem:[%s0 + $0x28] sm:$0xff]
    %v51 = vld [vmem:[%s0 + $0x30] sm:$0x1]
    %v52 = vld [vmem:[%s1] sm:$0xff]
    %v53 = vld [vmem:[%s1 + $0x8] sm:$0xff]
    %v54 = vld [vmem:[%s1 + $0x10] sm:$0xff]
    %v55 = vld [vmem:[%s1 + $0x18] sm:$0xff]
    %v56 = vld [vmem:[%s1 + $0x20] sm:$0xff]
    %v57 = vld [vmem:[%s1 + $0x28] sm:$0xff]
    %v58 = vld [vmem:[%s1 + $0x30] sm:$0xff]
    %v59 = vld [vmem:[%s1 + $0x38] sm:$0xff]
    %v60 = vld [vmem:[%s2] sm:$0x1]
    %v62 = vlaneseq
    %v63 = vshrl.u32 %v62, 7
    %v64 = vsub.s32 0, %v63
    %v65 = vrot.slane %v60, %v64
    %vm67 = vcmask 523264
    %v69 = vsel %vm67, %v45, 0
    %v72 = vsel %vm67, %v46, 0
    %v75 = vsel %vm67, %v47, 0
    %v78 = vsel %vm67, %v48, 0
    %v81 = vsel %vm67, %v49, 0
    %v84 = vsel %vm67, %v50, 0
    %v87 = vsel %vm67, %v51, 0
    %89 = vmatprep.subr.mxu0 0.0
    %90 = vmatpush1.msra.mxu0 %v52
    %91 = vmatprep.subr.mxu0 0.0
    %92 = vmatpush1.msra.mxu0 %v53
    %93 = vmatprep.subr.mxu0 0.0
    %94 = vmatpush1.msra.mxu0 %v54
    %95 = vmatprep.subr.mxu0 0.0
    %96 = vmatpush1.msra.mxu0 %v55
    %97 = vmatprep.subr.mxu0 0.0
    %98 = vmatpush1.msra.mxu0 %v56
    %99 = vmatprep.subr.mxu0 0.0
    %100 = vmatpush1.msra.mxu0 %v57
    %101 = vmatprep.subr.mxu0 0.0
    %102 = vmatpush1.msra.mxu0 %v58
    %103 = vmatprep.subr.mxu0 0.0
    %104 = vmatpush1.msra.mxu0 %v59
    %105 = vmatprep.subr.mxu0 0.0
    %106 = vmatpush1.msra.mxu0 0.0
    %107 = vmatprep.subr.mxu0 0.0
    %108 = vmatpush1.msra.mxu0 0.0
    %109 = vmatprep.subr.mxu0 0.0
    %110 = vmatpush1.msra.mxu0 0.0
    %111 = vmatprep.subr.mxu0 0.0
    %112 = vmatpush1.msra.mxu0 0.0
    %113 = vmatprep.subr.mxu0 0.0
    %114 = vmatpush1.msra.mxu0 0.0
    %115 = vmatprep.subr.mxu0 0.0
    %116 = vmatpush1.msra.mxu0 0.0
    %117 = vmatprep.subr.mxu0 0.0
    %118 = vmatpush1.msra.mxu0 0.0
    %119 = vmatprep.subr.mxu0 0.0
    %120 = vmatpush1.msra.mxu0 0.0
    %121 = vmatprep.subr.mxu0 0.0
    %122 = vmatpush1.msra.mxu0 0.0
    %123 = vmatprep.subr.mxu0 0.0
    %124 = vmatpush1.msra.mxu0 0.0
    %125 = vmatprep.subr.mxu0 0.0
    %126 = vmatpush1.msra.mxu0 0.0
    %127 = vmatprep.subr.mxu0 0.0
    %128 = vmatpush1.msra.mxu0 0.0
    %129 = vmatprep.subr.mxu0 0.0
    %130 = vmatpush1.msra.mxu0 0.0
    %131 = vmatprep.subr.mxu0 0.0
    %132 = vmatpush1.msra.mxu0 0.0
    %133 = vmatprep.subr.mxu0 0.0
    %134 = vmatpush1.msra.mxu0 0.0
    %135 = vmatprep.subr.mxu0 0.0
    %136 = vmatpush1.msra.mxu0 0.0
    %137 = vmatprep.subr.mxu0 0.0
    %138 = vmatpush1.msra.mxu0 0.0
    %139 = vmatprep.subr.mxu0 0.0
    %140 = vmatpush1.msra.mxu0 0.0
    %141 = vmatprep.subr.mxu0 0.0
    %142 = vmatpush1.msra.mxu0 0.0
    %143 = vmatprep.subr.mxu0 0.0
    %144 = vmatpush1.msra.mxu0 0.0
    %145 = vmatprep.subr.mxu0 0.0
    %146 = vmatpush1.msra.mxu0 0.0
    %147 = vmatprep.subr.mxu0 0.0
    %148 = vmatpush1.msra.mxu0 0.0
    %149 = vmatprep.subr.mxu0 0.0
    %150 = vmatpush1.msra.mxu0 0.0
    %151 = vmatprep.subr.mxu0 0.0
    %152 = vmatpush1.msra.mxu0 0.0
    %153 = vmatprep.mubr.f32.mxu0 0.0
    %154 = vmatmul.mubr.f32.gmra.mrb[0].mxu0 %v69
    %v155 = vpop.f32.mrb[0].mxu0
    %v156 = vadd.f32 %v65, %v155
    %v157 = vpop.f32.mrb[0].mxu0
    %158 = vmatprep.mubr.f32.mxu0 0.0
    %159 = vmatmul.mubr.f32.gmra.mrb[0].mxu0 %v72
    %v160 = vpop.f32.mrb[0].mxu0
    %v161 = vadd.f32 %v65, %v160
    %v162 = vpop.f32.mrb[0].mxu0
    %163 = vmatprep.mubr.f32.mxu0 0.0
    %164 = vmatmul.mubr.f32.gmra.mrb[0].mxu0 %v75
    %v165 = vpop.f32.mrb[0].mxu0
    %v166 = vadd.f32 %v65, %v165
    %v167 = vpop.f32.mrb[0].mxu0
    %168 = vmatprep.mubr.f32.mxu0 0.0
    %169 = vmatmul.mubr.f32.gmra.mrb[0].mxu0 %v78
    %v170 = vpop.f32.mrb[0].mxu0
    %v171 = vadd.f32 %v65, %v170
    %v172 = vpop.f32.mrb[0].mxu0
    %173 = vmatprep.mubr.f32.mxu0 0.0
    %174 = vmatmul.mubr.f32.gmra.mrb[0].mxu0 %v81
    %v175 = vpop.f32.mrb[0].mxu0
    %v176 = vadd.f32 %v65, %v175
    %v177 = vpop.f32.mrb[0].mxu0
    %178 = vmatprep.mubr.f32.mxu0 0.0
    %179 = vmatmul.mubr.f32.gmra.mrb[0].mxu0 %v84
    %v180 = vpop.f32.mrb[0].mxu0
    %v181 = vadd.f32 %v65, %v180
    %v182 = vpop.f32.mrb[0].mxu0
    %183 = vmatprep.mubr.f32.mxu0 0.0
    %184 = vmatmul.mubr.f32.gmra.mrb[0].mxu0 %v87
    %v185 = vpop.f32.mrb[0].mxu0
    %v186 = vadd.f32 %v65, %v185
    %v187 = vpop.f32.mrb[0].mxu0
    %188 = vdwg.mxu0
    %v189 = vmax.f32 %v156, 0.0
    %v190 = vmax.f32 %v161, 0.0
    %v191 = vmax.f32 %v166, 0.0
    %v192 = vmax.f32 %v171, 0.0
    %v193 = vmax.f32 %v176, 0.0
    %v194 = vmax.f32 %v181, 0.0
    %v195 = vmax.f32 %v186, 0.0
    %v196 = vld [vmem:[%s3] sm:$0xff]
    %v197 = vld [vmem:[%s3 + $0x8] sm:$0x1]
    %vm198 = vcmask 400384
    %v200 = vsel %vm198, %v196, 0
    %v203 = vsel %vm198, %v197, 0
    %vm205 = vcmask 1040384
    %v207 = vsel %vm205, %v195, 0
    %209 = vmatprep.subr.mxu0 0.0
    %210 = vmatpush1.msra.mxu0 %v189
    %211 = vmatprep.subr.mxu0 0.0
    %212 = vmatpush1.msra.mxu0 %v190
    %213 = vmatprep.subr.mxu0 0.0
    %214 = vmatpush1.msra.mxu0 %v191
    %215 = vmatprep.subr.mxu0 0.0
    %216 = vmatpush1.msra.mxu0 %v192
    %217 = vmatprep.subr.mxu0 0.0
    %218 = vmatpush1.msra.mxu0 %v193
    %219 = vmatprep.subr.mxu0 0.0
    %220 = vmatpush1.msra.mxu0 %v194
    %221 = vmatprep.subr.mxu0 0.0
    %222 = vmatpush1.msra.mxu0 %v207
    %223 = vmatprep.subr.mxu0 0.0
    %224 = vmatpush1.msra.mxu0 0.0
    %225 = vmatprep.subr.mxu0 0.0
    %226 = vmatpush1.msra.mxu0 0.0
    %227 = vmatprep.subr.mxu0 0.0
    %228 = vmatpush1.msra.mxu0 0.0
    %229 = vmatprep.subr.mxu0 0.0
    %230 = vmatpush1.msra.mxu0 0.0
    %231 = vmatprep.subr.mxu0 0.0
    %232 = vmatpush1.msra.mxu0 0.0
    %233 = vmatprep.subr.mxu0 0.0
    %234 = vmatpush1.msra.mxu0 0.0
    %235 = vmatprep.subr.mxu0 0.0
    %236 = vmatpush1.msra.mxu0 0.0
    %237 = vmatprep.subr.mxu0 0.0
    %238 = vmatpush1.msra.mxu0 0.0
    %239 = vmatprep.subr.mxu0 0.0
    %240 = vmatpush1.msra.mxu0 0.0
    %241 = vmatprep.subr.mxu0 0.0
    %242 = vmatpush1.msra.mxu0 0.0
    %243 = vmatprep.subr.mxu0 0.0
    %244 = vmatpush1.msra.mxu0 0.0
    %245 = vmatprep.subr.mxu0 0.0
    %246 = vmatpush1.msra.mxu0 0.0
    %247 = vmatprep.subr.mxu0 0.0
    %248 = vmatpush1.msra.mxu0 0.0
    %249 = vmatprep.subr.mxu0 0.0
    %250 = vmatpush1.msra.mxu0 0.0
    %251 = vmatprep.subr.mxu0 0.0
    %252 = vmatpush1.msra.mxu0 0.0
    %253 = vmatprep.subr.mxu0 0.0
    %254 = vmatpush1.msra.mxu0 0.0
    %255 = vmatprep.subr.mxu0 0.0
    %256 = vmatpush1.msra.mxu0 0.0
    %257 = vmatprep.subr.mxu0 0.0
    %258 = vmatpush1.msra.mxu0 0.0
    %259 = vmatprep.subr.mxu0 0.0
    %260 = vmatpush1.msra.mxu0 0.0
    %261 = vmatprep.subr.mxu0 0.0
    %262 = vmatpush1.msra.mxu0 0.0
    %263 = vmatprep.subr.mxu0 0.0
    %264 = vmatpush1.msra.mxu0 0.0
    %265 = vmatprep.subr.mxu0 0.0
    %266 = vmatpush1.msra.mxu0 0.0
    %267 = vmatprep.subr.mxu0 0.0
    %268 = vmatpush1.msra.mxu0 0.0
    %269 = vmatprep.subr.mxu0 0.0
    %270 = vmatpush1.msra.mxu0 0.0
    %271 = vmatprep.subr.mxu0 0.0
    %272 = vmatpush1.msra.mxu0 0.0
    %273 = vmatprep.mubr.f32.mxu0 0.0
    %274 = vmatmul.mubr.f32.gmra.mrb[0].mxu0 %v200
    %v275 = vpop.f32.mrb[0].mxu0
    %v276 = vadd.f32 0.0, %v275
    %v277 = vpop.f32.mrb[0].mxu0
    %278 = vmatprep.mubr.f32.mxu0 0.0
    %279 = vmatmul.mubr.f32.gmra.mrb[0].mxu0 %v203
    %v280 = vpop.f32.mrb[0].mxu0
    %v281 = vadd.f32 0.0, %v280
    %v282 = vpop.f32.mrb[0].mxu0
    %283 = vdwg.mxu0
    %v284 = vld [vmem:[%s4] sm:$0xff]
    %s285 = scalar_lea.vmem %s3, 16
    %v286 = vld [vmem:[%s285] sm:$0xff]
    %v287 = vld [vmem:[%s285 + $0x8] sm:$0x1]
    %v289 = vsel %vm198, %v286, 0
    %v292 = vsel %vm198, %v287, 0
    %294 = vmatprep.subr.mxu0 0.0
    %295 = vmatpush1.msra.mxu0 %v189
    %296 = vmatprep.subr.mxu0 0.0
    %297 = vmatpush1.msra.mxu0 %v190
    %298 = vmatprep.subr.mxu0 0.0
    %299 = vmatpush1.msra.mxu0 %v191
    %300 = vmatprep.subr.mxu0 0.0
    %301 = vmatpush1.msra.mxu0 %v192
    %302 = vmatprep.subr.mxu0 0.0
    %303 = vmatpush1.msra.mxu0 %v193
    %304 = vmatprep.subr.mxu0 0.0
    %305 = vmatpush1.msra.mxu0 %v194
    %306 = vmatprep.subr.mxu0 0.0
    %307 = vmatpush1.msra.mxu0 %v207
    %308 = vmatprep.subr.mxu0 0.0
    %309 = vmatpush1.msra.mxu0 0.0
    %310 = vmatprep.subr.mxu0 0.0
    %311 = vmatpush1.msra.mxu0 0.0
    %312 = vmatprep.subr.mxu0 0.0
    %313 = vmatpush1.msra.mxu0 0.0
    %314 = vmatprep.subr.mxu0 0.0
    %315 = vmatpush1.msra.mxu0 0.0
    %316 = vmatprep.subr.mxu0 0.0
    %317 = vmatpush1.msra.mxu0 0.0
    %318 = vmatprep.subr.mxu0 0.0
    %319 = vmatpush1.msra.mxu0 0.0
    %320 = vmatprep.subr.mxu0 0.0
    %321 = vmatpush1.msra.mxu0 0.0
    %322 = vmatprep.subr.mxu0 0.0
    %323 = vmatpush1.msra.mxu0 0.0
    %324 = vmatprep.subr.mxu0 0.0
    %325 = vmatpush1.msra.mxu0 0.0
    %326 = vmatprep.subr.mxu0 0.0
    %327 = vmatpush1.msra.mxu0 0.0
    %328 = vmatprep.subr.mxu0 0.0
    %329 = vmatpush1.msra.mxu0 0.0
    %330 = vmatprep.subr.mxu0 0.0
    %331 = vmatpush1.msra.mxu0 0.0
    %332 = vmatprep.subr.mxu0 0.0
    %333 = vmatpush1.msra.mxu0 0.0
    %334 = vmatprep.subr.mxu0 0.0
    %335 = vmatpush1.msra.mxu0 0.0
    %336 = vmatprep.subr.mxu0 0.0
    %337 = vmatpush1.msra.mxu0 0.0
    %338 = vmatprep.subr.mxu0 0.0
    %339 = vmatpush1.msra.mxu0 0.0
    %340 = vmatprep.subr.mxu0 0.0
    %341 = vmatpush1.msra.mxu0 0.0
    %342 = vmatprep.subr.mxu0 0.0
    %343 = vmatpush1.msra.mxu0 0.0
    %344 = vmatprep.subr.mxu0 0.0
    %345 = vmatpush1.msra.mxu0 0.0
    %346 = vmatprep.subr.mxu0 0.0
    %347 = vmatpush1.msra.mxu0 0.0
    %348 = vmatprep.subr.mxu0 0.0
    %349 = vmatpush1.msra.mxu0 0.0
    %350 = vmatprep.subr.mxu0 0.0
    %351 = vmatpush1.msra.mxu0 0.0
    %352 = vmatprep.subr.mxu0 0.0
    %353 = vmatpush1.msra.mxu0 0.0
    %354 = vmatprep.subr.mxu0 0.0
    %355 = vmatpush1.msra.mxu0 0.0
    %356 = vmatprep.subr.mxu0 0.0
    %357 = vmatpush1.msra.mxu0 0.0
    %358 = vmatprep.mubr.f32.mxu0 0.0
    %359 = vmatmul.mubr.f32.gmra.mrb[0].mxu0 %v289
    %v360 = vpop.f32.mrb[0].mxu0
    %v361 = vadd.f32 0.0, %v360
    %v362 = vpop.f32.mrb[0].mxu0
    %363 = vmatprep.mubr.f32.mxu0 0.0
    %364 = vmatmul.mubr.f32.gmra.mrb[0].mxu0 %v292
    %v365 = vpop.f32.mrb[0].mxu0
    %v366 = vadd.f32 0.0, %v365
    %v367 = vpop.f32.mrb[0].mxu0
    %368 = vdwg.mxu0
    %s369 = scalar_lea.vmem %s4, 8
    %v370 = vld [vmem:[%s369] sm:$0xff]
    %vm371 = vcmask 64512
    %v373 = vsel %vm371, %v361, 0
    %v376 = vsel %vm371, %v366, 0
    %378 = vmatprep.subr.mxu0 0.0
    %379 = vmatpush1.msra.mxu0 %v370
    %380 = vmatprep.subr.mxu0 0.0
    %381 = vmatpush1.msra.mxu0 0.0
    %382 = vmatprep.subr.mxu0 0.0
    %383 = vmatpush1.msra.mxu0 0.0
    %384 = vmatprep.subr.mxu0 0.0
    %385 = vmatpush1.msra.mxu0 0.0
    %386 = vmatprep.subr.mxu0 0.0
    %387 = vmatpush1.msra.mxu0 0.0
    %388 = vmatprep.subr.mxu0 0.0
    %389 = vmatpush1.msra.mxu0 0.0
    %390 = vmatprep.subr.mxu0 0.0
    %391 = vmatpush1.msra.mxu0 0.0
    %392 = vmatprep.subr.mxu0 0.0
    %393 = vmatpush1.msra.mxu0 0.0
    %394 = vmatprep.subr.mxu0 0.0
    %395 = vmatpush1.msra.mxu0 0.0
    %396 = vmatprep.subr.mxu0 0.0
    %397 = vmatpush1.msra.mxu0 0.0
    %398 = vmatprep.subr.mxu0 0.0
    %399 = vmatpush1.msra.mxu0 0.0
    %400 = vmatprep.subr.mxu0 0.0
    %401 = vmatpush1.msra.mxu0 0.0
    %402 = vmatprep.subr.mxu0 0.0
    %403 = vmatpush1.msra.mxu0 0.0
    %404 = vmatprep.subr.mxu0 0.0
    %405 = vmatpush1.msra.mxu0 0.0
    %406 = vmatprep.subr.mxu0 0.0
    %407 = vmatpush1.msra.mxu0 0.0
    %408 = vmatprep.subr.mxu0 0.0
    %409 = vmatpush1.msra.mxu0 0.0
    %410 = vmatprep.subr.mxu0 0.0
    %411 = vmatpush1.msra.mxu0 0.0
    %412 = vmatprep.subr.mxu0 0.0
    %413 = vmatpush1.msra.mxu0 0.0
    %414 = vmatprep.subr.mxu0 0.0
    %415 = vmatpush1.msra.mxu0 0.0
    %416 = vmatprep.subr.mxu0 0.0
    %417 = vmatpush1.msra.mxu0 0.0
    %418 = vmatprep.subr.mxu0 0.0
    %419 = vmatpush1.msra.mxu0 0.0
    %420 = vmatprep.subr.mxu0 0.0
    %421 = vmatpush1.msra.mxu0 0.0
    %422 = vmatprep.subr.mxu0 0.0
    %423 = vmatpush1.msra.mxu0 0.0
    %424 = vmatprep.subr.mxu0 0.0
    %425 = vmatpush1.msra.mxu0 0.0
    %426 = vmatprep.subr.mxu0 0.0
    %427 = vmatpush1.msra.mxu0 0.0
    %428 = vmatprep.subr.mxu0 0.0
    %429 = vmatpush1.msra.mxu0 0.0
    %430 = vmatprep.subr.mxu0 0.0
    %431 = vmatpush1.msra.mxu0 0.0
    %432 = vmatprep.subr.mxu0 0.0
    %433 = vmatpush1.msra.mxu0 0.0
    %434 = vmatprep.subr.mxu0 0.0
    %435 = vmatpush1.msra.mxu0 0.0
    %436 = vmatprep.subr.mxu0 0.0
    %437 = vmatpush1.msra.mxu0 0.0
    %438 = vmatprep.subr.mxu0 0.0
    %439 = vmatpush1.msra.mxu0 0.0
    %440 = vmatprep.subr.mxu0 0.0
    %441 = vmatpush1.msra.mxu0 0.0
    %442 = vmatprep.mubr.f32.mxu0 0.0
    %443 = vmatmul.mubr.f32.gmra.mrb[0].mxu0 %v373
    %v444 = vpop.f32.mrb[0].mxu0
    %v445 = vadd.f32 0.0, %v444
    %v446 = vpop.f32.mrb[0].mxu0
    %447 = vmatprep.mubr.f32.mxu0 0.0
    %448 = vmatmul.mubr.f32.gmra.mrb[0].mxu0 %v376
    %v449 = vpop.f32.mrb[0].mxu0
    %v450 = vadd.f32 0.0, %v449
    %v451 = vpop.f32.mrb[0].mxu0
    %452 = vdwg.mxu0
    %v454 = vsel %vm371, %v276, 0
    %v457 = vsel %vm371, %v281, 0
    %459 = vmatprep.subr.mxu0 0.0
    %460 = vmatpush1.msra.mxu0 %v284
    %461 = vmatprep.subr.mxu0 0.0
    %462 = vmatpush1.msra.mxu0 0.0
    %463 = vmatprep.subr.mxu0 0.0
    %464 = vmatpush1.msra.mxu0 0.0
    %465 = vmatprep.subr.mxu0 0.0
    %466 = vmatpush1.msra.mxu0 0.0
    %467 = vmatprep.subr.mxu0 0.0
    %468 = vmatpush1.msra.mxu0 0.0
    %469 = vmatprep.subr.mxu0 0.0
    %470 = vmatpush1.msra.mxu0 0.0
    %471 = vmatprep.subr.mxu0 0.0
    %472 = vmatpush1.msra.mxu0 0.0
    %473 = vmatprep.subr.mxu0 0.0
    %474 = vmatpush1.msra.mxu0 0.0
    %475 = vmatprep.subr.mxu0 0.0
    %476 = vmatpush1.msra.mxu0 0.0
    %477 = vmatprep.subr.mxu0 0.0
    %478 = vmatpush1.msra.mxu0 0.0
    %479 = vmatprep.subr.mxu0 0.0
    %480 = vmatpush1.msra.mxu0 0.0
    %481 = vmatprep.subr.mxu0 0.0
    %482 = vmatpush1.msra.mxu0 0.0
    %483 = vmatprep.subr.mxu0 0.0
    %484 = vmatpush1.msra.mxu0 0.0
    %485 = vmatprep.subr.mxu0 0.0
    %486 = vmatpush1.msra.mxu0 0.0
    %487 = vmatprep.subr.mxu0 0.0
    %488 = vmatpush1.msra.mxu0 0.0
    %489 = vmatprep.subr.mxu0 0.0
    %490 = vmatpush1.msra.mxu0 0.0
    %491 = vmatprep.subr.mxu0 0.0
    %492 = vmatpush1.msra.mxu0 0.0
    %493 = vmatprep.subr.mxu0 0.0
    %494 = vmatpush1.msra.mxu0 0.0
    %495 = vmatprep.subr.mxu0 0.0
    %496 = vmatpush1.msra.mxu0 0.0
    %497 = vmatprep.subr.mxu0 0.0
    %498 = vmatpush1.msra.mxu0 0.0
    %499 = vmatprep.subr.mxu0 0.0
    %500 = vmatpush1.msra.mxu0 0.0
    %501 = vmatprep.subr.mxu0 0.0
    %502 = vmatpush1.msra.mxu0 0.0
    %503 = vmatprep.subr.mxu0 0.0
    %504 = vmatpush1.msra.mxu0 0.0
    %505 = vmatprep.subr.mxu0 0.0
    %506 = vmatpush1.msra.mxu0 0.0
    %507 = vmatprep.subr.mxu0 0.0
    %508 = vmatpush1.msra.mxu0 0.0
    %509 = vmatprep.subr.mxu0 0.0
    %510 = vmatpush1.msra.mxu0 0.0
    %511 = vmatprep.subr.mxu0 0.0
    %512 = vmatpush1.msra.mxu0 0.0
    %513 = vmatprep.subr.mxu0 0.0
    %514 = vmatpush1.msra.mxu0 0.0
    %515 = vmatprep.subr.mxu0 0.0
    %516 = vmatpush1.msra.mxu0 0.0
    %517 = vmatprep.subr.mxu0 0.0
    %518 = vmatpush1.msra.mxu0 0.0
    %519 = vmatprep.subr.mxu0 0.0
    %520 = vmatpush1.msra.mxu0 0.0
    %521 = vmatprep.subr.mxu0 0.0
    %522 = vmatpush1.msra.mxu0 0.0
    %523 = vmatprep.mubr.f32.mxu0 0.0
    %524 = vmatmul.mubr.f32.gmra.mrb[0].mxu0 %v454
    %v525 = vpop.f32.mrb[0].mxu0
    %v526 = vadd.f32 %v445, %v525
    %v527 = vpop.f32.mrb[0].mxu0
    %528 = vmatprep.mubr.f32.mxu0 0.0
    %529 = vmatmul.mubr.f32.gmra.mrb[0].mxu0 %v457
    %v530 = vpop.f32.mrb[0].mxu0
    %v531 = vadd.f32 %v450, %v530
    %v532 = vpop.f32.mrb[0].mxu0
    %533 = vdwg.mxu0
    %s534 = scalar_lea.vmem %s3, 32
    %v535 = vld [vmem:[%s534] sm:$0xff]
    %v536 = vld [vmem:[%s534 + $0x8] sm:$0x1]
    %v538 = vsel %vm198, %v535, 0
    %v541 = vsel %vm198, %v536, 0
    %543 = vmatprep.subr.mxu0 0.0
    %544 = vmatpush1.msra.mxu0 %v189
    %545 = vmatprep.subr.mxu0 0.0
    %546 = vmatpush1.msra.mxu0 %v190
    %547 = vmatprep.subr.mxu0 0.0
    %548 = vmatpush1.msra.mxu0 %v191
    %549 = vmatprep.subr.mxu0 0.0
    %550 = vmatpush1.msra.mxu0 %v192
    %551 = vmatprep.subr.mxu0 0.0
    %552 = vmatpush1.msra.mxu0 %v193
    %553 = vmatprep.subr.mxu0 0.0
    %554 = vmatpush1.msra.mxu0 %v194
    %555 = vmatprep.subr.mxu0 0.0
    %556 = vmatpush1.msra.mxu0 %v207
    %557 = vmatprep.subr.mxu0 0.0
    %558 = vmatpush1.msra.mxu0 0.0
    %559 = vmatprep.subr.mxu0 0.0
    %560 = vmatpush1.msra.mxu0 0.0
    %561 = vmatprep.subr.mxu0 0.0
    %562 = vmatpush1.msra.mxu0 0.0
    %563 = vmatprep.subr.mxu0 0.0
    %564 = vmatpush1.msra.mxu0 0.0
    %565 = vmatprep.subr.mxu0 0.0
    %566 = vmatpush1.msra.mxu0 0.0
    %567 = vmatprep.subr.mxu0 0.0
    %568 = vmatpush1.msra.mxu0 0.0
    %569 = vmatprep.subr.mxu0 0.0
    %570 = vmatpush1.msra.mxu0 0.0
    %571 = vmatprep.subr.mxu0 0.0
    %572 = vmatpush1.msra.mxu0 0.0
    %573 = vmatprep.subr.mxu0 0.0
    %574 = vmatpush1.msra.mxu0 0.0
    %575 = vmatprep.subr.mxu0 0.0
    %576 = vmatpush1.msra.mxu0 0.0
    %577 = vmatprep.subr.mxu0 0.0
    %578 = vmatpush1.msra.mxu0 0.0
    %579 = vmatprep.subr.mxu0 0.0
    %580 = vmatpush1.msra.mxu0 0.0
    %581 = vmatprep.subr.mxu0 0.0
    %582 = vmatpush1.msra.mxu0 0.0
    %583 = vmatprep.subr.mxu0 0.0
    %584 = vmatpush1.msra.mxu0 0.0
    %585 = vmatprep.subr.mxu0 0.0
    %586 = vmatpush1.msra.mxu0 0.0
    %587 = vmatprep.subr.mxu0 0.0
    %588 = vmatpush1.msra.mxu0 0.0
    %589 = vmatprep.subr.mxu0 0.0
    %590 = vmatpush1.msra.mxu0 0.0
    %591 = vmatprep.subr.mxu0 0.0
    %592 = vmatpush1.msra.mxu0 0.0
    %593 = vmatprep.subr.mxu0 0.0
    %594 = vmatpush1.msra.mxu0 0.0
    %595 = vmatprep.subr.mxu0 0.0
    %596 = vmatpush1.msra.mxu0 0.0
    %597 = vmatprep.subr.mxu0 0.0
    %598 = vmatpush1.msra.mxu0 0.0
    %599 = vmatprep.subr.mxu0 0.0
    %600 = vmatpush1.msra.mxu0 0.0
    %601 = vmatprep.subr.mxu0 0.0
    %602 = vmatpush1.msra.mxu0 0.0
    %603 = vmatprep.subr.mxu0 0.0
    %604 = vmatpush1.msra.mxu0 0.0
    %605 = vmatprep.subr.mxu0 0.0
    %606 = vmatpush1.msra.mxu0 0.0
    %607 = vmatprep.mubr.f32.mxu0 0.0
    %608 = vmatmul.mubr.f32.gmra.mrb[0].mxu0 %v538
    %v609 = vpop.f32.mrb[0].mxu0
    %v610 = vadd.f32 0.0, %v609
    %v611 = vpop.f32.mrb[0].mxu0
    %612 = vmatprep.mubr.f32.mxu0 0.0
    %613 = vmatmul.mubr.f32.gmra.mrb[0].mxu0 %v541
    %v614 = vpop.f32.mrb[0].mxu0
    %v615 = vadd.f32 0.0, %v614
    %v616 = vpop.f32.mrb[0].mxu0
    %617 = vdwg.mxu0
    %s618 = scalar_lea.vmem %s4, 16
    %v619 = vld [vmem:[%s618] sm:$0xff]
    %v621 = vsel %vm371, %v610, 0
    %v624 = vsel %vm371, %v615, 0
    %626 = vmatprep.subr.mxu0 0.0
    %627 = vmatpush1.msra.mxu0 %v619
    %628 = vmatprep.subr.mxu0 0.0
    %629 = vmatpush1.msra.mxu0 0.0
    %630 = vmatprep.subr.mxu0 0.0
    %631 = vmatpush1.msra.mxu0 0.0
    %632 = vmatprep.subr.mxu0 0.0
    %633 = vmatpush1.msra.mxu0 0.0
    %634 = vmatprep.subr.mxu0 0.0
    %635 = vmatpush1.msra.mxu0 0.0
    %636 = vmatprep.subr.mxu0 0.0
    %637 = vmatpush1.msra.mxu0 0.0
    %638 = vmatprep.subr.mxu0 0.0
    %639 = vmatpush1.msra.mxu0 0.0
    %640 = vmatprep.subr.mxu0 0.0
    %641 = vmatpush1.msra.mxu0 0.0
    %642 = vmatprep.subr.mxu0 0.0
    %643 = vmatpush1.msra.mxu0 0.0
    %644 = vmatprep.subr.mxu0 0.0
    %645 = vmatpush1.msra.mxu0 0.0
    %646 = vmatprep.subr.mxu0 0.0
    %647 = vmatpush1.msra.mxu0 0.0
    %648 = vmatprep.subr.mxu0 0.0
    %649 = vmatpush1.msra.mxu0 0.0
    %650 = vmatprep.subr.mxu0 0.0
    %651 = vmatpush1.msra.mxu0 0.0
    %652 = vmatprep.subr.mxu0 0.0
    %653 = vmatpush1.msra.mxu0 0.0
    %654 = vmatprep.subr.mxu0 0.0
    %655 = vmatpush1.msra.mxu0 0.0
    %656 = vmatprep.subr.mxu0 0.0
    %657 = vmatpush1.msra.mxu0 0.0
    %658 = vmatprep.subr.mxu0 0.0
    %659 = vmatpush1.msra.mxu0 0.0
    %660 = vmatprep.subr.mxu0 0.0
    %661 = vmatpush1.msra.mxu0 0.0
    %662 = vmatprep.subr.mxu0 0.0
    %663 = vmatpush1.msra.mxu0 0.0
    %664 = vmatprep.subr.mxu0 0.0
    %665 = vmatpush1.msra.mxu0 0.0
    %666 = vmatprep.subr.mxu0 0.0
    %667 = vmatpush1.msra.mxu0 0.0
    %668 = vmatprep.subr.mxu0 0.0
    %669 = vmatpush1.msra.mxu0 0.0
    %670 = vmatprep.subr.mxu0 0.0
    %671 = vmatpush1.msra.mxu0 0.0
    %672 = vmatprep.subr.mxu0 0.0
    %673 = vmatpush1.msra.mxu0 0.0
    %674 = vmatprep.subr.mxu0 0.0
    %675 = vmatpush1.msra.mxu0 0.0
    %676 = vmatprep.subr.mxu0 0.0
    %677 = vmatpush1.msra.mxu0 0.0
    %678 = vmatprep.subr.mxu0 0.0
    %679 = vmatpush1.msra.mxu0 0.0
    %680 = vmatprep.subr.mxu0 0.0
    %681 = vmatpush1.msra.mxu0 0.0
    %682 = vmatprep.subr.mxu0 0.0
    %683 = vmatpush1.msra.mxu0 0.0
    %684 = vmatprep.subr.mxu0 0.0
    %685 = vmatpush1.msra.mxu0 0.0
    %686 = vmatprep.subr.mxu0 0.0
    %687 = vmatpush1.msra.mxu0 0.0
    %688 = vmatprep.subr.mxu0 0.0
    %689 = vmatpush1.msra.mxu0 0.0
    %690 = vmatprep.mubr.f32.mxu0 0.0
    %691 = vmatmul.mubr.f32.gmra.mrb[0].mxu0 %v621
    %v692 = vpop.f32.mrb[0].mxu0
    %v693 = vadd.f32 0.0, %v692
    %v694 = vpop.f32.mrb[0].mxu0
    %695 = vmatprep.mubr.f32.mxu0 0.0
    %696 = vmatmul.mubr.f32.gmra.mrb[0].mxu0 %v624
    %v697 = vpop.f32.mrb[0].mxu0
    %v698 = vadd.f32 0.0, %v697
    %v699 = vpop.f32.mrb[0].mxu0
    %700 = vdwg.mxu0
    %v701 = vadd.f32 %v526, %v693
    %v702 = vadd.f32 %v531, %v698
    %s703 = scalar_lea.vmem %s3, 48
    %v704 = vld [vmem:[%s703] sm:$0xff]
    %v705 = vld [vmem:[%s703 + $0x8] sm:$0x1]
    %v707 = vsel %vm198, %v704, 0
    %v710 = vsel %vm198, %v705, 0
    %712 = vmatprep.subr.mxu0 0.0
    %713 = vmatpush1.msra.mxu0 %v189
    %714 = vmatprep.subr.mxu0 0.0
    %715 = vmatpush1.msra.mxu0 %v190
    %716 = vmatprep.subr.mxu0 0.0
    %717 = vmatpush1.msra.mxu0 %v191
    %718 = vmatprep.subr.mxu0 0.0
    %719 = vmatpush1.msra.mxu0 %v192
    %720 = vmatprep.subr.mxu0 0.0
    %721 = vmatpush1.msra.mxu0 %v193
    %722 = vmatprep.subr.mxu0 0.0
    %723 = vmatpush1.msra.mxu0 %v194
    %724 = vmatprep.subr.mxu0 0.0
    %725 = vmatpush1.msra.mxu0 %v207
    %726 = vmatprep.subr.mxu0 0.0
    %727 = vmatpush1.msra.mxu0 0.0
    %728 = vmatprep.subr.mxu0 0.0
    %729 = vmatpush1.msra.mxu0 0.0
    %730 = vmatprep.subr.mxu0 0.0
    %731 = vmatpush1.msra.mxu0 0.0
    %732 = vmatprep.subr.mxu0 0.0
    %733 = vmatpush1.msra.mxu0 0.0
    %734 = vmatprep.subr.mxu0 0.0
    %735 = vmatpush1.msra.mxu0 0.0
    %736 = vmatprep.subr.mxu0 0.0
    %737 = vmatpush1.msra.mxu0 0.0
    %738 = vmatprep.subr.mxu0 0.0
    %739 = vmatpush1.msra.mxu0 0.0
    %740 = vmatprep.subr.mxu0 0.0
    %741 = vmatpush1.msra.mxu0 0.0
    %742 = vmatprep.subr.mxu0 0.0
    %743 = vmatpush1.msra.mxu0 0.0
    %744 = vmatprep.subr.mxu0 0.0
    %745 = vmatpush1.msra.mxu0 0.0
    %746 = vmatprep.subr.mxu0 0.0
    %747 = vmatpush1.msra.mxu0 0.0
    %748 = vmatprep.subr.mxu0 0.0
    %749 = vmatpush1.msra.mxu0 0.0
    %750 = vmatprep.subr.mxu0 0.0
    %751 = vmatpush1.msra.mxu0 0.0
    %752 = vmatprep.subr.mxu0 0.0
    %753 = vmatpush1.msra.mxu0 0.0
    %754 = vmatprep.subr.mxu0 0.0
    %755 = vmatpush1.msra.mxu0 0.0
    %756 = vmatprep.subr.mxu0 0.0
    %757 = vmatpush1.msra.mxu0 0.0
    %758 = vmatprep.subr.mxu0 0.0
    %759 = vmatpush1.msra.mxu0 0.0
    %760 = vmatprep.subr.mxu0 0.0
    %761 = vmatpush1.msra.mxu0 0.0
    %762 = vmatprep.subr.mxu0 0.0
    %763 = vmatpush1.msra.mxu0 0.0
    %764 = vmatprep.subr.mxu0 0.0
    %765 = vmatpush1.msra.mxu0 0.0
    %766 = vmatprep.subr.mxu0 0.0
    %767 = vmatpush1.msra.mxu0 0.0
    %768 = vmatprep.subr.mxu0 0.0
    %769 = vmatpush1.msra.mxu0 0.0
    %770 = vmatprep.subr.mxu0 0.0
    %771 = vmatpush1.msra.mxu0 0.0
    %772 = vmatprep.subr.mxu0 0.0
    %773 = vmatpush1.msra.mxu0 0.0
    %774 = vmatprep.subr.mxu0 0.0
    %775 = vmatpush1.msra.mxu0 0.0
    %776 = vmatprep.mubr.f32.mxu0 0.0
    %777 = vmatmul.mubr.f32.gmra.mrb[0].mxu0 %v707
    %v778 = vpop.f32.mrb[0].mxu0
    %v779 = vadd.f32 0.0, %v778
    %v780 = vpop.f32.mrb[0].mxu0
    %781 = vmatprep.mubr.f32.mxu0 0.0
    %782 = vmatmul.mubr.f32.gmra.mrb[0].mxu0 %v710
    %v783 = vpop.f32.mrb[0].mxu0
    %v784 = vadd.f32 0.0, %v783
    %v785 = vpop.f32.mrb[0].mxu0
    %786 = vdwg.mxu0
    %s787 = scalar_lea.vmem %s4, 24
    %v788 = vld [vmem:[%s787] sm:$0xff]
    %v790 = vsel %vm371, %v779, 0
    %v793 = vsel %vm371, %v784, 0
    %795 = vmatprep.subr.mxu0 0.0
    %796 = vmatpush1.msra.mxu0 %v788
    %797 = vmatprep.subr.mxu0 0.0
    %798 = vmatpush1.msra.mxu0 0.0
    %799 = vmatprep.subr.mxu0 0.0
    %800 = vmatpush1.msra.mxu0 0.0
    %801 = vmatprep.subr.mxu0 0.0
    %802 = vmatpush1.msra.mxu0 0.0
    %803 = vmatprep.subr.mxu0 0.0
    %804 = vmatpush1.msra.mxu0 0.0
    %805 = vmatprep.subr.mxu0 0.0
    %806 = vmatpush1.msra.mxu0 0.0
    %807 = vmatprep.subr.mxu0 0.0
    %808 = vmatpush1.msra.mxu0 0.0
    %809 = vmatprep.subr.mxu0 0.0
    %810 = vmatpush1.msra.mxu0 0.0
    %811 = vmatprep.subr.mxu0 0.0
    %812 = vmatpush1.msra.mxu0 0.0
    %813 = vmatprep.subr.mxu0 0.0
    %814 = vmatpush1.msra.mxu0 0.0
    %815 = vmatprep.subr.mxu0 0.0
    %816 = vmatpush1.msra.mxu0 0.0
    %817 = vmatprep.subr.mxu0 0.0
    %818 = vmatpush1.msra.mxu0 0.0
    %819 = vmatprep.subr.mxu0 0.0
    %820 = vmatpush1.msra.mxu0 0.0
    %821 = vmatprep.subr.mxu0 0.0
    %822 = vmatpush1.msra.mxu0 0.0
    %823 = vmatprep.subr.mxu0 0.0
    %824 = vmatpush1.msra.mxu0 0.0
    %825 = vmatprep.subr.mxu0 0.0
    %826 = vmatpush1.msra.mxu0 0.0
    %827 = vmatprep.subr.mxu0 0.0
    %828 = vmatpush1.msra.mxu0 0.0
    %829 = vmatprep.subr.mxu0 0.0
    %830 = vmatpush1.msra.mxu0 0.0
    %831 = vmatprep.subr.mxu0 0.0
    %832 = vmatpush1.msra.mxu0 0.0
    %833 = vmatprep.subr.mxu0 0.0
    %834 = vmatpush1.msra.mxu0 0.0
    %835 = vmatprep.subr.mxu0 0.0
    %836 = vmatpush1.msra.mxu0 0.0
    %837 = vmatprep.subr.mxu0 0.0
    %838 = vmatpush1.msra.mxu0 0.0
    %839 = vmatprep.subr.mxu0 0.0
    %840 = vmatpush1.msra.mxu0 0.0
    %841 = vmatprep.subr.mxu0 0.0
    %842 = vmatpush1.msra.mxu0 0.0
    %843 = vmatprep.subr.mxu0 0.0
    %844 = vmatpush1.msra.mxu0 0.0
    %845 = vmatprep.subr.mxu0 0.0
    %846 = vmatpush1.msra.mxu0 0.0
    %847 = vmatprep.subr.mxu0 0.0
    %848 = vmatpush1.msra.mxu0 0.0
    %849 = vmatprep.subr.mxu0 0.0
    %850 = vmatpush1.msra.mxu0 0.0
    %851 = vmatprep.subr.mxu0 0.0
    %852 = vmatpush1.msra.mxu0 0.0
    %853 = vmatprep.subr.mxu0 0.0
    %854 = vmatpush1.msra.mxu0 0.0
    %855 = vmatprep.subr.mxu0 0.0
    %856 = vmatpush1.msra.mxu0 0.0
    %857 = vmatprep.subr.mxu0 0.0
    %858 = vmatpush1.msra.mxu0 0.0
    %859 = vmatprep.mubr.f32.mxu0 0.0
    %860 = vmatmul.mubr.f32.gmra.mrb[0].mxu0 %v790
    %v861 = vpop.f32.mrb[0].mxu0
    %v862 = vadd.f32 0.0, %v861
    %v863 = vpop.f32.mrb[0].mxu0
    %864 = vmatprep.mubr.f32.mxu0 0.0
    %865 = vmatmul.mubr.f32.gmra.mrb[0].mxu0 %v793
    %v866 = vpop.f32.mrb[0].mxu0
    %v867 = vadd.f32 0.0, %v866
    %v868 = vpop.f32.mrb[0].mxu0
    %869 = vdwg.mxu0
    %v870 = vadd.f32 %v701, %v862
    %v871 = vadd.f32 %v702, %v867
    %s872 = scalar_lea.vmem %s3, 64
    %v873 = vld [vmem:[%s872] sm:$0xff]
    %v874 = vld [vmem:[%s872 + $0x8] sm:$0x1]
    %v876 = vsel %vm198, %v873, 0
    %v879 = vsel %vm198, %v874, 0
    %881 = vmatprep.subr.mxu0 0.0
    %882 = vmatpush1.msra.mxu0 %v189
    %883 = vmatprep.subr.mxu0 0.0
    %884 = vmatpush1.msra.mxu0 %v190
    %885 = vmatprep.subr.mxu0 0.0
    %886 = vmatpush1.msra.mxu0 %v191
    %887 = vmatprep.subr.mxu0 0.0
    %888 = vmatpush1.msra.mxu0 %v192
    %889 = vmatprep.subr.mxu0 0.0
    %890 = vmatpush1.msra.mxu0 %v193
    %891 = vmatprep.subr.mxu0 0.0
    %892 = vmatpush1.msra.mxu0 %v194
    %893 = vmatprep.subr.mxu0 0.0
    %894 = vmatpush1.msra.mxu0 %v207
    %895 = vmatprep.subr.mxu0 0.0
    %896 = vmatpush1.msra.mxu0 0.0
    %897 = vmatprep.subr.mxu0 0.0
    %898 = vmatpush1.msra.mxu0 0.0
    %899 = vmatprep.subr.mxu0 0.0
    %900 = vmatpush1.msra.mxu0 0.0
    %901 = vmatprep.subr.mxu0 0.0
    %902 = vmatpush1.msra.mxu0 0.0
    %903 = vmatprep.subr.mxu0 0.0
    %904 = vmatpush1.msra.mxu0 0.0
    %905 = vmatprep.subr.mxu0 0.0
    %906 = vmatpush1.msra.mxu0 0.0
    %907 = vmatprep.subr.mxu0 0.0
    %908 = vmatpush1.msra.mxu0 0.0
    %909 = vmatprep.subr.mxu0 0.0
    %910 = vmatpush1.msra.mxu0 0.0
    %911 = vmatprep.subr.mxu0 0.0
    %912 = vmatpush1.msra.mxu0 0.0
    %913 = vmatprep.subr.mxu0 0.0
    %914 = vmatpush1.msra.mxu0 0.0
    %915 = vmatprep.subr.mxu0 0.0
    %916 = vmatpush1.msra.mxu0 0.0
    %917 = vmatprep.subr.mxu0 0.0
    %918 = vmatpush1.msra.mxu0 0.0
    %919 = vmatprep.subr.mxu0 0.0
    %920 = vmatpush1.msra.mxu0 0.0
    %921 = vmatprep.subr.mxu0 0.0
    %922 = vmatpush1.msra.mxu0 0.0
    %923 = vmatprep.subr.mxu0 0.0
    %924 = vmatpush1.msra.mxu0 0.0
    %925 = vmatprep.subr.mxu0 0.0
    %926 = vmatpush1.msra.mxu0 0.0
    %927 = vmatprep.subr.mxu0 0.0
    %928 = vmatpush1.msra.mxu0 0.0
    %929 = vmatprep.subr.mxu0 0.0
    %930 = vmatpush1.msra.mxu0 0.0
    %931 = vmatprep.subr.mxu0 0.0
    %932 = vmatpush1.msra.mxu0 0.0
    %933 = vmatprep.subr.mxu0 0.0
    %934 = vmatpush1.msra.mxu0 0.0
    %935 = vmatprep.subr.mxu0 0.0
    %936 = vmatpush1.msra.mxu0 0.0
    %937 = vmatprep.subr.mxu0 0.0
    %938 = vmatpush1.msra.mxu0 0.0
    %939 = vmatprep.subr.mxu0 0.0
    %940 = vmatpush1.msra.mxu0 0.0
    %941 = vmatprep.subr.mxu0 0.0
    %942 = vmatpush1.msra.mxu0 0.0
    %943 = vmatprep.subr.mxu0 0.0
    %944 = vmatpush1.msra.mxu0 0.0
    %945 = vmatprep.mubr.f32.mxu0 0.0
    %946 = vmatmul.mubr.f32.gmra.mrb[0].mxu0 %v876
    %v947 = vpop.f32.mrb[0].mxu0
    %v948 = vadd.f32 0.0, %v947
    %v949 = vpop.f32.mrb[0].mxu0
    %950 = vmatprep.mubr.f32.mxu0 0.0
    %951 = vmatmul.mubr.f32.gmra.mrb[0].mxu0 %v879
    %v952 = vpop.f32.mrb[0].mxu0
    %v953 = vadd.f32 0.0, %v952
    %v954 = vpop.f32.mrb[0].mxu0
    %955 = vdwg.mxu0
    %s956 = scalar_lea.vmem %s4, 32
    %v957 = vld [vmem:[%s956] sm:$0xff]
    %v959 = vsel %vm371, %v948, 0
    %v962 = vsel %vm371, %v953, 0
    %964 = vmatprep.subr.mxu0 0.0
    %965 = vmatpush1.msra.mxu0 %v957
    %966 = vmatprep.subr.mxu0 0.0
    %967 = vmatpush1.msra.mxu0 0.0
    %968 = vmatprep.subr.mxu0 0.0
    %969 = vmatpush1.msra.mxu0 0.0
    %970 = vmatprep.subr.mxu0 0.0
    %971 = vmatpush1.msra.mxu0 0.0
    %972 = vmatprep.subr.mxu0 0.0
    %973 = vmatpush1.msra.mxu0 0.0
    %974 = vmatprep.subr.mxu0 0.0
    %975 = vmatpush1.msra.mxu0 0.0
    %976 = vmatprep.subr.mxu0 0.0
    %977 = vmatpush1.msra.mxu0 0.0
    %978 = vmatprep.subr.mxu0 0.0
    %979 = vmatpush1.msra.mxu0 0.0
    %980 = vmatprep.subr.mxu0 0.0
    %981 = vmatpush1.msra.mxu0 0.0
    %982 = vmatprep.subr.mxu0 0.0
    %983 = vmatpush1.msra.mxu0 0.0
    %984 = vmatprep.subr.mxu0 0.0
    %985 = vmatpush1.msra.mxu0 0.0
    %986 = vmatprep.subr.mxu0 0.0
    %987 = vmatpush1.msra.mxu0 0.0
    %988 = vmatprep.subr.mxu0 0.0
    %989 = vmatpush1.msra.mxu0 0.0
    %990 = vmatprep.subr.mxu0 0.0
    %991 = vmatpush1.msra.mxu0 0.0
    %992 = vmatprep.subr.mxu0 0.0
    %993 = vmatpush1.msra.mxu0 0.0
    %994 = vmatprep.subr.mxu0 0.0
    %995 = vmatpush1.msra.mxu0 0.0
    %996 = vmatprep.subr.mxu0 0.0
    %997 = vmatpush1.msra.mxu0 0.0
    %998 = vmatprep.subr.mxu0 0.0
    %999 = vmatpush1.msra.mxu0 0.0
    %1000 = vmatprep.subr.mxu0 0.0
    %1001 = vmatpush1.msra.mxu0 0.0
    %1002 = vmatprep.subr.mxu0 0.0
    %1003 = vmatpush1.msra.mxu0 0.0
    %1004 = vmatprep.subr.mxu0 0.0
    %1005 = vmatpush1.msra.mxu0 0.0
    %1006 = vmatprep.subr.mxu0 0.0
    %1007 = vmatpush1.msra.mxu0 0.0
    %1008 = vmatprep.subr.mxu0 0.0
    %1009 = vmatpush1.msra.mxu0 0.0
    %1010 = vmatprep.subr.mxu0 0.0
    %1011 = vmatpush1.msra.mxu0 0.0
    %1012 = vmatprep.subr.mxu0 0.0
    %1013 = vmatpush1.msra.mxu0 0.0
    %1014 = vmatprep.subr.mxu0 0.0
    %1015 = vmatpush1.msra.mxu0 0.0
    %1016 = vmatprep.subr.mxu0 0.0
    %1017 = vmatpush1.msra.mxu0 0.0
    %1018 = vmatprep.subr.mxu0 0.0
    %1019 = vmatpush1.msra.mxu0 0.0
    %1020 = vmatprep.subr.mxu0 0.0
    %1021 = vmatpush1.msra.mxu0 0.0
    %1022 = vmatprep.subr.mxu0 0.0
    %1023 = vmatpush1.msra.mxu0 0.0
    %1024 = vmatprep.subr.mxu0 0.0
    %1025 = vmatpush1.msra.mxu0 0.0
    %1026 = vmatprep.subr.mxu0 0.0
    %1027 = vmatpush1.msra.mxu0 0.0
    %1028 = vmatprep.mubr.f32.mxu0 0.0
    %1029 = vmatmul.mubr.f32.gmra.mrb[0].mxu0 %v959
    %v1030 = vpop.f32.mrb[0].mxu0
    %v1031 = vadd.f32 0.0, %v1030
    %v1032 = vpop.f32.mrb[0].mxu0
    %1033 = vmatprep.mubr.f32.mxu0 0.0
    %1034 = vmatmul.mubr.f32.gmra.mrb[0].mxu0 %v962
    %v1035 = vpop.f32.mrb[0].mxu0
    %v1036 = vadd.f32 0.0, %v1035
    %v1037 = vpop.f32.mrb[0].mxu0
    %1038 = vdwg.mxu0
    %v1039 = vadd.f32 %v870, %v1031
    %v1040 = vadd.f32 %v871, %v1036
    %s1041 = scalar_lea.vmem %s3, 80
    %v1042 = vld [vmem:[%s1041] sm:$0xff]
    %v1043 = vld [vmem:[%s1041 + $0x8] sm:$0x1]
    %v1045 = vsel %vm198, %v1042, 0
    %v1048 = vsel %vm198, %v1043, 0
    %1050 = vmatprep.subr.mxu0 0.0
    %1051 = vmatpush1.msra.mxu0 %v189
    %1052 = vmatprep.subr.mxu0 0.0
    %1053 = vmatpush1.msra.mxu0 %v190
    %1054 = vmatprep.subr.mxu0 0.0
    %1055 = vmatpush1.msra.mxu0 %v191
    %1056 = vmatprep.subr.mxu0 0.0
    %1057 = vmatpush1.msra.mxu0 %v192
    %1058 = vmatprep.subr.mxu0 0.0
    %1059 = vmatpush1.msra.mxu0 %v193
    %1060 = vmatprep.subr.mxu0 0.0
    %1061 = vmatpush1.msra.mxu0 %v194
    %1062 = vmatprep.subr.mxu0 0.0
    %1063 = vmatpush1.msra.mxu0 %v207
    %1064 = vmatprep.subr.mxu0 0.0
    %1065 = vmatpush1.msra.mxu0 0.0
    %1066 = vmatprep.subr.mxu0 0.0
    %1067 = vmatpush1.msra.mxu0 0.0
    %1068 = vmatprep.subr.mxu0 0.0
    %1069 = vmatpush1.msra.mxu0 0.0
    %1070 = vmatprep.subr.mxu0 0.0
    %1071 = vmatpush1.msra.mxu0 0.0
    %1072 = vmatprep.subr.mxu0 0.0
    %1073 = vmatpush1.msra.mxu0 0.0
    %1074 = vmatprep.subr.mxu0 0.0
    %1075 = vmatpush1.msra.mxu0 0.0
    %1076 = vmatprep.subr.mxu0 0.0
    %1077 = vmatpush1.msra.mxu0 0.0
    %1078 = vmatprep.subr.mxu0 0.0
    %1079 = vmatpush1.msra.mxu0 0.0
    %1080 = vmatprep.subr.mxu0 0.0
    %1081 = vmatpush1.msra.mxu0 0.0
    %1082 = vmatprep.subr.mxu0 0.0
    %1083 = vmatpush1.msra.mxu0 0.0
    %1084 = vmatprep.subr.mxu0 0.0
    %1085 = vmatpush1.msra.mxu0 0.0
    %1086 = vmatprep.subr.mxu0 0.0
    %1087 = vmatpush1.msra.mxu0 0.0
    %1088 = vmatprep.subr.mxu0 0.0
    %1089 = vmatpush1.msra.mxu0 0.0
    %1090 = vmatprep.subr.mxu0 0.0
    %1091 = vmatpush1.msra.mxu0 0.0
    %1092 = vmatprep.subr.mxu0 0.0
    %1093 = vmatpush1.msra.mxu0 0.0
    %1094 = vmatprep.subr.mxu0 0.0
    %1095 = vmatpush1.msra.mxu0 0.0
    %1096 = vmatprep.subr.mxu0 0.0
    %1097 = vmatpush1.msra.mxu0 0.0
    %1098 = vmatprep.subr.mxu0 0.0
    %1099 = vmatpush1.msra.mxu0 0.0
    %1100 = vmatprep.subr.mxu0 0.0
    %1101 = vmatpush1.msra.mxu0 0.0
    %1102 = vmatprep.subr.mxu0 0.0
    %1103 = vmatpush1.msra.mxu0 0.0
    %1104 = vmatprep.subr.mxu0 0.0
    %1105 = vmatpush1.msra.mxu0 0.0
    %1106 = vmatprep.subr.mxu0 0.0
    %1107 = vmatpush1.msra.mxu0 0.0
    %1108 = vmatprep.subr.mxu0 0.0
    %1109 = vmatpush1.msra.mxu0 0.0
    %1110 = vmatprep.subr.mxu0 0.0
    %1111 = vmatpush1.msra.mxu0 0.0
    %1112 = vmatprep.subr.mxu0 0.0
    %1113 = vmatpush1.msra.mxu0 0.0
    %1114 = vmatprep.mubr.f32.mxu0 0.0
    %1115 = vmatmul.mubr.f32.gmra.mrb[0].mxu0 %v1045
    %v1116 = vpop.f32.mrb[0].mxu0
    %v1117 = vadd.f32 0.0, %v1116
    %v1118 = vpop.f32.mrb[0].mxu0
    %1119 = vmatprep.mubr.f32.mxu0 0.0
    %1120 = vmatmul.mubr.f32.gmra.mrb[0].mxu0 %v1048
    %v1121 = vpop.f32.mrb[0].mxu0
    %v1122 = vadd.f32 0.0, %v1121
    %v1123 = vpop.f32.mrb[0].mxu0
    %1124 = vdwg.mxu0
    %s1125 = scalar_lea.vmem %s4, 40
    %v1126 = vld [vmem:[%s1125] sm:$0xff]
    %v1128 = vsel %vm371, %v1117, 0
    %v1131 = vsel %vm371, %v1122, 0
    %1133 = vmatprep.subr.mxu0 0.0
    %1134 = vmatpush1.msra.mxu0 %v1126
    %1135 = vmatprep.subr.mxu0 0.0
    %1136 = vmatpush1.msra.mxu0 0.0
    %1137 = vmatprep.subr.mxu0 0.0
    %1138 = vmatpush1.msra.mxu0 0.0
    %1139 = vmatprep.subr.mxu0 0.0
    %1140 = vmatpush1.msra.mxu0 0.0
    %1141 = vmatprep.subr.mxu0 0.0
    %1142 = vmatpush1.msra.mxu0 0.0
    %1143 = vmatprep.subr.mxu0 0.0
    %1144 = vmatpush1.msra.mxu0 0.0
    %1145 = vmatprep.subr.mxu0 0.0
    %1146 = vmatpush1.msra.mxu0 0.0
    %1147 = vmatprep.subr.mxu0 0.0
    %1148 = vmatpush1.msra.mxu0 0.0
    %1149 = vmatprep.subr.mxu0 0.0
    %1150 = vmatpush1.msra.mxu0 0.0
    %1151 = vmatprep.subr.mxu0 0.0
    %1152 = vmatpush1.msra.mxu0 0.0
    %1153 = vmatprep.subr.mxu0 0.0
    %1154 = vmatpush1.msra.mxu0 0.0
    %1155 = vmatprep.subr.mxu0 0.0
    %1156 = vmatpush1.msra.mxu0 0.0
    %1157 = vmatprep.subr.mxu0 0.0
    %1158 = vmatpush1.msra.mxu0 0.0
    %1159 = vmatprep.subr.mxu0 0.0
    %1160 = vmatpush1.msra.mxu0 0.0
    %1161 = vmatprep.subr.mxu0 0.0
    %1162 = vmatpush1.msra.mxu0 0.0
    %1163 = vmatprep.subr.mxu0 0.0
    %1164 = vmatpush1.msra.mxu0 0.0
    %1165 = vmatprep.subr.mxu0 0.0
    %1166 = vmatpush1.msra.mxu0 0.0
    %1167 = vmatprep.subr.mxu0 0.0
    %1168 = vmatpush1.msra.mxu0 0.0
    %1169 = vmatprep.subr.mxu0 0.0
    %1170 = vmatpush1.msra.mxu0 0.0
    %1171 = vmatprep.subr.mxu0 0.0
    %1172 = vmatpush1.msra.mxu0 0.0
    %1173 = vmatprep.subr.mxu0 0.0
    %1174 = vmatpush1.msra.mxu0 0.0
    %1175 = vmatprep.subr.mxu0 0.0
    %1176 = vmatpush1.msra.mxu0 0.0
    %1177 = vmatprep.subr.mxu0 0.0
    %1178 = vmatpush1.msra.mxu0 0.0
    %1179 = vmatprep.subr.mxu0 0.0
    %1180 = vmatpush1.msra.mxu0 0.0
    %1181 = vmatprep.subr.mxu0 0.0
    %1182 = vmatpush1.msra.mxu0 0.0
    %1183 = vmatprep.subr.mxu0 0.0
    %1184 = vmatpush1.msra.mxu0 0.0
    %1185 = vmatprep.subr.mxu0 0.0
    %1186 = vmatpush1.msra.mxu0 0.0
    %1187 = vmatprep.subr.mxu0 0.0
    %1188 = vmatpush1.msra.mxu0 0.0
    %1189 = vmatprep.subr.mxu0 0.0
    %1190 = vmatpush1.msra.mxu0 0.0
    %1191 = vmatprep.subr.mxu0 0.0
    %1192 = vmatpush1.msra.mxu0 0.0
    %1193 = vmatprep.subr.mxu0 0.0
    %1194 = vmatpush1.msra.mxu0 0.0
    %1195 = vmatprep.subr.mxu0 0.0
    %1196 = vmatpush1.msra.mxu0 0.0
    %1197 = vmatprep.mubr.f32.mxu0 0.0
    %1198 = vmatmul.mubr.f32.gmra.mrb[0].mxu0 %v1128
    %v1199 = vpop.f32.mrb[0].mxu0
    %v1200 = vadd.f32 0.0, %v1199
    %v1201 = vpop.f32.mrb[0].mxu0
    %1202 = vmatprep.mubr.f32.mxu0 0.0
    %1203 = vmatmul.mubr.f32.gmra.mrb[0].mxu0 %v1131
    %v1204 = vpop.f32.mrb[0].mxu0
    %v1205 = vadd.f32 0.0, %v1204
    %v1206 = vpop.f32.mrb[0].mxu0
    %1207 = vdwg.mxu0
    %v1208 = vadd.f32 %v1039, %v1200
    %v1209 = vadd.f32 %v1040, %v1205
    %s1210 = scalar_lea.vmem %s3, 96
    %v1211 = vld [vmem:[%s1210] sm:$0xff]
    %v1212 = vld [vmem:[%s1210 + $0x8] sm:$0x1]
    %v1214 = vsel %vm198, %v1211, 0
    %v1217 = vsel %vm198, %v1212, 0
    %1219 = vmatprep.subr.mxu0 0.0
    %1220 = vmatpush1.msra.mxu0 %v189
    %1221 = vmatprep.subr.mxu0 0.0
    %1222 = vmatpush1.msra.mxu0 %v190
    %1223 = vmatprep.subr.mxu0 0.0
    %1224 = vmatpush1.msra.mxu0 %v191
    %1225 = vmatprep.subr.mxu0 0.0
    %1226 = vmatpush1.msra.mxu0 %v192
    %1227 = vmatprep.subr.mxu0 0.0
    %1228 = vmatpush1.msra.mxu0 %v193
    %1229 = vmatprep.subr.mxu0 0.0
    %1230 = vmatpush1.msra.mxu0 %v194
    %1231 = vmatprep.subr.mxu0 0.0
    %1232 = vmatpush1.msra.mxu0 %v207
    %1233 = vmatprep.subr.mxu0 0.0
    %1234 = vmatpush1.msra.mxu0 0.0
    %1235 = vmatprep.subr.mxu0 0.0
    %1236 = vmatpush1.msra.mxu0 0.0
    %1237 = vmatprep.subr.mxu0 0.0
    %1238 = vmatpush1.msra.mxu0 0.0
    %1239 = vmatprep.subr.mxu0 0.0
    %1240 = vmatpush1.msra.mxu0 0.0
    %1241 = vmatprep.subr.mxu0 0.0
    %1242 = vmatpush1.msra.mxu0 0.0
    %1243 = vmatprep.subr.mxu0 0.0
    %1244 = vmatpush1.msra.mxu0 0.0
    %1245 = vmatprep.subr.mxu0 0.0
    %1246 = vmatpush1.msra.mxu0 0.0
    %1247 = vmatprep.subr.mxu0 0.0
    %1248 = vmatpush1.msra.mxu0 0.0
    %1249 = vmatprep.subr.mxu0 0.0
    %1250 = vmatpush1.msra.mxu0 0.0
    %1251 = vmatprep.subr.mxu0 0.0
    %1252 = vmatpush1.msra.mxu0 0.0
    %1253 = vmatprep.subr.mxu0 0.0
    %1254 = vmatpush1.msra.mxu0 0.0
    %1255 = vmatprep.subr.mxu0 0.0
    %1256 = vmatpush1.msra.mxu0 0.0
    %1257 = vmatprep.subr.mxu0 0.0
    %1258 = vmatpush1.msra.mxu0 0.0
    %1259 = vmatprep.subr.mxu0 0.0
    %1260 = vmatpush1.msra.mxu0 0.0
    %1261 = vmatprep.subr.mxu0 0.0
    %1262 = vmatpush1.msra.mxu0 0.0
    %1263 = vmatprep.subr.mxu0 0.0
    %1264 = vmatpush1.msra.mxu0 0.0
    %1265 = vmatprep.subr.mxu0 0.0
    %1266 = vmatpush1.msra.mxu0 0.0
    %1267 = vmatprep.subr.mxu0 0.0
    %1268 = vmatpush1.msra.mxu0 0.0
    %1269 = vmatprep.subr.mxu0 0.0
    %1270 = vmatpush1.msra.mxu0 0.0
    %1271 = vmatprep.subr.mxu0 0.0
    %1272 = vmatpush1.msra.mxu0 0.0
    %1273 = vmatprep.subr.mxu0 0.0
    %1274 = vmatpush1.msra.mxu0 0.0
    %1275 = vmatprep.subr.mxu0 0.0
    %1276 = vmatpush1.msra.mxu0 0.0
    %1277 = vmatprep.subr.mxu0 0.0
    %1278 = vmatpush1.msra.mxu0 0.0
    %1279 = vmatprep.subr.mxu0 0.0
    %1280 = vmatpush1.msra.mxu0 0.0
    %1281 = vmatprep.subr.mxu0 0.0
    %1282 = vmatpush1.msra.mxu0 0.0
    %1283 = vmatprep.mubr.f32.mxu0 0.0
    %1284 = vmatmul.mubr.f32.gmra.mrb[0].mxu0 %v1214
    %v1285 = vpop.f32.mrb[0].mxu0
    %v1286 = vadd.f32 0.0, %v1285
    %v1287 = vpop.f32.mrb[0].mxu0
    %1288 = vmatprep.mubr.f32.mxu0 0.0
    %1289 = vmatmul.mubr.f32.gmra.mrb[0].mxu0 %v1217
    %v1290 = vpop.f32.mrb[0].mxu0
    %v1291 = vadd.f32 0.0, %v1290
    %v1292 = vpop.f32.mrb[0].mxu0
    %1293 = vdwg.mxu0
    %s1294 = scalar_lea.vmem %s4, 48
    %v1295 = vld [vmem:[%s1294] sm:$0xff]
    %v1297 = vsel %vm371, %v1286, 0
    %v1300 = vsel %vm371, %v1291, 0
    %1302 = vmatprep.subr.mxu0 0.0
    %1303 = vmatpush1.msra.mxu0 %v1295
    %1304 = vmatprep.subr.mxu0 0.0
    %1305 = vmatpush1.msra.mxu0 0.0
    %1306 = vmatprep.subr.mxu0 0.0
    %1307 = vmatpush1.msra.mxu0 0.0
    %1308 = vmatprep.subr.mxu0 0.0
    %1309 = vmatpush1.msra.mxu0 0.0
    %1310 = vmatprep.subr.mxu0 0.0
    %1311 = vmatpush1.msra.mxu0 0.0
    %1312 = vmatprep.subr.mxu0 0.0
    %1313 = vmatpush1.msra.mxu0 0.0
    %1314 = vmatprep.subr.mxu0 0.0
    %1315 = vmatpush1.msra.mxu0 0.0
    %1316 = vmatprep.subr.mxu0 0.0
    %1317 = vmatpush1.msra.mxu0 0.0
    %1318 = vmatprep.subr.mxu0 0.0
    %1319 = vmatpush1.msra.mxu0 0.0
    %1320 = vmatprep.subr.mxu0 0.0
    %1321 = vmatpush1.msra.mxu0 0.0
    %1322 = vmatprep.subr.mxu0 0.0
    %1323 = vmatpush1.msra.mxu0 0.0
    %1324 = vmatprep.subr.mxu0 0.0
    %1325 = vmatpush1.msra.mxu0 0.0
    %1326 = vmatprep.subr.mxu0 0.0
    %1327 = vmatpush1.msra.mxu0 0.0
    %1328 = vmatprep.subr.mxu0 0.0
    %1329 = vmatpush1.msra.mxu0 0.0
    %1330 = vmatprep.subr.mxu0 0.0
    %1331 = vmatpush1.msra.mxu0 0.0
    %1332 = vmatprep.subr.mxu0 0.0
    %1333 = vmatpush1.msra.mxu0 0.0
    %1334 = vmatprep.subr.mxu0 0.0
    %1335 = vmatpush1.msra.mxu0 0.0
    %1336 = vmatprep.subr.mxu0 0.0
    %1337 = vmatpush1.msra.mxu0 0.0
    %1338 = vmatprep.subr.mxu0 0.0
    %1339 = vmatpush1.msra.mxu0 0.0
    %1340 = vmatprep.subr.mxu0 0.0
    %1341 = vmatpush1.msra.mxu0 0.0
    %1342 = vmatprep.subr.mxu0 0.0
    %1343 = vmatpush1.msra.mxu0 0.0
    %1344 = vmatprep.subr.mxu0 0.0
    %1345 = vmatpush1.msra.mxu0 0.0
    %1346 = vmatprep.subr.mxu0 0.0
    %1347 = vmatpush1.msra.mxu0 0.0
    %1348 = vmatprep.subr.mxu0 0.0
    %1349 = vmatpush1.msra.mxu0 0.0
    %1350 = vmatprep.subr.mxu0 0.0
    %1351 = vmatpush1.msra.mxu0 0.0
    %1352 = vmatprep.subr.mxu0 0.0
    %1353 = vmatpush1.msra.mxu0 0.0
    %1354 = vmatprep.subr.mxu0 0.0
    %1355 = vmatpush1.msra.mxu0 0.0
    %1356 = vmatprep.subr.mxu0 0.0
    %1357 = vmatpush1.msra.mxu0 0.0
    %1358 = vmatprep.subr.mxu0 0.0
    %1359 = vmatpush1.msra.mxu0 0.0
    %1360 = vmatprep.subr.mxu0 0.0
    %1361 = vmatpush1.msra.mxu0 0.0
    %1362 = vmatprep.subr.mxu0 0.0
    %1363 = vmatpush1.msra.mxu0 0.0
    %1364 = vmatprep.subr.mxu0 0.0
    %1365 = vmatpush1.msra.mxu0 0.0
    %1366 = vmatprep.mubr.f32.mxu0 0.0
    %1367 = vmatmul.mubr.f32.gmra.mrb[0].mxu0 %v1297
    %v1368 = vpop.f32.mrb[0].mxu0
    %v1369 = vadd.f32 0.0, %v1368
    %v1370 = vpop.f32.mrb[0].mxu0
    %1371 = vmatprep.mubr.f32.mxu0 0.0
    %1372 = vmatmul.mubr.f32.gmra.mrb[0].mxu0 %v1300
    %v1373 = vpop.f32.mrb[0].mxu0
    %v1374 = vadd.f32 0.0, %v1373
    %v1375 = vpop.f32.mrb[0].mxu0
    %1376 = vdwg.mxu0
    %v1377 = vadd.f32 %v1208, %v1369
    %v1378 = vadd.f32 %v1209, %v1374
    %s1379 = scalar_lea.vmem %s3, 112
    %v1380 = vld [vmem:[%s1379] sm:$0xff]
    %v1381 = vld [vmem:[%s1379 + $0x8] sm:$0x1]
    %v1383 = vsel %vm198, %v1380, 0
    %v1386 = vsel %vm198, %v1381, 0
    %1388 = vmatprep.subr.mxu0 0.0
    %1389 = vmatpush1.msra.mxu0 %v189
    %1390 = vmatprep.subr.mxu0 0.0
    %1391 = vmatpush1.msra.mxu0 %v190
    %1392 = vmatprep.subr.mxu0 0.0
    %1393 = vmatpush1.msra.mxu0 %v191
    %1394 = vmatprep.subr.mxu0 0.0
    %1395 = vmatpush1.msra.mxu0 %v192
    %1396 = vmatprep.subr.mxu0 0.0
    %1397 = vmatpush1.msra.mxu0 %v193
    %1398 = vmatprep.subr.mxu0 0.0
    %1399 = vmatpush1.msra.mxu0 %v194
    %1400 = vmatprep.subr.mxu0 0.0
    %1401 = vmatpush1.msra.mxu0 %v207
    %1402 = vmatprep.subr.mxu0 0.0
    %1403 = vmatpush1.msra.mxu0 0.0
    %1404 = vmatprep.subr.mxu0 0.0
    %1405 = vmatpush1.msra.mxu0 0.0
    %1406 = vmatprep.subr.mxu0 0.0
    %1407 = vmatpush1.msra.mxu0 0.0
    %1408 = vmatprep.subr.mxu0 0.0
    %1409 = vmatpush1.msra.mxu0 0.0
    %1410 = vmatprep.subr.mxu0 0.0
    %1411 = vmatpush1.msra.mxu0 0.0
    %1412 = vmatprep.subr.mxu0 0.0
    %1413 = vmatpush1.msra.mxu0 0.0
    %1414 = vmatprep.subr.mxu0 0.0
    %1415 = vmatpush1.msra.mxu0 0.0
    %1416 = vmatprep.subr.mxu0 0.0
    %1417 = vmatpush1.msra.mxu0 0.0
    %1418 = vmatprep.subr.mxu0 0.0
    %1419 = vmatpush1.msra.mxu0 0.0
    %1420 = vmatprep.subr.mxu0 0.0
    %1421 = vmatpush1.msra.mxu0 0.0
    %1422 = vmatprep.subr.mxu0 0.0
    %1423 = vmatpush1.msra.mxu0 0.0
    %1424 = vmatprep.subr.mxu0 0.0
    %1425 = vmatpush1.msra.mxu0 0.0
    %1426 = vmatprep.subr.mxu0 0.0
    %1427 = vmatpush1.msra.mxu0 0.0
    %1428 = vmatprep.subr.mxu0 0.0
    %1429 = vmatpush1.msra.mxu0 0.0
    %1430 = vmatprep.subr.mxu0 0.0
    %1431 = vmatpush1.msra.mxu0 0.0
    %1432 = vmatprep.subr.mxu0 0.0
    %1433 = vmatpush1.msra.mxu0 0.0
    %1434 = vmatprep.subr.mxu0 0.0
    %1435 = vmatpush1.msra.mxu0 0.0
    %1436 = vmatprep.subr.mxu0 0.0
    %1437 = vmatpush1.msra.mxu0 0.0
    %1438 = vmatprep.subr.mxu0 0.0
    %1439 = vmatpush1.msra.mxu0 0.0
    %1440 = vmatprep.subr.mxu0 0.0
    %1441 = vmatpush1.msra.mxu0 0.0
    %1442 = vmatprep.subr.mxu0 0.0
    %1443 = vmatpush1.msra.mxu0 0.0
    %1444 = vmatprep.subr.mxu0 0.0
    %1445 = vmatpush1.msra.mxu0 0.0
    %1446 = vmatprep.subr.mxu0 0.0
    %1447 = vmatpush1.msra.mxu0 0.0
    %1448 = vmatprep.subr.mxu0 0.0
    %1449 = vmatpush1.msra.mxu0 0.0
    %1450 = vmatprep.subr.mxu0 0.0
    %1451 = vmatpush1.msra.mxu0 0.0
    %1452 = vmatprep.mubr.f32.mxu0 0.0
    %1453 = vmatmul.mubr.f32.gmra.mrb[0].mxu0 %v1383
    %v1454 = vpop.f32.mrb[0].mxu0
    %v1455 = vadd.f32 0.0, %v1454
    %v1456 = vpop.f32.mrb[0].mxu0
    %1457 = vmatprep.mubr.f32.mxu0 0.0
    %1458 = vmatmul.mubr.f32.gmra.mrb[0].mxu0 %v1386
    %v1459 = vpop.f32.mrb[0].mxu0
    %v1460 = vadd.f32 0.0, %v1459
    %v1461 = vpop.f32.mrb[0].mxu0
    %1462 = vdwg.mxu0
    %s1463 = scalar_lea.vmem %s4, 56
    %v1464 = vld [vmem:[%s1463] sm:$0xff]
    %v1466 = vsel %vm371, %v1455, 0
    %v1469 = vsel %vm371, %v1460, 0
    %1471 = vmatprep.subr.mxu0 0.0
    %1472 = vmatpush1.msra.mxu0 %v1464
    %1473 = vmatprep.subr.mxu0 0.0
    %1474 = vmatpush1.msra.mxu0 0.0
    %1475 = vmatprep.subr.mxu0 0.0
    %1476 = vmatpush1.msra.mxu0 0.0
    %1477 = vmatprep.subr.mxu0 0.0
    %1478 = vmatpush1.msra.mxu0 0.0
    %1479 = vmatprep.subr.mxu0 0.0
    %1480 = vmatpush1.msra.mxu0 0.0
    %1481 = vmatprep.subr.mxu0 0.0
    %1482 = vmatpush1.msra.mxu0 0.0
    %1483 = vmatprep.subr.mxu0 0.0
    %1484 = vmatpush1.msra.mxu0 0.0
    %1485 = vmatprep.subr.mxu0 0.0
    %1486 = vmatpush1.msra.mxu0 0.0
    %1487 = vmatprep.subr.mxu0 0.0
    %1488 = vmatpush1.msra.mxu0 0.0
    %1489 = vmatprep.subr.mxu0 0.0
    %1490 = vmatpush1.msra.mxu0 0.0
    %1491 = vmatprep.subr.mxu0 0.0
    %1492 = vmatpush1.msra.mxu0 0.0
    %1493 = vmatprep.subr.mxu0 0.0
    %1494 = vmatpush1.msra.mxu0 0.0
    %1495 = vmatprep.subr.mxu0 0.0
    %1496 = vmatpush1.msra.mxu0 0.0
    %1497 = vmatprep.subr.mxu0 0.0
    %1498 = vmatpush1.msra.mxu0 0.0
    %1499 = vmatprep.subr.mxu0 0.0
    %1500 = vmatpush1.msra.mxu0 0.0
    %1501 = vmatprep.subr.mxu0 0.0
    %1502 = vmatpush1.msra.mxu0 0.0
    %1503 = vmatprep.subr.mxu0 0.0
    %1504 = vmatpush1.msra.mxu0 0.0
    %1505 = vmatprep.subr.mxu0 0.0
    %1506 = vmatpush1.msra.mxu0 0.0
    %1507 = vmatprep.subr.mxu0 0.0
    %1508 = vmatpush1.msra.mxu0 0.0
    %1509 = vmatprep.subr.mxu0 0.0
    %1510 = vmatpush1.msra.mxu0 0.0
    %1511 = vmatprep.subr.mxu0 0.0
    %1512 = vmatpush1.msra.mxu0 0.0
    %1513 = vmatprep.subr.mxu0 0.0
    %1514 = vmatpush1.msra.mxu0 0.0
    %1515 = vmatprep.subr.mxu0 0.0
    %1516 = vmatpush1.msra.mxu0 0.0
    %1517 = vmatprep.subr.mxu0 0.0
    %1518 = vmatpush1.msra.mxu0 0.0
    %1519 = vmatprep.subr.mxu0 0.0
    %1520 = vmatpush1.msra.mxu0 0.0
    %1521 = vmatprep.subr.mxu0 0.0
    %1522 = vmatpush1.msra.mxu0 0.0
    %1523 = vmatprep.subr.mxu0 0.0
    %1524 = vmatpush1.msra.mxu0 0.0
    %1525 = vmatprep.subr.mxu0 0.0
    %1526 = vmatpush1.msra.mxu0 0.0
    %1527 = vmatprep.subr.mxu0 0.0
    %1528 = vmatpush1.msra.mxu0 0.0
    %1529 = vmatprep.subr.mxu0 0.0
    %1530 = vmatpush1.msra.mxu0 0.0
    %1531 = vmatprep.subr.mxu0 0.0
    %1532 = vmatpush1.msra.mxu0 0.0
    %1533 = vmatprep.subr.mxu0 0.0
    %1534 = vmatpush1.msra.mxu0 0.0
    %1535 = vmatprep.mubr.f32.mxu0 0.0
    %1536 = vmatmul.mubr.f32.gmra.mrb[0].mxu0 %v1466
    %v1537 = vpop.f32.mrb[0].mxu0
    %v1538 = vadd.f32 0.0, %v1537
    %v1539 = vpop.f32.mrb[0].mxu0
    %1540 = vmatprep.mubr.f32.mxu0 0.0
    %1541 = vmatmul.mubr.f32.gmra.mrb[0].mxu0 %v1469
    %v1542 = vpop.f32.mrb[0].mxu0
    %v1543 = vadd.f32 0.0, %v1542
    %v1544 = vpop.f32.mrb[0].mxu0
    %1545 = vdwg.mxu0
    %v1546 = vadd.f32 %v1377, %v1538
    %v1547 = vadd.f32 %v1378, %v1543
    %s1548 = scalar_lea.vmem %s3, 128
    %v1549 = vld [vmem:[%s1548] sm:$0xff]
    %v1550 = vld [vmem:[%s1548 + $0x8] sm:$0x1]
    %v1552 = vsel %vm198, %v1549, 0
    %v1555 = vsel %vm198, %v1550, 0
    %1557 = vmatprep.subr.mxu0 0.0
    %1558 = vmatpush1.msra.mxu0 %v189
    %1559 = vmatprep.subr.mxu0 0.0
    %1560 = vmatpush1.msra.mxu0 %v190
    %1561 = vmatprep.subr.mxu0 0.0
    %1562 = vmatpush1.msra.mxu0 %v191
    %1563 = vmatprep.subr.mxu0 0.0
    %1564 = vmatpush1.msra.mxu0 %v192
    %1565 = vmatprep.subr.mxu0 0.0
    %1566 = vmatpush1.msra.mxu0 %v193
    %1567 = vmatprep.subr.mxu0 0.0
    %1568 = vmatpush1.msra.mxu0 %v194
    %1569 = vmatprep.subr.mxu0 0.0
    %1570 = vmatpush1.msra.mxu0 %v207
    %1571 = vmatprep.subr.mxu0 0.0
    %1572 = vmatpush1.msra.mxu0 0.0
    %1573 = vmatprep.subr.mxu0 0.0
    %1574 = vmatpush1.msra.mxu0 0.0
    %1575 = vmatprep.subr.mxu0 0.0
    %1576 = vmatpush1.msra.mxu0 0.0
    %1577 = vmatprep.subr.mxu0 0.0
    %1578 = vmatpush1.msra.mxu0 0.0
    %1579 = vmatprep.subr.mxu0 0.0
    %1580 = vmatpush1.msra.mxu0 0.0
    %1581 = vmatprep.subr.mxu0 0.0
    %1582 = vmatpush1.msra.mxu0 0.0
    %1583 = vmatprep.subr.mxu0 0.0
    %1584 = vmatpush1.msra.mxu0 0.0
    %1585 = vmatprep.subr.mxu0 0.0
    %1586 = vmatpush1.msra.mxu0 0.0
    %1587 = vmatprep.subr.mxu0 0.0
    %1588 = vmatpush1.msra.mxu0 0.0
    %1589 = vmatprep.subr.mxu0 0.0
    %1590 = vmatpush1.msra.mxu0 0.0
    %1591 = vmatprep.subr.mxu0 0.0
    %1592 = vmatpush1.msra.mxu0 0.0
    %1593 = vmatprep.subr.mxu0 0.0
    %1594 = vmatpush1.msra.mxu0 0.0
    %1595 = vmatprep.subr.mxu0 0.0
    %1596 = vmatpush1.msra.mxu0 0.0
    %1597 = vmatprep.subr.mxu0 0.0
    %1598 = vmatpush1.msra.mxu0 0.0
    %1599 = vmatprep.subr.mxu0 0.0
    %1600 = vmatpush1.msra.mxu0 0.0
    %1601 = vmatprep.subr.mxu0 0.0
    %1602 = vmatpush1.msra.mxu0 0.0
    %1603 = vmatprep.subr.mxu0 0.0
    %1604 = vmatpush1.msra.mxu0 0.0
    %1605 = vmatprep.subr.mxu0 0.0
    %1606 = vmatpush1.msra.mxu0 0.0
    %1607 = vmatprep.subr.mxu0 0.0
    %1608 = vmatpush1.msra.mxu0 0.0
    %1609 = vmatprep.subr.mxu0 0.0
    %1610 = vmatpush1.msra.mxu0 0.0
    %1611 = vmatprep.subr.mxu0 0.0
    %1612 = vmatpush1.msra.mxu0 0.0
    %1613 = vmatprep.subr.mxu0 0.0
    %1614 = vmatpush1.msra.mxu0 0.0
    %1615 = vmatprep.subr.mxu0 0.0
    %1616 = vmatpush1.msra.mxu0 0.0
    %1617 = vmatprep.subr.mxu0 0.0
    %1618 = vmatpush1.msra.mxu0 0.0
    %1619 = vmatprep.subr.mxu0 0.0
    %1620 = vmatpush1.msra.mxu0 0.0
    %1621 = vmatprep.mubr.f32.mxu0 0.0
    %1622 = vmatmul.mubr.f32.gmra.mrb[0].mxu0 %v1552
    %v1623 = vpop.f32.mrb[0].mxu0
    %v1624 = vadd.f32 0.0, %v1623
    %v1625 = vpop.f32.mrb[0].mxu0
    %1626 = vmatprep.mubr.f32.mxu0 0.0
    %1627 = vmatmul.mubr.f32.gmra.mrb[0].mxu0 %v1555
    %v1628 = vpop.f32.mrb[0].mxu0
    %v1629 = vadd.f32 0.0, %v1628
    %v1630 = vpop.f32.mrb[0].mxu0
    %1631 = vdwg.mxu0
    %s1632 = scalar_lea.vmem %s4, 64
    %v1633 = vld [vmem:[%s1632] sm:$0xff]
    %v1635 = vsel %vm371, %v1624, 0
    %v1638 = vsel %vm371, %v1629, 0
    %1640 = vmatprep.subr.mxu0 0.0
    %1641 = vmatpush1.msra.mxu0 %v1633
    %1642 = vmatprep.subr.mxu0 0.0
    %1643 = vmatpush1.msra.mxu0 0.0
    %1644 = vmatprep.subr.mxu0 0.0
    %1645 = vmatpush1.msra.mxu0 0.0
    %1646 = vmatprep.subr.mxu0 0.0
    %1647 = vmatpush1.msra.mxu0 0.0
    %1648 = vmatprep.subr.mxu0 0.0
    %1649 = vmatpush1.msra.mxu0 0.0
    %1650 = vmatprep.subr.mxu0 0.0
    %1651 = vmatpush1.msra.mxu0 0.0
    %1652 = vmatprep.subr.mxu0 0.0
    %1653 = vmatpush1.msra.mxu0 0.0
    %1654 = vmatprep.subr.mxu0 0.0
    %1655 = vmatpush1.msra.mxu0 0.0
    %1656 = vmatprep.subr.mxu0 0.0
    %1657 = vmatpush1.msra.mxu0 0.0
    %1658 = vmatprep.subr.mxu0 0.0
    %1659 = vmatpush1.msra.mxu0 0.0
    %1660 = vmatprep.subr.mxu0 0.0
    %1661 = vmatpush1.msra.mxu0 0.0
    %1662 = vmatprep.subr.mxu0 0.0
    %1663 = vmatpush1.msra.mxu0 0.0
    %1664 = vmatprep.subr.mxu0 0.0
    %1665 = vmatpush1.msra.mxu0 0.0
    %1666 = vmatprep.subr.mxu0 0.0
    %1667 = vmatpush1.msra.mxu0 0.0
    %1668 = vmatprep.subr.mxu0 0.0
    %1669 = vmatpush1.msra.mxu0 0.0
    %1670 = vmatprep.subr.mxu0 0.0
    %1671 = vmatpush1.msra.mxu0 0.0
    %1672 = vmatprep.subr.mxu0 0.0
    %1673 = vmatpush1.msra.mxu0 0.0
    %1674 = vmatprep.subr.mxu0 0.0
    %1675 = vmatpush1.msra.mxu0 0.0
    %1676 = vmatprep.subr.mxu0 0.0
    %1677 = vmatpush1.msra.mxu0 0.0
    %1678 = vmatprep.subr.mxu0 0.0
    %1679 = vmatpush1.msra.mxu0 0.0
    %1680 = vmatprep.subr.mxu0 0.0
    %1681 = vmatpush1.msra.mxu0 0.0
    %1682 = vmatprep.subr.mxu0 0.0
    %1683 = vmatpush1.msra.mxu0 0.0
    %1684 = vmatprep.subr.mxu0 0.0
    %1685 = vmatpush1.msra.mxu0 0.0
    %1686 = vmatprep.subr.mxu0 0.0
    %1687 = vmatpush1.msra.mxu0 0.0
    %1688 = vmatprep.subr.mxu0 0.0
    %1689 = vmatpush1.msra.mxu0 0.0
    %1690 = vmatprep.subr.mxu0 0.0
    %1691 = vmatpush1.msra.mxu0 0.0
    %1692 = vmatprep.subr.mxu0 0.0
    %1693 = vmatpush1.msra.mxu0 0.0
    %1694 = vmatprep.subr.mxu0 0.0
    %1695 = vmatpush1.msra.mxu0 0.0
    %1696 = vmatprep.subr.mxu0 0.0
    %1697 = vmatpush1.msra.mxu0 0.0
    %1698 = vmatprep.subr.mxu0 0.0
    %1699 = vmatpush1.msra.mxu0 0.0
    %1700 = vmatprep.subr.mxu0 0.0
    %1701 = vmatpush1.msra.mxu0 0.0
    %1702 = vmatprep.subr.mxu0 0.0
    %1703 = vmatpush1.msra.mxu0 0.0
    %1704 = vmatprep.mubr.f32.mxu0 0.0
    %1705 = vmatmul.mubr.f32.gmra.mrb[0].mxu0 %v1635
    %v1706 = vpop.f32.mrb[0].mxu0
    %v1707 = vadd.f32 0.0, %v1706
    %v1708 = vpop.f32.mrb[0].mxu0
    %1709 = vmatprep.mubr.f32.mxu0 0.0
    %1710 = vmatmul.mubr.f32.gmra.mrb[0].mxu0 %v1638
    %v1711 = vpop.f32.mrb[0].mxu0
    %v1712 = vadd.f32 0.0, %v1711
    %v1713 = vpop.f32.mrb[0].mxu0
    %1714 = vdwg.mxu0
    %v1715 = vadd.f32 %v1546, %v1707
    %v1716 = vadd.f32 %v1547, %v1712
    %v1717 = vld [vmem:[%s5] sm:$0x1]
    %v1719 = vlaneseq
    %v1720 = vshrl.u32 %v1719, 7
    %v1721 = vsub.s32 0, %v1720
    %v1722 = vrot.slane %v1717, %v1721
    %v1724 = vadd.f32 %v1715, %v1722
    %v1725 = vadd.f32 %v1716, %v1722
    %v1726 = vmax.f32 %v1724, 0.0
    %v1727 = vmax.f32 %v1725, 0.0
    %v1728 = vld [vmem:[%s6] sm:$0x1]
    %vm1729 = vcmask 72704
    %v1731 = vsel %vm1729, %v1728, 0
    %v1734 = vsel %vm205, %v1727, 0
    %1736 = vmatprep.subr.mxu0 0.0
    %1737 = vmatpush1.msra.mxu0 %v1726
    %1738 = vmatprep.subr.mxu0 0.0
    %1739 = vmatpush1.msra.mxu0 %v1734
    %1740 = vmatprep.subr.mxu0 0.0
    %1741 = vmatpush1.msra.mxu0 0.0
    %1742 = vmatprep.subr.mxu0 0.0
    %1743 = vmatpush1.msra.mxu0 0.0
    %1744 = vmatprep.subr.mxu0 0.0
    %1745 = vmatpush1.msra.mxu0 0.0
    %1746 = vmatprep.subr.mxu0 0.0
    %1747 = vmatpush1.msra.mxu0 0.0
    %1748 = vmatprep.subr.mxu0 0.0
    %1749 = vmatpush1.msra.mxu0 0.0
    %1750 = vmatprep.subr.mxu0 0.0
    %1751 = vmatpush1.msra.mxu0 0.0
    %1752 = vmatprep.subr.mxu0 0.0
    %1753 = vmatpush1.msra.mxu0 0.0
    %1754 = vmatprep.subr.mxu0 0.0
    %1755 = vmatpush1.msra.mxu0 0.0
    %1756 = vmatprep.subr.mxu0 0.0
    %1757 = vmatpush1.msra.mxu0 0.0
    %1758 = vmatprep.subr.mxu0 0.0
    %1759 = vmatpush1.msra.mxu0 0.0
    %1760 = vmatprep.subr.mxu0 0.0
    %1761 = vmatpush1.msra.mxu0 0.0
    %1762 = vmatprep.subr.mxu0 0.0
    %1763 = vmatpush1.msra.mxu0 0.0
    %1764 = vmatprep.subr.mxu0 0.0
    %1765 = vmatpush1.msra.mxu0 0.0
    %1766 = vmatprep.subr.mxu0 0.0
    %1767 = vmatpush1.msra.mxu0 0.0
    %1768 = vmatprep.subr.mxu0 0.0
    %1769 = vmatpush1.msra.mxu0 0.0
    %1770 = vmatprep.subr.mxu0 0.0
    %1771 = vmatpush1.msra.mxu0 0.0
    %1772 = vmatprep.subr.mxu0 0.0
    %1773 = vmatpush1.msra.mxu0 0.0
    %1774 = vmatprep.subr.mxu0 0.0
    %1775 = vmatpush1.msra.mxu0 0.0
    %1776 = vmatprep.subr.mxu0 0.0
    %1777 = vmatpush1.msra.mxu0 0.0
    %1778 = vmatprep.subr.mxu0 0.0
    %1779 = vmatpush1.msra.mxu0 0.0
    %1780 = vmatprep.subr.mxu0 0.0
    %1781 = vmatpush1.msra.mxu0 0.0
    %1782 = vmatprep.subr.mxu0 0.0
    %1783 = vmatpush1.msra.mxu0 0.0
    %1784 = vmatprep.subr.mxu0 0.0
    %1785 = vmatpush1.msra.mxu0 0.0
    %1786 = vmatprep.subr.mxu0 0.0
    %1787 = vmatpush1.msra.mxu0 0.0
    %1788 = vmatprep.subr.mxu0 0.0
    %1789 = vmatpush1.msra.mxu0 0.0
    %1790 = vmatprep.subr.mxu0 0.0
    %1791 = vmatpush1.msra.mxu0 0.0
    %1792 = vmatprep.subr.mxu0 0.0
    %1793 = vmatpush1.msra.mxu0 0.0
    %1794 = vmatprep.subr.mxu0 0.0
    %1795 = vmatpush1.msra.mxu0 0.0
    %1796 = vmatprep.subr.mxu0 0.0
    %1797 = vmatpush1.msra.mxu0 0.0
    %1798 = vmatprep.subr.mxu0 0.0
    %1799 = vmatpush1.msra.mxu0 0.0
    %1800 = vmatprep.mubr.f32.mxu0 0.0
    %1801 = vmatmul.mubr.f32.gmra.mrb[0].mxu0 %v1731
    %v1802 = vpop.f32.mrb[0].mxu0
    %v1803 = vadd.f32 0.0, %v1802
    %v1804 = vpop.f32.mrb[0].mxu0
    %1805 = vdwg.mxu0
    %v1806 = vld [vmem:[%s7] sm:$0xff]
    %v1807 = vld [vmem:[%s7 + $0x8] sm:$0xff]
    %s1808 = scalar_lea.vmem %s6, 1
    %v1809 = vld [vmem:[%s1808] sm:$0x1]
    %v1811 = vsel %vm1729, %v1809, 0
    %1813 = vmatprep.subr.mxu0 0.0
    %1814 = vmatpush1.msra.mxu0 %v1726
    %1815 = vmatprep.subr.mxu0 0.0
    %1816 = vmatpush1.msra.mxu0 %v1734
    %1817 = vmatprep.subr.mxu0 0.0
    %1818 = vmatpush1.msra.mxu0 0.0
    %1819 = vmatprep.subr.mxu0 0.0
    %1820 = vmatpush1.msra.mxu0 0.0
    %1821 = vmatprep.subr.mxu0 0.0
    %1822 = vmatpush1.msra.mxu0 0.0
    %1823 = vmatprep.subr.mxu0 0.0
    %1824 = vmatpush1.msra.mxu0 0.0
    %1825 = vmatprep.subr.mxu0 0.0
    %1826 = vmatpush1.msra.mxu0 0.0
    %1827 = vmatprep.subr.mxu0 0.0
    %1828 = vmatpush1.msra.mxu0 0.0
    %1829 = vmatprep.subr.mxu0 0.0
    %1830 = vmatpush1.msra.mxu0 0.0
    %1831 = vmatprep.subr.mxu0 0.0
    %1832 = vmatpush1.msra.mxu0 0.0
    %1833 = vmatprep.subr.mxu0 0.0
    %1834 = vmatpush1.msra.mxu0 0.0
    %1835 = vmatprep.subr.mxu0 0.0
    %1836 = vmatpush1.msra.mxu0 0.0
    %1837 = vmatprep.subr.mxu0 0.0
    %1838 = vmatpush1.msra.mxu0 0.0
    %1839 = vmatprep.subr.mxu0 0.0
    %1840 = vmatpush1.msra.mxu0 0.0
    %1841 = vmatprep.subr.mxu0 0.0
    %1842 = vmatpush1.msra.mxu0 0.0
    %1843 = vmatprep.subr.mxu0 0.0
    %1844 = vmatpush1.msra.mxu0 0.0
    %1845 = vmatprep.subr.mxu0 0.0
    %1846 = vmatpush1.msra.mxu0 0.0
    %1847 = vmatprep.subr.mxu0 0.0
    %1848 = vmatpush1.msra.mxu0 0.0
    %1849 = vmatprep.subr.mxu0 0.0
    %1850 = vmatpush1.msra.mxu0 0.0
    %1851 = vmatprep.subr.mxu0 0.0
    %1852 = vmatpush1.msra.mxu0 0.0
    %1853 = vmatprep.subr.mxu0 0.0
    %1854 = vmatpush1.msra.mxu0 0.0
    %1855 = vmatprep.subr.mxu0 0.0
    %1856 = vmatpush1.msra.mxu0 0.0
    %1857 = vmatprep.subr.mxu0 0.0
    %1858 = vmatpush1.msra.mxu0 0.0
    %1859 = vmatprep.subr.mxu0 0.0
    %1860 = vmatpush1.msra.mxu0 0.0
    %1861 = vmatprep.subr.mxu0 0.0
    %1862 = vmatpush1.msra.mxu0 0.0
    %1863 = vmatprep.subr.mxu0 0.0
    %1864 = vmatpush1.msra.mxu0 0.0
    %1865 = vmatprep.subr.mxu0 0.0
    %1866 = vmatpush1.msra.mxu0 0.0
    %1867 = vmatprep.subr.mxu0 0.0
    %1868 = vmatpush1.msra.mxu0 0.0
    %1869 = vmatprep.subr.mxu0 0.0
    %1870 = vmatpush1.msra.mxu0 0.0
    %1871 = vmatprep.subr.mxu0 0.0
    %1872 = vmatpush1.msra.mxu0 0.0
    %1873 = vmatprep.subr.mxu0 0.0
    %1874 = vmatpush1.msra.mxu0 0.0
    %1875 = vmatprep.subr.mxu0 0.0
    %1876 = vmatpush1.msra.mxu0 0.0
    %1877 = vmatprep.mubr.f32.mxu0 0.0
    %1878 = vmatmul.mubr.f32.gmra.mrb[0].mxu0 %v1811
    %v1879 = vpop.f32.mrb[0].mxu0
    %v1880 = vadd.f32 0.0, %v1879
    %v1881 = vpop.f32.mrb[0].mxu0
    %1882 = vdwg.mxu0
    %s1883 = scalar_lea.vmem %s7, 16
    %v1884 = vld [vmem:[%s1883] sm:$0xff]
    %v1885 = vld [vmem:[%s1883 + $0x8] sm:$0xff]
    %vm1886 = vcmask 130048
    %v1888 = vsel %vm1886, %v1880, 0
    %1890 = vmatprep.subr.mxu0 0.0
    %1891 = vmatpush1.msra.mxu0 %v1884
    %1892 = vmatprep.subr.mxu0 0.0
    %1893 = vmatpush1.msra.mxu0 %v1885
    %1894 = vmatprep.subr.mxu0 0.0
    %1895 = vmatpush1.msra.mxu0 0.0
    %1896 = vmatprep.subr.mxu0 0.0
    %1897 = vmatpush1.msra.mxu0 0.0
    %1898 = vmatprep.subr.mxu0 0.0
    %1899 = vmatpush1.msra.mxu0 0.0
    %1900 = vmatprep.subr.mxu0 0.0
    %1901 = vmatpush1.msra.mxu0 0.0
    %1902 = vmatprep.subr.mxu0 0.0
    %1903 = vmatpush1.msra.mxu0 0.0
    %1904 = vmatprep.subr.mxu0 0.0
    %1905 = vmatpush1.msra.mxu0 0.0
    %1906 = vmatprep.subr.mxu0 0.0
    %1907 = vmatpush1.msra.mxu0 0.0
    %1908 = vmatprep.subr.mxu0 0.0
    %1909 = vmatpush1.msra.mxu0 0.0
    %1910 = vmatprep.subr.mxu0 0.0
    %1911 = vmatpush1.msra.mxu0 0.0
    %1912 = vmatprep.subr.mxu0 0.0
    %1913 = vmatpush1.msra.mxu0 0.0
    %1914 = vmatprep.subr.mxu0 0.0
    %1915 = vmatpush1.msra.mxu0 0.0
    %1916 = vmatprep.subr.mxu0 0.0
    %1917 = vmatpush1.msra.mxu0 0.0
    %1918 = vmatprep.subr.mxu0 0.0
    %1919 = vmatpush1.msra.mxu0 0.0
    %1920 = vmatprep.subr.mxu0 0.0
    %1921 = vmatpush1.msra.mxu0 0.0
    %1922 = vmatprep.subr.mxu0 0.0
    %1923 = vmatpush1.msra.mxu0 0.0
    %1924 = vmatprep.subr.mxu0 0.0
    %1925 = vmatpush1.msra.mxu0 0.0
    %1926 = vmatprep.subr.mxu0 0.0
    %1927 = vmatpush1.msra.mxu0 0.0
    %1928 = vmatprep.subr.mxu0 0.0
    %1929 = vmatpush1.msra.mxu0 0.0
    %1930 = vmatprep.subr.mxu0 0.0
    %1931 = vmatpush1.msra.mxu0 0.0
    %1932 = vmatprep.subr.mxu0 0.0
    %1933 = vmatpush1.msra.mxu0 0.0
    %1934 = vmatprep.subr.mxu0 0.0
    %1935 = vmatpush1.msra.mxu0 0.0
    %1936 = vmatprep.subr.mxu0 0.0
    %1937 = vmatpush1.msra.mxu0 0.0
    %1938 = vmatprep.subr.mxu0 0.0
    %1939 = vmatpush1.msra.mxu0 0.0
    %1940 = vmatprep.subr.mxu0 0.0
    %1941 = vmatpush1.msra.mxu0 0.0
    %1942 = vmatprep.subr.mxu0 0.0
    %1943 = vmatpush1.msra.mxu0 0.0
    %1944 = vmatprep.subr.mxu0 0.0
    %1945 = vmatpush1.msra.mxu0 0.0
    %1946 = vmatprep.subr.mxu0 0.0
    %1947 = vmatpush1.msra.mxu0 0.0
    %1948 = vmatprep.subr.mxu0 0.0
    %1949 = vmatpush1.msra.mxu0 0.0
    %1950 = vmatprep.subr.mxu0 0.0
    %1951 = vmatpush1.msra.mxu0 0.0
    %1952 = vmatprep.subr.mxu0 0.0
    %1953 = vmatpush1.msra.mxu0 0.0
    %1954 = vmatprep.mubr.f32.mxu0 0.0
    %1955 = vmatmul.mubr.f32.gmra.mrb[0].mxu0 %v1888
    %v1956 = vpop.f32.mrb[0].mxu0
    %v1957 = vadd.f32 0.0, %v1956
    %v1958 = vpop.f32.mrb[0].mxu0
    %1959 = vdwg.mxu0
    %v1961 = vsel %vm1886, %v1803, 0
    %1963 = vmatprep.subr.mxu0 0.0
    %1964 = vmatpush1.msra.mxu0 %v1806
    %1965 = vmatprep.subr.mxu0 0.0
    %1966 = vmatpush1.msra.mxu0 %v1807
    %1967 = vmatprep.subr.mxu0 0.0
    %1968 = vmatpush1.msra.mxu0 0.0
    %1969 = vmatprep.subr.mxu0 0.0
    %1970 = vmatpush1.msra.mxu0 0.0
    %1971 = vmatprep.subr.mxu0 0.0
    %1972 = vmatpush1.msra.mxu0 0.0
    %1973 = vmatprep.subr.mxu0 0.0
    %1974 = vmatpush1.msra.mxu0 0.0
    %1975 = vmatprep.subr.mxu0 0.0
    %1976 = vmatpush1.msra.mxu0 0.0
    %1977 = vmatprep.subr.mxu0 0.0
    %1978 = vmatpush1.msra.mxu0 0.0
    %1979 = vmatprep.subr.mxu0 0.0
    %1980 = vmatpush1.msra.mxu0 0.0
    %1981 = vmatprep.subr.mxu0 0.0
    %1982 = vmatpush1.msra.mxu0 0.0
    %1983 = vmatprep.subr.mxu0 0.0
    %1984 = vmatpush1.msra.mxu0 0.0
    %1985 = vmatprep.subr.mxu0 0.0
    %1986 = vmatpush1.msra.mxu0 0.0
    %1987 = vmatprep.subr.mxu0 0.0
    %1988 = vmatpush1.msra.mxu0 0.0
    %1989 = vmatprep.subr.mxu0 0.0
    %1990 = vmatpush1.msra.mxu0 0.0
    %1991 = vmatprep.subr.mxu0 0.0
    %1992 = vmatpush1.msra.mxu0 0.0
    %1993 = vmatprep.subr.mxu0 0.0
    %1994 = vmatpush1.msra.mxu0 0.0
    %1995 = vmatprep.subr.mxu0 0.0
    %1996 = vmatpush1.msra.mxu0 0.0
    %1997 = vmatprep.subr.mxu0 0.0
    %1998 = vmatpush1.msra.mxu0 0.0
    %1999 = vmatprep.subr.mxu0 0.0
    %2000 = vmatpush1.msra.mxu0 0.0
    %2001 = vmatprep.subr.mxu0 0.0
    %2002 = vmatpush1.msra.mxu0 0.0
    %2003 = vmatprep.subr.mxu0 0.0
    %2004 = vmatpush1.msra.mxu0 0.0
    %2005 = vmatprep.subr.mxu0 0.0
    %2006 = vmatpush1.msra.mxu0 0.0
    %2007 = vmatprep.subr.mxu0 0.0
    %2008 = vmatpush1.msra.mxu0 0.0
    %2009 = vmatprep.subr.mxu0 0.0
    %2010 = vmatpush1.msra.mxu0 0.0
    %2011 = vmatprep.subr.mxu0 0.0
    %2012 = vmatpush1.msra.mxu0 0.0
    %2013 = vmatprep.subr.mxu0 0.0
    %2014 = vmatpush1.msra.mxu0 0.0
    %2015 = vmatprep.subr.mxu0 0.0
    %2016 = vmatpush1.msra.mxu0 0.0
    %2017 = vmatprep.subr.mxu0 0.0
    %2018 = vmatpush1.msra.mxu0 0.0
    %2019 = vmatprep.subr.mxu0 0.0
    %2020 = vmatpush1.msra.mxu0 0.0
    %2021 = vmatprep.subr.mxu0 0.0
    %2022 = vmatpush1.msra.mxu0 0.0
    %2023 = vmatprep.subr.mxu0 0.0
    %2024 = vmatpush1.msra.mxu0 0.0
    %2025 = vmatprep.subr.mxu0 0.0
    %2026 = vmatpush1.msra.mxu0 0.0
    %2027 = vmatprep.mubr.f32.mxu0 0.0
    %2028 = vmatmul.mubr.f32.gmra.mrb[0].mxu0 %v1961
    %v2029 = vpop.f32.mrb[0].mxu0
    %v2030 = vadd.f32 %v1957, %v2029
    %v2031 = vpop.f32.mrb[0].mxu0
    %2032 = vdwg.mxu0
    %s2033 = scalar_lea.vmem %s6, 2
    %v2034 = vld [vmem:[%s2033] sm:$0x1]
    %v2036 = vsel %vm1729, %v2034, 0
    %2038 = vmatprep.subr.mxu0 0.0
    %2039 = vmatpush1.msra.mxu0 %v1726
    %2040 = vmatprep.subr.mxu0 0.0
    %2041 = vmatpush1.msra.mxu0 %v1734
    %2042 = vmatprep.subr.mxu0 0.0
    %2043 = vmatpush1.msra.mxu0 0.0
    %2044 = vmatprep.subr.mxu0 0.0
    %2045 = vmatpush1.msra.mxu0 0.0
    %2046 = vmatprep.subr.mxu0 0.0
    %2047 = vmatpush1.msra.mxu0 0.0
    %2048 = vmatprep.subr.mxu0 0.0
    %2049 = vmatpush1.msra.mxu0 0.0
    %2050 = vmatprep.subr.mxu0 0.0
    %2051 = vmatpush1.msra.mxu0 0.0
    %2052 = vmatprep.subr.mxu0 0.0
    %2053 = vmatpush1.msra.mxu0 0.0
    %2054 = vmatprep.subr.mxu0 0.0
    %2055 = vmatpush1.msra.mxu0 0.0
    %2056 = vmatprep.subr.mxu0 0.0
    %2057 = vmatpush1.msra.mxu0 0.0
    %2058 = vmatprep.subr.mxu0 0.0
    %2059 = vmatpush1.msra.mxu0 0.0
    %2060 = vmatprep.subr.mxu0 0.0
    %2061 = vmatpush1.msra.mxu0 0.0
    %2062 = vmatprep.subr.mxu0 0.0
    %2063 = vmatpush1.msra.mxu0 0.0
    %2064 = vmatprep.subr.mxu0 0.0
    %2065 = vmatpush1.msra.mxu0 0.0
    %2066 = vmatprep.subr.mxu0 0.0
    %2067 = vmatpush1.msra.mxu0 0.0
    %2068 = vmatprep.subr.mxu0 0.0
    %2069 = vmatpush1.msra.mxu0 0.0
    %2070 = vmatprep.subr.mxu0 0.0
    %2071 = vmatpush1.msra.mxu0 0.0
    %2072 = vmatprep.subr.mxu0 0.0
    %2073 = vmatpush1.msra.mxu0 0.0
    %2074 = vmatprep.subr.mxu0 0.0
    %2075 = vmatpush1.msra.mxu0 0.0
    %2076 = vmatprep.subr.mxu0 0.0
    %2077 = vmatpush1.msra.mxu0 0.0
    %2078 = vmatprep.subr.mxu0 0.0
    %2079 = vmatpush1.msra.mxu0 0.0
    %2080 = vmatprep.subr.mxu0 0.0
    %2081 = vmatpush1.msra.mxu0 0.0
    %2082 = vmatprep.subr.mxu0 0.0
    %2083 = vmatpush1.msra.mxu0 0.0
    %2084 = vmatprep.subr.mxu0 0.0
    %2085 = vmatpush1.msra.mxu0 0.0
    %2086 = vmatprep.subr.mxu0 0.0
    %2087 = vmatpush1.msra.mxu0 0.0
    %2088 = vmatprep.subr.mxu0 0.0
    %2089 = vmatpush1.msra.mxu0 0.0
    %2090 = vmatprep.subr.mxu0 0.0
    %2091 = vmatpush1.msra.mxu0 0.0
    %2092 = vmatprep.subr.mxu0 0.0
    %2093 = vmatpush1.msra.mxu0 0.0
    %2094 = vmatprep.subr.mxu0 0.0
    %2095 = vmatpush1.msra.mxu0 0.0
    %2096 = vmatprep.subr.mxu0 0.0
    %2097 = vmatpush1.msra.mxu0 0.0
    %2098 = vmatprep.subr.mxu0 0.0
    %2099 = vmatpush1.msra.mxu0 0.0
    %2100 = vmatprep.subr.mxu0 0.0
    %2101 = vmatpush1.msra.mxu0 0.0
    %2102 = vmatprep.mubr.f32.mxu0 0.0
    %2103 = vmatmul.mubr.f32.gmra.mrb[0].mxu0 %v2036
    %v2104 = vpop.f32.mrb[0].mxu0
    %v2105 = vadd.f32 0.0, %v2104
    %v2106 = vpop.f32.mrb[0].mxu0
    %2107 = vdwg.mxu0
    %s2108 = scalar_lea.vmem %s7, 32
    %v2109 = vld [vmem:[%s2108] sm:$0xff]
    %v2110 = vld [vmem:[%s2108 + $0x8] sm:$0xff]
    %v2112 = vsel %vm1886, %v2105, 0
    %2114 = vmatprep.subr.mxu0 0.0
    %2115 = vmatpush1.msra.mxu0 %v2109
    %2116 = vmatprep.subr.mxu0 0.0
    %2117 = vmatpush1.msra.mxu0 %v2110
    %2118 = vmatprep.subr.mxu0 0.0
    %2119 = vmatpush1.msra.mxu0 0.0
    %2120 = vmatprep.subr.mxu0 0.0
    %2121 = vmatpush1.msra.mxu0 0.0
    %2122 = vmatprep.subr.mxu0 0.0
    %2123 = vmatpush1.msra.mxu0 0.0
    %2124 = vmatprep.subr.mxu0 0.0
    %2125 = vmatpush1.msra.mxu0 0.0
    %2126 = vmatprep.subr.mxu0 0.0
    %2127 = vmatpush1.msra.mxu0 0.0
    %2128 = vmatprep.subr.mxu0 0.0
    %2129 = vmatpush1.msra.mxu0 0.0
    %2130 = vmatprep.subr.mxu0 0.0
    %2131 = vmatpush1.msra.mxu0 0.0
    %2132 = vmatprep.subr.mxu0 0.0
    %2133 = vmatpush1.msra.mxu0 0.0
    %2134 = vmatprep.subr.mxu0 0.0
    %2135 = vmatpush1.msra.mxu0 0.0
    %2136 = vmatprep.subr.mxu0 0.0
    %2137 = vmatpush1.msra.mxu0 0.0
    %2138 = vmatprep.subr.mxu0 0.0
    %2139 = vmatpush1.msra.mxu0 0.0
    %2140 = vmatprep.subr.mxu0 0.0
    %2141 = vmatpush1.msra.mxu0 0.0
    %2142 = vmatprep.subr.mxu0 0.0
    %2143 = vmatpush1.msra.mxu0 0.0
    %2144 = vmatprep.subr.mxu0 0.0
    %2145 = vmatpush1.msra.mxu0 0.0
    %2146 = vmatprep.subr.mxu0 0.0
    %2147 = vmatpush1.msra.mxu0 0.0
    %2148 = vmatprep.subr.mxu0 0.0
    %2149 = vmatpush1.msra.mxu0 0.0
    %2150 = vmatprep.subr.mxu0 0.0
    %2151 = vmatpush1.msra.mxu0 0.0
    %2152 = vmatprep.subr.mxu0 0.0
    %2153 = vmatpush1.msra.mxu0 0.0
    %2154 = vmatprep.subr.mxu0 0.0
    %2155 = vmatpush1.msra.mxu0 0.0
    %2156 = vmatprep.subr.mxu0 0.0
    %2157 = vmatpush1.msra.mxu0 0.0
    %2158 = vmatprep.subr.mxu0 0.0
    %2159 = vmatpush1.msra.mxu0 0.0
    %2160 = vmatprep.subr.mxu0 0.0
    %2161 = vmatpush1.msra.mxu0 0.0
    %2162 = vmatprep.subr.mxu0 0.0
    %2163 = vmatpush1.msra.mxu0 0.0
    %2164 = vmatprep.subr.mxu0 0.0
    %2165 = vmatpush1.msra.mxu0 0.0
    %2166 = vmatprep.subr.mxu0 0.0
    %2167 = vmatpush1.msra.mxu0 0.0
    %2168 = vmatprep.subr.mxu0 0.0
    %2169 = vmatpush1.msra.mxu0 0.0
    %2170 = vmatprep.subr.mxu0 0.0
    %2171 = vmatpush1.msra.mxu0 0.0
    %2172 = vmatprep.subr.mxu0 0.0
    %2173 = vmatpush1.msra.mxu0 0.0
    %2174 = vmatprep.subr.mxu0 0.0
    %2175 = vmatpush1.msra.mxu0 0.0
    %2176 = vmatprep.subr.mxu0 0.0
    %2177 = vmatpush1.msra.mxu0 0.0
    %2178 = vmatprep.mubr.f32.mxu0 0.0
    %2179 = vmatmul.mubr.f32.gmra.mrb[0].mxu0 %v2112
    %v2180 = vpop.f32.mrb[0].mxu0
    %v2181 = vadd.f32 0.0, %v2180
    %v2182 = vpop.f32.mrb[0].mxu0
    %2183 = vdwg.mxu0
    %v2184 = vadd.f32 %v2030, %v2181
    %s2185 = scalar_lea.vmem %s6, 3
    %v2186 = vld [vmem:[%s2185] sm:$0x1]
    %v2188 = vsel %vm1729, %v2186, 0
    %2190 = vmatprep.subr.mxu0 0.0
    %2191 = vmatpush1.msra.mxu0 %v1726
    %2192 = vmatprep.subr.mxu0 0.0
    %2193 = vmatpush1.msra.mxu0 %v1734
    %2194 = vmatprep.subr.mxu0 0.0
    %2195 = vmatpush1.msra.mxu0 0.0
    %2196 = vmatprep.subr.mxu0 0.0
    %2197 = vmatpush1.msra.mxu0 0.0
    %2198 = vmatprep.subr.mxu0 0.0
    %2199 = vmatpush1.msra.mxu0 0.0
    %2200 = vmatprep.subr.mxu0 0.0
    %2201 = vmatpush1.msra.mxu0 0.0
    %2202 = vmatprep.subr.mxu0 0.0
    %2203 = vmatpush1.msra.mxu0 0.0
    %2204 = vmatprep.subr.mxu0 0.0
    %2205 = vmatpush1.msra.mxu0 0.0
    %2206 = vmatprep.subr.mxu0 0.0
    %2207 = vmatpush1.msra.mxu0 0.0
    %2208 = vmatprep.subr.mxu0 0.0
    %2209 = vmatpush1.msra.mxu0 0.0
    %2210 = vmatprep.subr.mxu0 0.0
    %2211 = vmatpush1.msra.mxu0 0.0
    %2212 = vmatprep.subr.mxu0 0.0
    %2213 = vmatpush1.msra.mxu0 0.0
    %2214 = vmatprep.subr.mxu0 0.0
    %2215 = vmatpush1.msra.mxu0 0.0
    %2216 = vmatprep.subr.mxu0 0.0
    %2217 = vmatpush1.msra.mxu0 0.0
    %2218 = vmatprep.subr.mxu0 0.0
    %2219 = vmatpush1.msra.mxu0 0.0
    %2220 = vmatprep.subr.mxu0 0.0
    %2221 = vmatpush1.msra.mxu0 0.0
    %2222 = vmatprep.subr.mxu0 0.0
    %2223 = vmatpush1.msra.mxu0 0.0
    %2224 = vmatprep.subr.mxu0 0.0
    %2225 = vmatpush1.msra.mxu0 0.0
    %2226 = vmatprep.subr.mxu0 0.0
    %2227 = vmatpush1.msra.mxu0 0.0
    %2228 = vmatprep.subr.mxu0 0.0
    %2229 = vmatpush1.msra.mxu0 0.0
    %2230 = vmatprep.subr.mxu0 0.0
    %2231 = vmatpush1.msra.mxu0 0.0
    %2232 = vmatprep.subr.mxu0 0.0
    %2233 = vmatpush1.msra.mxu0 0.0
    %2234 = vmatprep.subr.mxu0 0.0
    %2235 = vmatpush1.msra.mxu0 0.0
    %2236 = vmatprep.subr.mxu0 0.0
    %2237 = vmatpush1.msra.mxu0 0.0
    %2238 = vmatprep.subr.mxu0 0.0
    %2239 = vmatpush1.msra.mxu0 0.0
    %2240 = vmatprep.subr.mxu0 0.0
    %2241 = vmatpush1.msra.mxu0 0.0
    %2242 = vmatprep.subr.mxu0 0.0
    %2243 = vmatpush1.msra.mxu0 0.0
    %2244 = vmatprep.subr.mxu0 0.0
    %2245 = vmatpush1.msra.mxu0 0.0
    %2246 = vmatprep.subr.mxu0 0.0
    %2247 = vmatpush1.msra.mxu0 0.0
    %2248 = vmatprep.subr.mxu0 0.0
    %2249 = vmatpush1.msra.mxu0 0.0
    %2250 = vmatprep.subr.mxu0 0.0
    %2251 = vmatpush1.msra.mxu0 0.0
    %2252 = vmatprep.subr.mxu0 0.0
    %2253 = vmatpush1.msra.mxu0 0.0
    %2254 = vmatprep.mubr.f32.mxu0 0.0
    %2255 = vmatmul.mubr.f32.gmra.mrb[0].mxu0 %v2188
    %v2256 = vpop.f32.mrb[0].mxu0
    %v2257 = vadd.f32 0.0, %v2256
    %v2258 = vpop.f32.mrb[0].mxu0
    %2259 = vdwg.mxu0
    %s2260 = scalar_lea.vmem %s7, 48
    %v2261 = vld [vmem:[%s2260] sm:$0xff]
    %v2262 = vld [vmem:[%s2260 + $0x8] sm:$0xff]
    %v2264 = vsel %vm1886, %v2257, 0
    %2266 = vmatprep.subr.mxu0 0.0
    %2267 = vmatpush1.msra.mxu0 %v2261
    %2268 = vmatprep.subr.mxu0 0.0
    %2269 = vmatpush1.msra.mxu0 %v2262
    %2270 = vmatprep.subr.mxu0 0.0
    %2271 = vmatpush1.msra.mxu0 0.0
    %2272 = vmatprep.subr.mxu0 0.0
    %2273 = vmatpush1.msra.mxu0 0.0
    %2274 = vmatprep.subr.mxu0 0.0
    %2275 = vmatpush1.msra.mxu0 0.0
    %2276 = vmatprep.subr.mxu0 0.0
    %2277 = vmatpush1.msra.mxu0 0.0
    %2278 = vmatprep.subr.mxu0 0.0
    %2279 = vmatpush1.msra.mxu0 0.0
    %2280 = vmatprep.subr.mxu0 0.0
    %2281 = vmatpush1.msra.mxu0 0.0
    %2282 = vmatprep.subr.mxu0 0.0
    %2283 = vmatpush1.msra.mxu0 0.0
    %2284 = vmatprep.subr.mxu0 0.0
    %2285 = vmatpush1.msra.mxu0 0.0
    %2286 = vmatprep.subr.mxu0 0.0
    %2287 = vmatpush1.msra.mxu0 0.0
    %2288 = vmatprep.subr.mxu0 0.0
    %2289 = vmatpush1.msra.mxu0 0.0
    %2290 = vmatprep.subr.mxu0 0.0
    %2291 = vmatpush1.msra.mxu0 0.0
    %2292 = vmatprep.subr.mxu0 0.0
    %2293 = vmatpush1.msra.mxu0 0.0
    %2294 = vmatprep.subr.mxu0 0.0
    %2295 = vmatpush1.msra.mxu0 0.0
    %2296 = vmatprep.subr.mxu0 0.0
    %2297 = vmatpush1.msra.mxu0 0.0
    %2298 = vmatprep.subr.mxu0 0.0
    %2299 = vmatpush1.msra.mxu0 0.0
    %2300 = vmatprep.subr.mxu0 0.0
    %2301 = vmatpush1.msra.mxu0 0.0
    %2302 = vmatprep.subr.mxu0 0.0
    %2303 = vmatpush1.msra.mxu0 0.0
    %2304 = vmatprep.subr.mxu0 0.0
    %2305 = vmatpush1.msra.mxu0 0.0
    %2306 = vmatprep.subr.mxu0 0.0
    %2307 = vmatpush1.msra.mxu0 0.0
    %2308 = vmatprep.subr.mxu0 0.0
    %2309 = vmatpush1.msra.mxu0 0.0
    %2310 = vmatprep.subr.mxu0 0.0
    %2311 = vmatpush1.msra.mxu0 0.0
    %2312 = vmatprep.subr.mxu0 0.0
    %2313 = vmatpush1.msra.mxu0 0.0
    %2314 = vmatprep.subr.mxu0 0.0
    %2315 = vmatpush1.msra.mxu0 0.0
    %2316 = vmatprep.subr.mxu0 0.0
    %2317 = vmatpush1.msra.mxu0 0.0
    %2318 = vmatprep.subr.mxu0 0.0
    %2319 = vmatpush1.msra.mxu0 0.0
    %2320 = vmatprep.subr.mxu0 0.0
    %2321 = vmatpush1.msra.mxu0 0.0
    %2322 = vmatprep.subr.mxu0 0.0
    %2323 = vmatpush1.msra.mxu0 0.0
    %2324 = vmatprep.subr.mxu0 0.0
    %2325 = vmatpush1.msra.mxu0 0.0
    %2326 = vmatprep.subr.mxu0 0.0
    %2327 = vmatpush1.msra.mxu0 0.0
    %2328 = vmatprep.subr.mxu0 0.0
    %2329 = vmatpush1.msra.mxu0 0.0
    %2330 = vmatprep.mubr.f32.mxu0 0.0
    %2331 = vmatmul.mubr.f32.gmra.mrb[0].mxu0 %v2264
    %v2332 = vpop.f32.mrb[0].mxu0
    %v2333 = vadd.f32 0.0, %v2332
    %v2334 = vpop.f32.mrb[0].mxu0
    %2335 = vdwg.mxu0
    %v2336 = vadd.f32 %v2184, %v2333
    %s2337 = scalar_lea.vmem %s6, 4
    %v2338 = vld [vmem:[%s2337] sm:$0x1]
    %v2340 = vsel %vm1729, %v2338, 0
    %2342 = vmatprep.subr.mxu0 0.0
    %2343 = vmatpush1.msra.mxu0 %v1726
    %2344 = vmatprep.subr.mxu0 0.0
    %2345 = vmatpush1.msra.mxu0 %v1734
    %2346 = vmatprep.subr.mxu0 0.0
    %2347 = vmatpush1.msra.mxu0 0.0
    %2348 = vmatprep.subr.mxu0 0.0
    %2349 = vmatpush1.msra.mxu0 0.0
    %2350 = vmatprep.subr.mxu0 0.0
    %2351 = vmatpush1.msra.mxu0 0.0
    %2352 = vmatprep.subr.mxu0 0.0
    %2353 = vmatpush1.msra.mxu0 0.0
    %2354 = vmatprep.subr.mxu0 0.0
    %2355 = vmatpush1.msra.mxu0 0.0
    %2356 = vmatprep.subr.mxu0 0.0
    %2357 = vmatpush1.msra.mxu0 0.0
    %2358 = vmatprep.subr.mxu0 0.0
    %2359 = vmatpush1.msra.mxu0 0.0
    %2360 = vmatprep.subr.mxu0 0.0
    %2361 = vmatpush1.msra.mxu0 0.0
    %2362 = vmatprep.subr.mxu0 0.0
    %2363 = vmatpush1.msra.mxu0 0.0
    %2364 = vmatprep.subr.mxu0 0.0
    %2365 = vmatpush1.msra.mxu0 0.0
    %2366 = vmatprep.subr.mxu0 0.0
    %2367 = vmatpush1.msra.mxu0 0.0
    %2368 = vmatprep.subr.mxu0 0.0
    %2369 = vmatpush1.msra.mxu0 0.0
    %2370 = vmatprep.subr.mxu0 0.0
    %2371 = vmatpush1.msra.mxu0 0.0
    %2372 = vmatprep.subr.mxu0 0.0
    %2373 = vmatpush1.msra.mxu0 0.0
    %2374 = vmatprep.subr.mxu0 0.0
    %2375 = vmatpush1.msra.mxu0 0.0
    %2376 = vmatprep.subr.mxu0 0.0
    %2377 = vmatpush1.msra.mxu0 0.0
    %2378 = vmatprep.subr.mxu0 0.0
    %2379 = vmatpush1.msra.mxu0 0.0
    %2380 = vmatprep.subr.mxu0 0.0
    %2381 = vmatpush1.msra.mxu0 0.0
    %2382 = vmatprep.subr.mxu0 0.0
    %2383 = vmatpush1.msra.mxu0 0.0
    %2384 = vmatprep.subr.mxu0 0.0
    %2385 = vmatpush1.msra.mxu0 0.0
    %2386 = vmatprep.subr.mxu0 0.0
    %2387 = vmatpush1.msra.mxu0 0.0
    %2388 = vmatprep.subr.mxu0 0.0
    %2389 = vmatpush1.msra.mxu0 0.0
    %2390 = vmatprep.subr.mxu0 0.0
    %2391 = vmatpush1.msra.mxu0 0.0
    %2392 = vmatprep.subr.mxu0 0.0
    %2393 = vmatpush1.msra.mxu0 0.0
    %2394 = vmatprep.subr.mxu0 0.0
    %2395 = vmatpush1.msra.mxu0 0.0
    %2396 = vmatprep.subr.mxu0 0.0
    %2397 = vmatpush1.msra.mxu0 0.0
    %2398 = vmatprep.subr.mxu0 0.0
    %2399 = vmatpush1.msra.mxu0 0.0
    %2400 = vmatprep.subr.mxu0 0.0
    %2401 = vmatpush1.msra.mxu0 0.0
    %2402 = vmatprep.subr.mxu0 0.0
    %2403 = vmatpush1.msra.mxu0 0.0
    %2404 = vmatprep.subr.mxu0 0.0
    %2405 = vmatpush1.msra.mxu0 0.0
    %2406 = vmatprep.mubr.f32.mxu0 0.0
    %2407 = vmatmul.mubr.f32.gmra.mrb[0].mxu0 %v2340
    %v2408 = vpop.f32.mrb[0].mxu0
    %v2409 = vadd.f32 0.0, %v2408
    %v2410 = vpop.f32.mrb[0].mxu0
    %2411 = vdwg.mxu0
    %s2412 = scalar_lea.vmem %s7, 64
    %v2413 = vld [vmem:[%s2412] sm:$0xff]
    %v2414 = vld [vmem:[%s2412 + $0x8] sm:$0xff]
    %v2416 = vsel %vm1886, %v2409, 0
    %2418 = vmatprep.subr.mxu0 0.0
    %2419 = vmatpush1.msra.mxu0 %v2413
    %2420 = vmatprep.subr.mxu0 0.0
    %2421 = vmatpush1.msra.mxu0 %v2414
    %2422 = vmatprep.subr.mxu0 0.0
    %2423 = vmatpush1.msra.mxu0 0.0
    %2424 = vmatprep.subr.mxu0 0.0
    %2425 = vmatpush1.msra.mxu0 0.0
    %2426 = vmatprep.subr.mxu0 0.0
    %2427 = vmatpush1.msra.mxu0 0.0
    %2428 = vmatprep.subr.mxu0 0.0
    %2429 = vmatpush1.msra.mxu0 0.0
    %2430 = vmatprep.subr.mxu0 0.0
    %2431 = vmatpush1.msra.mxu0 0.0
    %2432 = vmatprep.subr.mxu0 0.0
    %2433 = vmatpush1.msra.mxu0 0.0
    %2434 = vmatprep.subr.mxu0 0.0
    %2435 = vmatpush1.msra.mxu0 0.0
    %2436 = vmatprep.subr.mxu0 0.0
    %2437 = vmatpush1.msra.mxu0 0.0
    %2438 = vmatprep.subr.mxu0 0.0
    %2439 = vmatpush1.msra.mxu0 0.0
    %2440 = vmatprep.subr.mxu0 0.0
    %2441 = vmatpush1.msra.mxu0 0.0
    %2442 = vmatprep.subr.mxu0 0.0
    %2443 = vmatpush1.msra.mxu0 0.0
    %2444 = vmatprep.subr.mxu0 0.0
    %2445 = vmatpush1.msra.mxu0 0.0
    %2446 = vmatprep.subr.mxu0 0.0
    %2447 = vmatpush1.msra.mxu0 0.0
    %2448 = vmatprep.subr.mxu0 0.0
    %2449 = vmatpush1.msra.mxu0 0.0
    %2450 = vmatprep.subr.mxu0 0.0
    %2451 = vmatpush1.msra.mxu0 0.0
    %2452 = vmatprep.subr.mxu0 0.0
    %2453 = vmatpush1.msra.mxu0 0.0
    %2454 = vmatprep.subr.mxu0 0.0
    %2455 = vmatpush1.msra.mxu0 0.0
    %2456 = vmatprep.subr.mxu0 0.0
    %2457 = vmatpush1.msra.mxu0 0.0
    %2458 = vmatprep.subr.mxu0 0.0
    %2459 = vmatpush1.msra.mxu0 0.0
    %2460 = vmatprep.subr.mxu0 0.0
    %2461 = vmatpush1.msra.mxu0 0.0
    %2462 = vmatprep.subr.mxu0 0.0
    %2463 = vmatpush1.msra.mxu0 0.0
    %2464 = vmatprep.subr.mxu0 0.0
    %2465 = vmatpush1.msra.mxu0 0.0
    %2466 = vmatprep.subr.mxu0 0.0
    %2467 = vmatpush1.msra.mxu0 0.0
    %2468 = vmatprep.subr.mxu0 0.0
    %2469 = vmatpush1.msra.mxu0 0.0
    %2470 = vmatprep.subr.mxu0 0.0
    %2471 = vmatpush1.msra.mxu0 0.0
    %2472 = vmatprep.subr.mxu0 0.0
    %2473 = vmatpush1.msra.mxu0 0.0
    %2474 = vmatprep.subr.mxu0 0.0
    %2475 = vmatpush1.msra.mxu0 0.0
    %2476 = vmatprep.subr.mxu0 0.0
    %2477 = vmatpush1.msra.mxu0 0.0
    %2478 = vmatprep.subr.mxu0 0.0
    %2479 = vmatpush1.msra.mxu0 0.0
    %2480 = vmatprep.subr.mxu0 0.0
    %2481 = vmatpush1.msra.mxu0 0.0
    %2482 = vmatprep.mubr.f32.mxu0 0.0
    %2483 = vmatmul.mubr.f32.gmra.mrb[0].mxu0 %v2416
    %v2484 = vpop.f32.mrb[0].mxu0
    %v2485 = vadd.f32 0.0, %v2484
    %v2486 = vpop.f32.mrb[0].mxu0
    %2487 = vdwg.mxu0
    %v2488 = vadd.f32 %v2336, %v2485
    %s2489 = scalar_lea.vmem %s6, 5
    %v2490 = vld [vmem:[%s2489] sm:$0x1]
    %v2492 = vsel %vm1729, %v2490, 0
    %2494 = vmatprep.subr.mxu0 0.0
    %2495 = vmatpush1.msra.mxu0 %v1726
    %2496 = vmatprep.subr.mxu0 0.0
    %2497 = vmatpush1.msra.mxu0 %v1734
    %2498 = vmatprep.subr.mxu0 0.0
    %2499 = vmatpush1.msra.mxu0 0.0
    %2500 = vmatprep.subr.mxu0 0.0
    %2501 = vmatpush1.msra.mxu0 0.0
    %2502 = vmatprep.subr.mxu0 0.0
    %2503 = vmatpush1.msra.mxu0 0.0
    %2504 = vmatprep.subr.mxu0 0.0
    %2505 = vmatpush1.msra.mxu0 0.0
    %2506 = vmatprep.subr.mxu0 0.0
    %2507 = vmatpush1.msra.mxu0 0.0
    %2508 = vmatprep.subr.mxu0 0.0
    %2509 = vmatpush1.msra.mxu0 0.0
    %2510 = vmatprep.subr.mxu0 0.0
    %2511 = vmatpush1.msra.mxu0 0.0
    %2512 = vmatprep.subr.mxu0 0.0
    %2513 = vmatpush1.msra.mxu0 0.0
    %2514 = vmatprep.subr.mxu0 0.0
    %2515 = vmatpush1.msra.mxu0 0.0
    %2516 = vmatprep.subr.mxu0 0.0
    %2517 = vmatpush1.msra.mxu0 0.0
    %2518 = vmatprep.subr.mxu0 0.0
    %2519 = vmatpush1.msra.mxu0 0.0
    %2520 = vmatprep.subr.mxu0 0.0
    %2521 = vmatpush1.msra.mxu0 0.0
    %2522 = vmatprep.subr.mxu0 0.0
    %2523 = vmatpush1.msra.mxu0 0.0
    %2524 = vmatprep.subr.mxu0 0.0
    %2525 = vmatpush1.msra.mxu0 0.0
    %2526 = vmatprep.subr.mxu0 0.0
    %2527 = vmatpush1.msra.mxu0 0.0
    %2528 = vmatprep.subr.mxu0 0.0
    %2529 = vmatpush1.msra.mxu0 0.0
    %2530 = vmatprep.subr.mxu0 0.0
    %2531 = vmatpush1.msra.mxu0 0.0
    %2532 = vmatprep.subr.mxu0 0.0
    %2533 = vmatpush1.msra.mxu0 0.0
    %2534 = vmatprep.subr.mxu0 0.0
    %2535 = vmatpush1.msra.mxu0 0.0
    %2536 = vmatprep.subr.mxu0 0.0
    %2537 = vmatpush1.msra.mxu0 0.0
    %2538 = vmatprep.subr.mxu0 0.0
    %2539 = vmatpush1.msra.mxu0 0.0
    %2540 = vmatprep.subr.mxu0 0.0
    %2541 = vmatpush1.msra.mxu0 0.0
    %2542 = vmatprep.subr.mxu0 0.0
    %2543 = vmatpush1.msra.mxu0 0.0
    %2544 = vmatprep.subr.mxu0 0.0
    %2545 = vmatpush1.msra.mxu0 0.0
    %2546 = vmatprep.subr.mxu0 0.0
    %2547 = vmatpush1.msra.mxu0 0.0
    %2548 = vmatprep.subr.mxu0 0.0
    %2549 = vmatpush1.msra.mxu0 0.0
    %2550 = vmatprep.subr.mxu0 0.0
    %2551 = vmatpush1.msra.mxu0 0.0
    %2552 = vmatprep.subr.mxu0 0.0
    %2553 = vmatpush1.msra.mxu0 0.0
    %2554 = vmatprep.subr.mxu0 0.0
    %2555 = vmatpush1.msra.mxu0 0.0
    %2556 = vmatprep.subr.mxu0 0.0
    %2557 = vmatpush1.msra.mxu0 0.0
    %2558 = vmatprep.mubr.f32.mxu0 0.0
    %2559 = vmatmul.mubr.f32.gmra.mrb[0].mxu0 %v2492
    %v2560 = vpop.f32.mrb[0].mxu0
    %v2561 = vadd.f32 0.0, %v2560
    %v2562 = vpop.f32.mrb[0].mxu0
    %2563 = vdwg.mxu0
    %s2564 = scalar_lea.vmem %s7, 80
    %v2565 = vld [vmem:[%s2564] sm:$0xff]
    %v2566 = vld [vmem:[%s2564 + $0x8] sm:$0xff]
    %v2568 = vsel %vm1886, %v2561, 0
    %2570 = vmatprep.subr.mxu0 0.0
    %2571 = vmatpush1.msra.mxu0 %v2565
    %2572 = vmatprep.subr.mxu0 0.0
    %2573 = vmatpush1.msra.mxu0 %v2566
    %2574 = vmatprep.subr.mxu0 0.0
    %2575 = vmatpush1.msra.mxu0 0.0
    %2576 = vmatprep.subr.mxu0 0.0
    %2577 = vmatpush1.msra.mxu0 0.0
    %2578 = vmatprep.subr.mxu0 0.0
    %2579 = vmatpush1.msra.mxu0 0.0
    %2580 = vmatprep.subr.mxu0 0.0
    %2581 = vmatpush1.msra.mxu0 0.0
    %2582 = vmatprep.subr.mxu0 0.0
    %2583 = vmatpush1.msra.mxu0 0.0
    %2584 = vmatprep.subr.mxu0 0.0
    %2585 = vmatpush1.msra.mxu0 0.0
    %2586 = vmatprep.subr.mxu0 0.0
    %2587 = vmatpush1.msra.mxu0 0.0
    %2588 = vmatprep.subr.mxu0 0.0
    %2589 = vmatpush1.msra.mxu0 0.0
    %2590 = vmatprep.subr.mxu0 0.0
    %2591 = vmatpush1.msra.mxu0 0.0
    %2592 = vmatprep.subr.mxu0 0.0
    %2593 = vmatpush1.msra.mxu0 0.0
    %2594 = vmatprep.subr.mxu0 0.0
    %2595 = vmatpush1.msra.mxu0 0.0
    %2596 = vmatprep.subr.mxu0 0.0
    %2597 = vmatpush1.msra.mxu0 0.0
    %2598 = vmatprep.subr.mxu0 0.0
    %2599 = vmatpush1.msra.mxu0 0.0
    %2600 = vmatprep.subr.mxu0 0.0
    %2601 = vmatpush1.msra.mxu0 0.0
    %2602 = vmatprep.subr.mxu0 0.0
    %2603 = vmatpush1.msra.mxu0 0.0
    %2604 = vmatprep.subr.mxu0 0.0
    %2605 = vmatpush1.msra.mxu0 0.0
    %2606 = vmatprep.subr.mxu0 0.0
    %2607 = vmatpush1.msra.mxu0 0.0
    %2608 = vmatprep.subr.mxu0 0.0
    %2609 = vmatpush1.msra.mxu0 0.0
    %2610 = vmatprep.subr.mxu0 0.0
    %2611 = vmatpush1.msra.mxu0 0.0
    %2612 = vmatprep.subr.mxu0 0.0
    %2613 = vmatpush1.msra.mxu0 0.0
    %2614 = vmatprep.subr.mxu0 0.0
    %2615 = vmatpush1.msra.mxu0 0.0
    %2616 = vmatprep.subr.mxu0 0.0
    %2617 = vmatpush1.msra.mxu0 0.0
    %2618 = vmatprep.subr.mxu0 0.0
    %2619 = vmatpush1.msra.mxu0 0.0
    %2620 = vmatprep.subr.mxu0 0.0
    %2621 = vmatpush1.msra.mxu0 0.0
    %2622 = vmatprep.subr.mxu0 0.0
    %2623 = vmatpush1.msra.mxu0 0.0
    %2624 = vmatprep.subr.mxu0 0.0
    %2625 = vmatpush1.msra.mxu0 0.0
    %2626 = vmatprep.subr.mxu0 0.0
    %2627 = vmatpush1.msra.mxu0 0.0
    %2628 = vmatprep.subr.mxu0 0.0
    %2629 = vmatpush1.msra.mxu0 0.0
    %2630 = vmatprep.subr.mxu0 0.0
    %2631 = vmatpush1.msra.mxu0 0.0
    %2632 = vmatprep.subr.mxu0 0.0
    %2633 = vmatpush1.msra.mxu0 0.0
    %2634 = vmatprep.mubr.f32.mxu0 0.0
    %2635 = vmatmul.mubr.f32.gmra.mrb[0].mxu0 %v2568
    %v2636 = vpop.f32.mrb[0].mxu0
    %v2637 = vadd.f32 0.0, %v2636
    %v2638 = vpop.f32.mrb[0].mxu0
    %2639 = vdwg.mxu0
    %v2640 = vadd.f32 %v2488, %v2637
    %s2641 = scalar_lea.vmem %s6, 6
    %v2642 = vld [vmem:[%s2641] sm:$0x1]
    %v2644 = vsel %vm1729, %v2642, 0
    %2646 = vmatprep.subr.mxu0 0.0
    %2647 = vmatpush1.msra.mxu0 %v1726
    %2648 = vmatprep.subr.mxu0 0.0
    %2649 = vmatpush1.msra.mxu0 %v1734
    %2650 = vmatprep.subr.mxu0 0.0
    %2651 = vmatpush1.msra.mxu0 0.0
    %2652 = vmatprep.subr.mxu0 0.0
    %2653 = vmatpush1.msra.mxu0 0.0
    %2654 = vmatprep.subr.mxu0 0.0
    %2655 = vmatpush1.msra.mxu0 0.0
    %2656 = vmatprep.subr.mxu0 0.0
    %2657 = vmatpush1.msra.mxu0 0.0
    %2658 = vmatprep.subr.mxu0 0.0
    %2659 = vmatpush1.msra.mxu0 0.0
    %2660 = vmatprep.subr.mxu0 0.0
    %2661 = vmatpush1.msra.mxu0 0.0
    %2662 = vmatprep.subr.mxu0 0.0
    %2663 = vmatpush1.msra.mxu0 0.0
    %2664 = vmatprep.subr.mxu0 0.0
    %2665 = vmatpush1.msra.mxu0 0.0
    %2666 = vmatprep.subr.mxu0 0.0
    %2667 = vmatpush1.msra.mxu0 0.0
    %2668 = vmatprep.subr.mxu0 0.0
    %2669 = vmatpush1.msra.mxu0 0.0
    %2670 = vmatprep.subr.mxu0 0.0
    %2671 = vmatpush1.msra.mxu0 0.0
    %2672 = vmatprep.subr.mxu0 0.0
    %2673 = vmatpush1.msra.mxu0 0.0
    %2674 = vmatprep.subr.mxu0 0.0
    %2675 = vmatpush1.msra.mxu0 0.0
    %2676 = vmatprep.subr.mxu0 0.0
    %2677 = vmatpush1.msra.mxu0 0.0
    %2678 = vmatprep.subr.mxu0 0.0
    %2679 = vmatpush1.msra.mxu0 0.0
    %2680 = vmatprep.subr.mxu0 0.0
    %2681 = vmatpush1.msra.mxu0 0.0
    %2682 = vmatprep.subr.mxu0 0.0
    %2683 = vmatpush1.msra.mxu0 0.0
    %2684 = vmatprep.subr.mxu0 0.0
    %2685 = vmatpush1.msra.mxu0 0.0
    %2686 = vmatprep.subr.mxu0 0.0
    %2687 = vmatpush1.msra.mxu0 0.0
    %2688 = vmatprep.subr.mxu0 0.0
    %2689 = vmatpush1.msra.mxu0 0.0
    %2690 = vmatprep.subr.mxu0 0.0
    %2691 = vmatpush1.msra.mxu0 0.0
    %2692 = vmatprep.subr.mxu0 0.0
    %2693 = vmatpush1.msra.mxu0 0.0
    %2694 = vmatprep.subr.mxu0 0.0
    %2695 = vmatpush1.msra.mxu0 0.0
    %2696 = vmatprep.subr.mxu0 0.0
    %2697 = vmatpush1.msra.mxu0 0.0
    %2698 = vmatprep.subr.mxu0 0.0
    %2699 = vmatpush1.msra.mxu0 0.0
    %2700 = vmatprep.subr.mxu0 0.0
    %2701 = vmatpush1.msra.mxu0 0.0
    %2702 = vmatprep.subr.mxu0 0.0
    %2703 = vmatpush1.msra.mxu0 0.0
    %2704 = vmatprep.subr.mxu0 0.0
    %2705 = vmatpush1.msra.mxu0 0.0
    %2706 = vmatprep.subr.mxu0 0.0
    %2707 = vmatpush1.msra.mxu0 0.0
    %2708 = vmatprep.subr.mxu0 0.0
    %2709 = vmatpush1.msra.mxu0 0.0
    %2710 = vmatprep.mubr.f32.mxu0 0.0
    %2711 = vmatmul.mubr.f32.gmra.mrb[0].mxu0 %v2644
    %v2712 = vpop.f32.mrb[0].mxu0
    %v2713 = vadd.f32 0.0, %v2712
    %v2714 = vpop.f32.mrb[0].mxu0
    %2715 = vdwg.mxu0
    %s2716 = scalar_lea.vmem %s7, 96
    %v2717 = vld [vmem:[%s2716] sm:$0xff]
    %v2718 = vld [vmem:[%s2716 + $0x8] sm:$0xff]
    %v2720 = vsel %vm1886, %v2713, 0
    %2722 = vmatprep.subr.mxu0 0.0
    %2723 = vmatpush1.msra.mxu0 %v2717
    %2724 = vmatprep.subr.mxu0 0.0
    %2725 = vmatpush1.msra.mxu0 %v2718
    %2726 = vmatprep.subr.mxu0 0.0
    %2727 = vmatpush1.msra.mxu0 0.0
    %2728 = vmatprep.subr.mxu0 0.0
    %2729 = vmatpush1.msra.mxu0 0.0
    %2730 = vmatprep.subr.mxu0 0.0
    %2731 = vmatpush1.msra.mxu0 0.0
    %2732 = vmatprep.subr.mxu0 0.0
    %2733 = vmatpush1.msra.mxu0 0.0
    %2734 = vmatprep.subr.mxu0 0.0
    %2735 = vmatpush1.msra.mxu0 0.0
    %2736 = vmatprep.subr.mxu0 0.0
    %2737 = vmatpush1.msra.mxu0 0.0
    %2738 = vmatprep.subr.mxu0 0.0
    %2739 = vmatpush1.msra.mxu0 0.0
    %2740 = vmatprep.subr.mxu0 0.0
    %2741 = vmatpush1.msra.mxu0 0.0
    %2742 = vmatprep.subr.mxu0 0.0
    %2743 = vmatpush1.msra.mxu0 0.0
    %2744 = vmatprep.subr.mxu0 0.0
    %2745 = vmatpush1.msra.mxu0 0.0
    %2746 = vmatprep.subr.mxu0 0.0
    %2747 = vmatpush1.msra.mxu0 0.0
    %2748 = vmatprep.subr.mxu0 0.0
    %2749 = vmatpush1.msra.mxu0 0.0
    %2750 = vmatprep.subr.mxu0 0.0
    %2751 = vmatpush1.msra.mxu0 0.0
    %2752 = vmatprep.subr.mxu0 0.0
    %2753 = vmatpush1.msra.mxu0 0.0
    %2754 = vmatprep.subr.mxu0 0.0
    %2755 = vmatpush1.msra.mxu0 0.0
    %2756 = vmatprep.subr.mxu0 0.0
    %2757 = vmatpush1.msra.mxu0 0.0
    %2758 = vmatprep.subr.mxu0 0.0
    %2759 = vmatpush1.msra.mxu0 0.0
    %2760 = vmatprep.subr.mxu0 0.0
    %2761 = vmatpush1.msra.mxu0 0.0
    %2762 = vmatprep.subr.mxu0 0.0
    %2763 = vmatpush1.msra.mxu0 0.0
    %2764 = vmatprep.subr.mxu0 0.0
    %2765 = vmatpush1.msra.mxu0 0.0
    %2766 = vmatprep.subr.mxu0 0.0
    %2767 = vmatpush1.msra.mxu0 0.0
    %2768 = vmatprep.subr.mxu0 0.0
    %2769 = vmatpush1.msra.mxu0 0.0
    %2770 = vmatprep.subr.mxu0 0.0
    %2771 = vmatpush1.msra.mxu0 0.0
    %2772 = vmatprep.subr.mxu0 0.0
    %2773 = vmatpush1.msra.mxu0 0.0
    %2774 = vmatprep.subr.mxu0 0.0
    %2775 = vmatpush1.msra.mxu0 0.0
    %2776 = vmatprep.subr.mxu0 0.0
    %2777 = vmatpush1.msra.mxu0 0.0
    %2778 = vmatprep.subr.mxu0 0.0
    %2779 = vmatpush1.msra.mxu0 0.0
    %2780 = vmatprep.subr.mxu0 0.0
    %2781 = vmatpush1.msra.mxu0 0.0
    %2782 = vmatprep.subr.mxu0 0.0
    %2783 = vmatpush1.msra.mxu0 0.0
    %2784 = vmatprep.subr.mxu0 0.0
    %2785 = vmatpush1.msra.mxu0 0.0
    %2786 = vmatprep.mubr.f32.mxu0 0.0
    %2787 = vmatmul.mubr.f32.gmra.mrb[0].mxu0 %v2720
    %v2788 = vpop.f32.mrb[0].mxu0
    %v2789 = vadd.f32 0.0, %v2788
    %v2790 = vpop.f32.mrb[0].mxu0
    %2791 = vdwg.mxu0
    %v2792 = vadd.f32 %v2640, %v2789
    %s2793 = scalar_lea.vmem %s6, 7
    %v2794 = vld [vmem:[%s2793] sm:$0x1]
    %v2796 = vsel %vm1729, %v2794, 0
    %2798 = vmatprep.subr.mxu0 0.0
    %2799 = vmatpush1.msra.mxu0 %v1726
    %2800 = vmatprep.subr.mxu0 0.0
    %2801 = vmatpush1.msra.mxu0 %v1734
    %2802 = vmatprep.subr.mxu0 0.0
    %2803 = vmatpush1.msra.mxu0 0.0
    %2804 = vmatprep.subr.mxu0 0.0
    %2805 = vmatpush1.msra.mxu0 0.0
    %2806 = vmatprep.subr.mxu0 0.0
    %2807 = vmatpush1.msra.mxu0 0.0
    %2808 = vmatprep.subr.mxu0 0.0
    %2809 = vmatpush1.msra.mxu0 0.0
    %2810 = vmatprep.subr.mxu0 0.0
    %2811 = vmatpush1.msra.mxu0 0.0
    %2812 = vmatprep.subr.mxu0 0.0
    %2813 = vmatpush1.msra.mxu0 0.0
    %2814 = vmatprep.subr.mxu0 0.0
    %2815 = vmatpush1.msra.mxu0 0.0
    %2816 = vmatprep.subr.mxu0 0.0
    %2817 = vmatpush1.msra.mxu0 0.0
    %2818 = vmatprep.subr.mxu0 0.0
    %2819 = vmatpush1.msra.mxu0 0.0
    %2820 = vmatprep.subr.mxu0 0.0
    %2821 = vmatpush1.msra.mxu0 0.0
    %2822 = vmatprep.subr.mxu0 0.0
    %2823 = vmatpush1.msra.mxu0 0.0
    %2824 = vmatprep.subr.mxu0 0.0
    %2825 = vmatpush1.msra.mxu0 0.0
    %2826 = vmatprep.subr.mxu0 0.0
    %2827 = vmatpush1.msra.mxu0 0.0
    %2828 = vmatprep.subr.mxu0 0.0
    %2829 = vmatpush1.msra.mxu0 0.0
    %2830 = vmatprep.subr.mxu0 0.0
    %2831 = vmatpush1.msra.mxu0 0.0
    %2832 = vmatprep.subr.mxu0 0.0
    %2833 = vmatpush1.msra.mxu0 0.0
    %2834 = vmatprep.subr.mxu0 0.0
    %2835 = vmatpush1.msra.mxu0 0.0
    %2836 = vmatprep.subr.mxu0 0.0
    %2837 = vmatpush1.msra.mxu0 0.0
    %2838 = vmatprep.subr.mxu0 0.0
    %2839 = vmatpush1.msra.mxu0 0.0
    %2840 = vmatprep.subr.mxu0 0.0
    %2841 = vmatpush1.msra.mxu0 0.0
    %2842 = vmatprep.subr.mxu0 0.0
    %2843 = vmatpush1.msra.mxu0 0.0
    %2844 = vmatprep.subr.mxu0 0.0
    %2845 = vmatpush1.msra.mxu0 0.0
    %2846 = vmatprep.subr.mxu0 0.0
    %2847 = vmatpush1.msra.mxu0 0.0
    %2848 = vmatprep.subr.mxu0 0.0
    %2849 = vmatpush1.msra.mxu0 0.0
    %2850 = vmatprep.subr.mxu0 0.0
    %2851 = vmatpush1.msra.mxu0 0.0
    %2852 = vmatprep.subr.mxu0 0.0
    %2853 = vmatpush1.msra.mxu0 0.0
    %2854 = vmatprep.subr.mxu0 0.0
    %2855 = vmatpush1.msra.mxu0 0.0
    %2856 = vmatprep.subr.mxu0 0.0
    %2857 = vmatpush1.msra.mxu0 0.0
    %2858 = vmatprep.subr.mxu0 0.0
    %2859 = vmatpush1.msra.mxu0 0.0
    %2860 = vmatprep.subr.mxu0 0.0
    %2861 = vmatpush1.msra.mxu0 0.0
    %2862 = vmatprep.mubr.f32.mxu0 0.0
    %2863 = vmatmul.mubr.f32.gmra.mrb[0].mxu0 %v2796
    %v2864 = vpop.f32.mrb[0].mxu0
    %v2865 = vadd.f32 0.0, %v2864
    %v2866 = vpop.f32.mrb[0].mxu0
    %2867 = vdwg.mxu0
    %s2868 = scalar_lea.vmem %s7, 112
    %v2869 = vld [vmem:[%s2868] sm:$0xff]
    %v2870 = vld [vmem:[%s2868 + $0x8] sm:$0xff]
    %v2872 = vsel %vm1886, %v2865, 0
    %2874 = vmatprep.subr.mxu0 0.0
    %2875 = vmatpush1.msra.mxu0 %v2869
    %2876 = vmatprep.subr.mxu0 0.0
    %2877 = vmatpush1.msra.mxu0 %v2870
    %2878 = vmatprep.subr.mxu0 0.0
    %2879 = vmatpush1.msra.mxu0 0.0
    %2880 = vmatprep.subr.mxu0 0.0
    %2881 = vmatpush1.msra.mxu0 0.0
    %2882 = vmatprep.subr.mxu0 0.0
    %2883 = vmatpush1.msra.mxu0 0.0
    %2884 = vmatprep.subr.mxu0 0.0
    %2885 = vmatpush1.msra.mxu0 0.0
    %2886 = vmatprep.subr.mxu0 0.0
    %2887 = vmatpush1.msra.mxu0 0.0
    %2888 = vmatprep.subr.mxu0 0.0
    %2889 = vmatpush1.msra.mxu0 0.0
    %2890 = vmatprep.subr.mxu0 0.0
    %2891 = vmatpush1.msra.mxu0 0.0
    %2892 = vmatprep.subr.mxu0 0.0
    %2893 = vmatpush1.msra.mxu0 0.0
    %2894 = vmatprep.subr.mxu0 0.0
    %2895 = vmatpush1.msra.mxu0 0.0
    %2896 = vmatprep.subr.mxu0 0.0
    %2897 = vmatpush1.msra.mxu0 0.0
    %2898 = vmatprep.subr.mxu0 0.0
    %2899 = vmatpush1.msra.mxu0 0.0
    %2900 = vmatprep.subr.mxu0 0.0
    %2901 = vmatpush1.msra.mxu0 0.0
    %2902 = vmatprep.subr.mxu0 0.0
    %2903 = vmatpush1.msra.mxu0 0.0
    %2904 = vmatprep.subr.mxu0 0.0
    %2905 = vmatpush1.msra.mxu0 0.0
    %2906 = vmatprep.subr.mxu0 0.0
    %2907 = vmatpush1.msra.mxu0 0.0
    %2908 = vmatprep.subr.mxu0 0.0
    %2909 = vmatpush1.msra.mxu0 0.0
    %2910 = vmatprep.subr.mxu0 0.0
    %2911 = vmatpush1.msra.mxu0 0.0
    %2912 = vmatprep.subr.mxu0 0.0
    %2913 = vmatpush1.msra.mxu0 0.0
    %2914 = vmatprep.subr.mxu0 0.0
    %2915 = vmatpush1.msra.mxu0 0.0
    %2916 = vmatprep.subr.mxu0 0.0
    %2917 = vmatpush1.msra.mxu0 0.0
    %2918 = vmatprep.subr.mxu0 0.0
    %2919 = vmatpush1.msra.mxu0 0.0
    %2920 = vmatprep.subr.mxu0 0.0
    %2921 = vmatpush1.msra.mxu0 0.0
    %2922 = vmatprep.subr.mxu0 0.0
    %2923 = vmatpush1.msra.mxu0 0.0
    %2924 = vmatprep.subr.mxu0 0.0
    %2925 = vmatpush1.msra.mxu0 0.0
    %2926 = vmatprep.subr.mxu0 0.0
    %2927 = vmatpush1.msra.mxu0 0.0
    %2928 = vmatprep.subr.mxu0 0.0
    %2929 = vmatpush1.msra.mxu0 0.0
    %2930 = vmatprep.subr.mxu0 0.0
    %2931 = vmatpush1.msra.mxu0 0.0
    %2932 = vmatprep.subr.mxu0 0.0
    %2933 = vmatpush1.msra.mxu0 0.0
    %2934 = vmatprep.subr.mxu0 0.0
    %2935 = vmatpush1.msra.mxu0 0.0
    %2936 = vmatprep.subr.mxu0 0.0
    %2937 = vmatpush1.msra.mxu0 0.0
    %2938 = vmatprep.mubr.f32.mxu0 0.0
    %2939 = vmatmul.mubr.f32.gmra.mrb[0].mxu0 %v2872
    %v2940 = vpop.f32.mrb[0].mxu0
    %v2941 = vadd.f32 0.0, %v2940
    %v2942 = vpop.f32.mrb[0].mxu0
    %2943 = vdwg.mxu0
    %v2944 = vadd.f32 %v2792, %v2941
    %s2945 = scalar_lea.vmem %s6, 8
    %v2946 = vld [vmem:[%s2945] sm:$0x1]
    %v2948 = vsel %vm1729, %v2946, 0
    %2950 = vmatprep.subr.mxu0 0.0
    %2951 = vmatpush1.msra.mxu0 %v1726
    %2952 = vmatprep.subr.mxu0 0.0
    %2953 = vmatpush1.msra.mxu0 %v1734
    %2954 = vmatprep.subr.mxu0 0.0
    %2955 = vmatpush1.msra.mxu0 0.0
    %2956 = vmatprep.subr.mxu0 0.0
    %2957 = vmatpush1.msra.mxu0 0.0
    %2958 = vmatprep.subr.mxu0 0.0
    %2959 = vmatpush1.msra.mxu0 0.0
    %2960 = vmatprep.subr.mxu0 0.0
    %2961 = vmatpush1.msra.mxu0 0.0
    %2962 = vmatprep.subr.mxu0 0.0
    %2963 = vmatpush1.msra.mxu0 0.0
    %2964 = vmatprep.subr.mxu0 0.0
    %2965 = vmatpush1.msra.mxu0 0.0
    %2966 = vmatprep.subr.mxu0 0.0
    %2967 = vmatpush1.msra.mxu0 0.0
    %2968 = vmatprep.subr.mxu0 0.0
    %2969 = vmatpush1.msra.mxu0 0.0
    %2970 = vmatprep.subr.mxu0 0.0
    %2971 = vmatpush1.msra.mxu0 0.0
    %2972 = vmatprep.subr.mxu0 0.0
    %2973 = vmatpush1.msra.mxu0 0.0
    %2974 = vmatprep.subr.mxu0 0.0
    %2975 = vmatpush1.msra.mxu0 0.0
    %2976 = vmatprep.subr.mxu0 0.0
    %2977 = vmatpush1.msra.mxu0 0.0
    %2978 = vmatprep.subr.mxu0 0.0
    %2979 = vmatpush1.msra.mxu0 0.0
    %2980 = vmatprep.subr.mxu0 0.0
    %2981 = vmatpush1.msra.mxu0 0.0
    %2982 = vmatprep.subr.mxu0 0.0
    %2983 = vmatpush1.msra.mxu0 0.0
    %2984 = vmatprep.subr.mxu0 0.0
    %2985 = vmatpush1.msra.mxu0 0.0
    %2986 = vmatprep.subr.mxu0 0.0
    %2987 = vmatpush1.msra.mxu0 0.0
    %2988 = vmatprep.subr.mxu0 0.0
    %2989 = vmatpush1.msra.mxu0 0.0
    %2990 = vmatprep.subr.mxu0 0.0
    %2991 = vmatpush1.msra.mxu0 0.0
    %2992 = vmatprep.subr.mxu0 0.0
    %2993 = vmatpush1.msra.mxu0 0.0
    %2994 = vmatprep.subr.mxu0 0.0
    %2995 = vmatpush1.msra.mxu0 0.0
    %2996 = vmatprep.subr.mxu0 0.0
    %2997 = vmatpush1.msra.mxu0 0.0
    %2998 = vmatprep.subr.mxu0 0.0
    %2999 = vmatpush1.msra.mxu0 0.0
    %3000 = vmatprep.subr.mxu0 0.0
    %3001 = vmatpush1.msra.mxu0 0.0
    %3002 = vmatprep.subr.mxu0 0.0
    %3003 = vmatpush1.msra.mxu0 0.0
    %3004 = vmatprep.subr.mxu0 0.0
    %3005 = vmatpush1.msra.mxu0 0.0
    %3006 = vmatprep.subr.mxu0 0.0
    %3007 = vmatpush1.msra.mxu0 0.0
    %3008 = vmatprep.subr.mxu0 0.0
    %3009 = vmatpush1.msra.mxu0 0.0
    %3010 = vmatprep.subr.mxu0 0.0
    %3011 = vmatpush1.msra.mxu0 0.0
    %3012 = vmatprep.subr.mxu0 0.0
    %3013 = vmatpush1.msra.mxu0 0.0
    %3014 = vmatprep.mubr.f32.mxu0 0.0
    %3015 = vmatmul.mubr.f32.gmra.mrb[0].mxu0 %v2948
    %v3016 = vpop.f32.mrb[0].mxu0
    %v3017 = vadd.f32 0.0, %v3016
    %v3018 = vpop.f32.mrb[0].mxu0
    %3019 = vdwg.mxu0
    %s3020 = scalar_lea.vmem %s7, 128
    %v3021 = vld [vmem:[%s3020] sm:$0xff]
    %v3022 = vld [vmem:[%s3020 + $0x8] sm:$0xff]
    %v3024 = vsel %vm1886, %v3017, 0
    %3026 = vmatprep.subr.mxu0 0.0
    %3027 = vmatpush1.msra.mxu0 %v3021
    %3028 = vmatprep.subr.mxu0 0.0
    %3029 = vmatpush1.msra.mxu0 %v3022
    %3030 = vmatprep.subr.mxu0 0.0
    %3031 = vmatpush1.msra.mxu0 0.0
    %3032 = vmatprep.subr.mxu0 0.0
    %3033 = vmatpush1.msra.mxu0 0.0
    %3034 = vmatprep.subr.mxu0 0.0
    %3035 = vmatpush1.msra.mxu0 0.0
    %3036 = vmatprep.subr.mxu0 0.0
    %3037 = vmatpush1.msra.mxu0 0.0
    %3038 = vmatprep.subr.mxu0 0.0
    %3039 = vmatpush1.msra.mxu0 0.0
    %3040 = vmatprep.subr.mxu0 0.0
    %3041 = vmatpush1.msra.mxu0 0.0
    %3042 = vmatprep.subr.mxu0 0.0
    %3043 = vmatpush1.msra.mxu0 0.0
    %3044 = vmatprep.subr.mxu0 0.0
    %3045 = vmatpush1.msra.mxu0 0.0
    %3046 = vmatprep.subr.mxu0 0.0
    %3047 = vmatpush1.msra.mxu0 0.0
    %3048 = vmatprep.subr.mxu0 0.0
    %3049 = vmatpush1.msra.mxu0 0.0
    %3050 = vmatprep.subr.mxu0 0.0
    %3051 = vmatpush1.msra.mxu0 0.0
    %3052 = vmatprep.subr.mxu0 0.0
    %3053 = vmatpush1.msra.mxu0 0.0
    %3054 = vmatprep.subr.mxu0 0.0
    %3055 = vmatpush1.msra.mxu0 0.0
    %3056 = vmatprep.subr.mxu0 0.0
    %3057 = vmatpush1.msra.mxu0 0.0
    %3058 = vmatprep.subr.mxu0 0.0
    %3059 = vmatpush1.msra.mxu0 0.0
    %3060 = vmatprep.subr.mxu0 0.0
    %3061 = vmatpush1.msra.mxu0 0.0
    %3062 = vmatprep.subr.mxu0 0.0
    %3063 = vmatpush1.msra.mxu0 0.0
    %3064 = vmatprep.subr.mxu0 0.0
    %3065 = vmatpush1.msra.mxu0 0.0
    %3066 = vmatprep.subr.mxu0 0.0
    %3067 = vmatpush1.msra.mxu0 0.0
    %3068 = vmatprep.subr.mxu0 0.0
    %3069 = vmatpush1.msra.mxu0 0.0
    %3070 = vmatprep.subr.mxu0 0.0
    %3071 = vmatpush1.msra.mxu0 0.0
    %3072 = vmatprep.subr.mxu0 0.0
    %3073 = vmatpush1.msra.mxu0 0.0
    %3074 = vmatprep.subr.mxu0 0.0
    %3075 = vmatpush1.msra.mxu0 0.0
    %3076 = vmatprep.subr.mxu0 0.0
    %3077 = vmatpush1.msra.mxu0 0.0
    %3078 = vmatprep.subr.mxu0 0.0
    %3079 = vmatpush1.msra.mxu0 0.0
    %3080 = vmatprep.subr.mxu0 0.0
    %3081 = vmatpush1.msra.mxu0 0.0
    %3082 = vmatprep.subr.mxu0 0.0
    %3083 = vmatpush1.msra.mxu0 0.0
    %3084 = vmatprep.subr.mxu0 0.0
    %3085 = vmatpush1.msra.mxu0 0.0
    %3086 = vmatprep.subr.mxu0 0.0
    %3087 = vmatpush1.msra.mxu0 0.0
    %3088 = vmatprep.subr.mxu0 0.0
    %3089 = vmatpush1.msra.mxu0 0.0
    %3090 = vmatprep.mubr.f32.mxu0 0.0
    %3091 = vmatmul.mubr.f32.gmra.mrb[0].mxu0 %v3024
    %v3092 = vpop.f32.mrb[0].mxu0
    %v3093 = vadd.f32 0.0, %v3092
    %v3094 = vpop.f32.mrb[0].mxu0
    %3095 = vdwg.mxu0
    %v3096 = vadd.f32 %v2944, %v3093
    %v3097 = vld [vmem:[%s8] sm:$0x1]
    %v3098 = vadd.f32 %v3096, %v3097
    %v3099 = vmax.f32 %v3098, 0.0
    %v3100 = vld [vmem:[%s9] sm:$0xff]
    %v3101 = vld [vmem:[%s9 + $0x8] sm:$0xff]
    %v3102 = vld [vmem:[%s9 + $0x10] sm:$0xff]
    %v3103 = vld [vmem:[%s9 + $0x18] sm:$0xff]
    %v3104 = vld [vmem:[%s9 + $0x20] sm:$0xff]
    %v3105 = vld [vmem:[%s9 + $0x28] sm:$0xff]
    %v3106 = vld [vmem:[%s9 + $0x30] sm:$0xff]
    %v3107 = vld [vmem:[%s9 + $0x38] sm:$0xff]
    %v3108 = vld [vmem:[%s10] sm:$0xf]
    %v3110 = vlaneseq
    %v3111 = vshrl.u32 %v3110, 7
    %v3112 = vsub.s32 0, %v3111
    %v3113 = vrot.slane %v3108, %v3112
    %v3114 = vlaneseq
    %v3115 = vshrl.u32 %v3114, 7
    %v3116 = vsub.s32 1, %v3115
    %v3117 = vrot.slane %v3108, %v3116
    %v3118 = vlaneseq
    %v3119 = vshrl.u32 %v3118, 7
    %v3120 = vsub.s32 2, %v3119
    %v3121 = vrot.slane %v3108, %v3120
    %v3122 = vlaneseq
    %v3123 = vshrl.u32 %v3122, 7
    %v3124 = vsub.s32 3, %v3123
    %v3125 = vrot.slane %v3108, %v3124
    %v3131 = vsel %vm1886, %v3099, 0
    %3133 = vmatprep.subr.mxu0 %v3101
    %3134 = vmatpush1.msra.mxu0 %v3100
    %3135 = vmatprep.subr.mxu0 %v3105
    %3136 = vmatpush1.msra.mxu0 %v3104
    %3137 = vmatprep.subr.mxu0 0.0
    %3138 = vmatpush1.msra.mxu0 0.0
    %3139 = vmatprep.subr.mxu0 0.0
    %3140 = vmatpush1.msra.mxu0 0.0
    %3141 = vmatprep.subr.mxu0 0.0
    %3142 = vmatpush1.msra.mxu0 0.0
    %3143 = vmatprep.subr.mxu0 0.0
    %3144 = vmatpush1.msra.mxu0 0.0
    %3145 = vmatprep.subr.mxu0 0.0
    %3146 = vmatpush1.msra.mxu0 0.0
    %3147 = vmatprep.subr.mxu0 0.0
    %3148 = vmatpush1.msra.mxu0 0.0
    %3149 = vmatprep.subr.mxu0 0.0
    %3150 = vmatpush1.msra.mxu0 0.0
    %3151 = vmatprep.subr.mxu0 0.0
    %3152 = vmatpush1.msra.mxu0 0.0
    %3153 = vmatprep.subr.mxu0 0.0
    %3154 = vmatpush1.msra.mxu0 0.0
    %3155 = vmatprep.subr.mxu0 0.0
    %3156 = vmatpush1.msra.mxu0 0.0
    %3157 = vmatprep.subr.mxu0 0.0
    %3158 = vmatpush1.msra.mxu0 0.0
    %3159 = vmatprep.subr.mxu0 0.0
    %3160 = vmatpush1.msra.mxu0 0.0
    %3161 = vmatprep.subr.mxu0 0.0
    %3162 = vmatpush1.msra.mxu0 0.0
    %3163 = vmatprep.subr.mxu0 0.0
    %3164 = vmatpush1.msra.mxu0 0.0
    %3165 = vmatprep.subr.mxu0 0.0
    %3166 = vmatpush1.msra.mxu0 0.0
    %3167 = vmatprep.subr.mxu0 0.0
    %3168 = vmatpush1.msra.mxu0 0.0
    %3169 = vmatprep.subr.mxu0 0.0
    %3170 = vmatpush1.msra.mxu0 0.0
    %3171 = vmatprep.subr.mxu0 0.0
    %3172 = vmatpush1.msra.mxu0 0.0
    %3173 = vmatprep.subr.mxu0 0.0
    %3174 = vmatpush1.msra.mxu0 0.0
    %3175 = vmatprep.subr.mxu0 0.0
    %3176 = vmatpush1.msra.mxu0 0.0
    %3177 = vmatprep.subr.mxu0 0.0
    %3178 = vmatpush1.msra.mxu0 0.0
    %3179 = vmatprep.subr.mxu0 0.0
    %3180 = vmatpush1.msra.mxu0 0.0
    %3181 = vmatprep.subr.mxu0 0.0
    %3182 = vmatpush1.msra.mxu0 0.0
    %3183 = vmatprep.subr.mxu0 0.0
    %3184 = vmatpush1.msra.mxu0 0.0
    %3185 = vmatprep.subr.mxu0 0.0
    %3186 = vmatpush1.msra.mxu0 0.0
    %3187 = vmatprep.subr.mxu0 0.0
    %3188 = vmatpush1.msra.mxu0 0.0
    %3189 = vmatprep.subr.mxu0 0.0
    %3190 = vmatpush1.msra.mxu0 0.0
    %3191 = vmatprep.subr.mxu0 0.0
    %3192 = vmatpush1.msra.mxu0 0.0
    %3193 = vmatprep.subr.mxu0 0.0
    %3194 = vmatpush1.msra.mxu0 0.0
    %3195 = vmatprep.subr.mxu0 0.0
    %3196 = vmatpush1.msra.mxu0 0.0
    %3197 = vmatprep.mubr.f32.mxu0 0.0
    %3198 = vmatmul.mubr.f32.gmra.mrb[0].mxu0 %v3131
    %v3199 = vpop.f32.mrb[0].mxu0
    %v3200 = vadd.f32 %v3113, %v3199
    %v3201 = vpop.f32.mrb[0].mxu0
    %v3202 = vadd.f32 %v3117, %v3201
    %3203 = vdwg.mxu0
    %3204 = vmatprep.subr.mxu0 %v3103
    %3205 = vmatpush1.msra.mxu0 %v3102
    %3206 = vmatprep.subr.mxu0 %v3107
    %3207 = vmatpush1.msra.mxu0 %v3106
    %3208 = vmatprep.subr.mxu0 0.0
    %3209 = vmatpush1.msra.mxu0 0.0
    %3210 = vmatprep.subr.mxu0 0.0
    %3211 = vmatpush1.msra.mxu0 0.0
    %3212 = vmatprep.subr.mxu0 0.0
    %3213 = vmatpush1.msra.mxu0 0.0
    %3214 = vmatprep.subr.mxu0 0.0
    %3215 = vmatpush1.msra.mxu0 0.0
    %3216 = vmatprep.subr.mxu0 0.0
    %3217 = vmatpush1.msra.mxu0 0.0
    %3218 = vmatprep.subr.mxu0 0.0
    %3219 = vmatpush1.msra.mxu0 0.0
    %3220 = vmatprep.subr.mxu0 0.0
    %3221 = vmatpush1.msra.mxu0 0.0
    %3222 = vmatprep.subr.mxu0 0.0
    %3223 = vmatpush1.msra.mxu0 0.0
    %3224 = vmatprep.subr.mxu0 0.0
    %3225 = vmatpush1.msra.mxu0 0.0
    %3226 = vmatprep.subr.mxu0 0.0
    %3227 = vmatpush1.msra.mxu0 0.0
    %3228 = vmatprep.subr.mxu0 0.0
    %3229 = vmatpush1.msra.mxu0 0.0
    %3230 = vmatprep.subr.mxu0 0.0
    %3231 = vmatpush1.msra.mxu0 0.0
    %3232 = vmatprep.subr.mxu0 0.0
    %3233 = vmatpush1.msra.mxu0 0.0
    %3234 = vmatprep.subr.mxu0 0.0
    %3235 = vmatpush1.msra.mxu0 0.0
    %3236 = vmatprep.subr.mxu0 0.0
    %3237 = vmatpush1.msra.mxu0 0.0
    %3238 = vmatprep.subr.mxu0 0.0
    %3239 = vmatpush1.msra.mxu0 0.0
    %3240 = vmatprep.subr.mxu0 0.0
    %3241 = vmatpush1.msra.mxu0 0.0
    %3242 = vmatprep.subr.mxu0 0.0
    %3243 = vmatpush1.msra.mxu0 0.0
    %3244 = vmatprep.subr.mxu0 0.0
    %3245 = vmatpush1.msra.mxu0 0.0
    %3246 = vmatprep.subr.mxu0 0.0
    %3247 = vmatpush1.msra.mxu0 0.0
    %3248 = vmatprep.subr.mxu0 0.0
    %3249 = vmatpush1.msra.mxu0 0.0
    %3250 = vmatprep.subr.mxu0 0.0
    %3251 = vmatpush1.msra.mxu0 0.0
    %3252 = vmatprep.subr.mxu0 0.0
    %3253 = vmatpush1.msra.mxu0 0.0
    %3254 = vmatprep.subr.mxu0 0.0
    %3255 = vmatpush1.msra.mxu0 0.0
    %3256 = vmatprep.subr.mxu0 0.0
    %3257 = vmatpush1.msra.mxu0 0.0
    %3258 = vmatprep.subr.mxu0 0.0
    %3259 = vmatpush1.msra.mxu0 0.0
    %3260 = vmatprep.subr.mxu0 0.0
    %3261 = vmatpush1.msra.mxu0 0.0
    %3262 = vmatprep.subr.mxu0 0.0
    %3263 = vmatpush1.msra.mxu0 0.0
    %3264 = vmatprep.subr.mxu0 0.0
    %3265 = vmatpush1.msra.mxu0 0.0
    %3266 = vmatprep.subr.mxu0 0.0
    %3267 = vmatpush1.msra.mxu0 0.0
    %3268 = vmatprep.mubr.f32.mxu0 0.0
    %3269 = vmatmul.mubr.f32.gmra.mrb[0].mxu0 %v3131
    %v3270 = vpop.f32.mrb[0].mxu0
    %v3271 = vadd.f32 %v3121, %v3270
    %v3272 = vpop.f32.mrb[0].mxu0
    %v3273 = vadd.f32 %v3125, %v3272
    %3274 = vdwg.mxu0
    %v3275 = vmax.f32 %v3200, 0.0
    %v3276 = vmax.f32 %v3202, 0.0
    %v3277 = vmax.f32 %v3271, 0.0
    %v3278 = vmax.f32 %v3273, 0.0
    %v3279 = vld [vmem:[%s11] sm:$0xff]
    %v3280 = vld [vmem:[%s11 + $0x8] sm:$0xff]
    %v3281 = vld [vmem:[%s11 + $0x10] sm:$0xff]
    %v3282 = vld [vmem:[%s11 + $0x18] sm:$0xff]
    %v3283 = vld [vmem:[%s11 + $0x20] sm:$0xff]
    %v3284 = vld [vmem:[%s11 + $0x28] sm:$0xff]
    %v3285 = vld [vmem:[%s11 + $0x30] sm:$0xff]
    %v3286 = vld [vmem:[%s11 + $0x38] sm:$0xff]
    %v3287 = vld [vmem:[%s11 + $0x40] sm:$0xff]
    %v3288 = vld [vmem:[%s11 + $0x48] sm:$0xff]
    %v3289 = vld [vmem:[%s11 + $0x50] sm:$0xff]
    %v3290 = vld [vmem:[%s11 + $0x58] sm:$0xff]
    %v3291 = vld [vmem:[%s11 + $0x60] sm:$0xff]
    %v3292 = vld [vmem:[%s11 + $0x68] sm:$0xff]
    %v3293 = vld [vmem:[%s11 + $0x70] sm:$0xff]
    %v3294 = vld [vmem:[%s11 + $0x78] sm:$0xff]
    %v3295 = vld [vmem:[%s11 + $0x80] sm:$0xff]
    %v3296 = vld [vmem:[%s11 + $0x88] sm:$0xff]
    %v3297 = vld [vmem:[%s11 + $0x90] sm:$0xff]
    %v3298 = vld [vmem:[%s11 + $0x98] sm:$0xff]
    %v3299 = vld [vmem:[%s11 + $0xa0] sm:$0xff]
    %v3300 = vld [vmem:[%s11 + $0xa8] sm:$0xff]
    %v3301 = vld [vmem:[%s11 + $0xb0] sm:$0xff]
    %v3302 = vld [vmem:[%s11 + $0xb8] sm:$0xff]
    %v3303 = vld [vmem:[%s11 + $0xc0] sm:$0xff]
    %v3304 = vld [vmem:[%s11 + $0xc8] sm:$0xff]
    %v3305 = vld [vmem:[%s11 + $0xd0] sm:$0xff]
    %v3306 = vld [vmem:[%s11 + $0xd8] sm:$0xff]
    %v3307 = vld [vmem:[%s11 + $0xe0] sm:$0xff]
    %v3308 = vld [vmem:[%s11 + $0xe8] sm:$0xff]
    %v3309 = vld [vmem:[%s11 + $0xf0] sm:$0xff]
    %v3310 = vld [vmem:[%s11 + $0xf8] sm:$0xff]
    %v3311 = vld [vmem:[%s11 + $0x100] sm:$0xff]
    %v3312 = vld [vmem:[%s11 + $0x108] sm:$0xff]
    %v3313 = vld [vmem:[%s11 + $0x110] sm:$0xff]
    %v3314 = vld [vmem:[%s11 + $0x118] sm:$0xff]
    %v3315 = vld [vmem:[%s11 + $0x120] sm:$0xff]
    %v3316 = vld [vmem:[%s11 + $0x128] sm:$0xff]
    %v3317 = vld [vmem:[%s11 + $0x130] sm:$0xff]
    %v3318 = vld [vmem:[%s11 + $0x138] sm:$0xff]
    %v3319 = vld [vmem:[%s11 + $0x140] sm:$0xff]
    %v3320 = vld [vmem:[%s11 + $0x148] sm:$0xff]
    %v3321 = vld [vmem:[%s11 + $0x150] sm:$0xff]
    %v3322 = vld [vmem:[%s11 + $0x158] sm:$0xff]
    %v3323 = vld [vmem:[%s11 + $0x160] sm:$0xff]
    %v3324 = vld [vmem:[%s11 + $0x168] sm:$0xff]
    %v3325 = vld [vmem:[%s11 + $0x170] sm:$0xff]
    %v3326 = vld [vmem:[%s11 + $0x178] sm:$0xff]
    %v3327 = vld [vmem:[%s11 + $0x180] sm:$0xff]
    %v3328 = vld [vmem:[%s11 + $0x188] sm:$0xff]
    %v3329 = vld [vmem:[%s11 + $0x190] sm:$0xff]
    %v3330 = vld [vmem:[%s11 + $0x198] sm:$0xff]
    %v3331 = vld [vmem:[%s11 + $0x1a0] sm:$0xff]
    %v3332 = vld [vmem:[%s11 + $0x1a8] sm:$0xff]
    %v3333 = vld [vmem:[%s11 + $0x1b0] sm:$0xff]
    %v3334 = vld [vmem:[%s11 + $0x1b8] sm:$0xff]
    %v3335 = vld [vmem:[%s11 + $0x1c0] sm:$0xff]
    %v3336 = vld [vmem:[%s11 + $0x1c8] sm:$0xff]
    %v3337 = vld [vmem:[%s11 + $0x1d0] sm:$0xff]
    %v3338 = vld [vmem:[%s11 + $0x1d8] sm:$0xff]
    %v3339 = vld [vmem:[%s11 + $0x1e0] sm:$0xff]
    %v3340 = vld [vmem:[%s11 + $0x1e8] sm:$0xff]
    %v3341 = vld [vmem:[%s11 + $0x1f0] sm:$0xff]
    %v3342 = vld [vmem:[%s11 + $0x1f8] sm:$0xff]
    %v3343 = vld [vmem:[%s12] sm:$0x1]
    %3344 = vmatprep.subr.mxu0 0.0
    %3345 = vmatpush1.msra.mxu0 %v3279
    %3346 = vmatprep.subr.mxu0 0.0
    %3347 = vmatpush1.msra.mxu0 %v3280
    %3348 = vmatprep.subr.mxu0 0.0
    %3349 = vmatpush1.msra.mxu0 %v3281
    %3350 = vmatprep.subr.mxu0 0.0
    %3351 = vmatpush1.msra.mxu0 %v3282
    %3352 = vmatprep.subr.mxu0 0.0
    %3353 = vmatpush1.msra.mxu0 %v3283
    %3354 = vmatprep.subr.mxu0 0.0
    %3355 = vmatpush1.msra.mxu0 %v3284
    %3356 = vmatprep.subr.mxu0 0.0
    %3357 = vmatpush1.msra.mxu0 %v3285
    %3358 = vmatprep.subr.mxu0 0.0
    %3359 = vmatpush1.msra.mxu0 %v3286
    %3360 = vmatprep.subr.mxu0 0.0
    %3361 = vmatpush1.msra.mxu0 %v3287
    %3362 = vmatprep.subr.mxu0 0.0
    %3363 = vmatpush1.msra.mxu0 %v3288
    %3364 = vmatprep.subr.mxu0 0.0
    %3365 = vmatpush1.msra.mxu0 %v3289
    %3366 = vmatprep.subr.mxu0 0.0
    %3367 = vmatpush1.msra.mxu0 %v3290
    %3368 = vmatprep.subr.mxu0 0.0
    %3369 = vmatpush1.msra.mxu0 %v3291
    %3370 = vmatprep.subr.mxu0 0.0
    %3371 = vmatpush1.msra.mxu0 %v3292
    %3372 = vmatprep.subr.mxu0 0.0
    %3373 = vmatpush1.msra.mxu0 %v3293
    %3374 = vmatprep.subr.mxu0 0.0
    %3375 = vmatpush1.msra.mxu0 %v3294
    %3376 = vmatprep.subr.mxu0 0.0
    %3377 = vmatpush1.msra.mxu0 %v3295
    %3378 = vmatprep.subr.mxu0 0.0
    %3379 = vmatpush1.msra.mxu0 %v3296
    %3380 = vmatprep.subr.mxu0 0.0
    %3381 = vmatpush1.msra.mxu0 %v3297
    %3382 = vmatprep.subr.mxu0 0.0
    %3383 = vmatpush1.msra.mxu0 %v3298
    %3384 = vmatprep.subr.mxu0 0.0
    %3385 = vmatpush1.msra.mxu0 %v3299
    %3386 = vmatprep.subr.mxu0 0.0
    %3387 = vmatpush1.msra.mxu0 %v3300
    %3388 = vmatprep.subr.mxu0 0.0
    %3389 = vmatpush1.msra.mxu0 %v3301
    %3390 = vmatprep.subr.mxu0 0.0
    %3391 = vmatpush1.msra.mxu0 %v3302
    %3392 = vmatprep.subr.mxu0 0.0
    %3393 = vmatpush1.msra.mxu0 %v3303
    %3394 = vmatprep.subr.mxu0 0.0
    %3395 = vmatpush1.msra.mxu0 %v3304
    %3396 = vmatprep.subr.mxu0 0.0
    %3397 = vmatpush1.msra.mxu0 %v3305
    %3398 = vmatprep.subr.mxu0 0.0
    %3399 = vmatpush1.msra.mxu0 %v3306
    %3400 = vmatprep.subr.mxu0 0.0
    %3401 = vmatpush1.msra.mxu0 %v3307
    %3402 = vmatprep.subr.mxu0 0.0
    %3403 = vmatpush1.msra.mxu0 %v3308
    %3404 = vmatprep.subr.mxu0 0.0
    %3405 = vmatpush1.msra.mxu0 %v3309
    %3406 = vmatprep.subr.mxu0 0.0
    %3407 = vmatpush1.msra.mxu0 %v3310
    %3408 = vmatprep.mubr.f32.mxu0 %v3276
    %3409 = vmatmul.mubr.f32.gmra.mrb[0].mxu0 %v3275
    %v3410 = vpop.f32.mrb[0].mxu0
    %v3411 = vadd.f32 %v3343, %v3410
    %v3412 = vpop.f32.mrb[0].mxu0
    %3413 = vdwg.mxu0
    %3414 = vmatprep.subr.mxu0 0.0
    %3415 = vmatpush1.msra.mxu0 %v3311
    %3416 = vmatprep.subr.mxu0 0.0
    %3417 = vmatpush1.msra.mxu0 %v3312
    %3418 = vmatprep.subr.mxu0 0.0
    %3419 = vmatpush1.msra.mxu0 %v3313
    %3420 = vmatprep.subr.mxu0 0.0
    %3421 = vmatpush1.msra.mxu0 %v3314
    %3422 = vmatprep.subr.mxu0 0.0
    %3423 = vmatpush1.msra.mxu0 %v3315
    %3424 = vmatprep.subr.mxu0 0.0
    %3425 = vmatpush1.msra.mxu0 %v3316
    %3426 = vmatprep.subr.mxu0 0.0
    %3427 = vmatpush1.msra.mxu0 %v3317
    %3428 = vmatprep.subr.mxu0 0.0
    %3429 = vmatpush1.msra.mxu0 %v3318
    %3430 = vmatprep.subr.mxu0 0.0
    %3431 = vmatpush1.msra.mxu0 %v3319
    %3432 = vmatprep.subr.mxu0 0.0
    %3433 = vmatpush1.msra.mxu0 %v3320
    %3434 = vmatprep.subr.mxu0 0.0
    %3435 = vmatpush1.msra.mxu0 %v3321
    %3436 = vmatprep.subr.mxu0 0.0
    %3437 = vmatpush1.msra.mxu0 %v3322
    %3438 = vmatprep.subr.mxu0 0.0
    %3439 = vmatpush1.msra.mxu0 %v3323
    %3440 = vmatprep.subr.mxu0 0.0
    %3441 = vmatpush1.msra.mxu0 %v3324
    %3442 = vmatprep.subr.mxu0 0.0
    %3443 = vmatpush1.msra.mxu0 %v3325
    %3444 = vmatprep.subr.mxu0 0.0
    %3445 = vmatpush1.msra.mxu0 %v3326
    %3446 = vmatprep.subr.mxu0 0.0
    %3447 = vmatpush1.msra.mxu0 %v3327
    %3448 = vmatprep.subr.mxu0 0.0
    %3449 = vmatpush1.msra.mxu0 %v3328
    %3450 = vmatprep.subr.mxu0 0.0
    %3451 = vmatpush1.msra.mxu0 %v3329
    %3452 = vmatprep.subr.mxu0 0.0
    %3453 = vmatpush1.msra.mxu0 %v3330
    %3454 = vmatprep.subr.mxu0 0.0
    %3455 = vmatpush1.msra.mxu0 %v3331
    %3456 = vmatprep.subr.mxu0 0.0
    %3457 = vmatpush1.msra.mxu0 %v3332
    %3458 = vmatprep.subr.mxu0 0.0
    %3459 = vmatpush1.msra.mxu0 %v3333
    %3460 = vmatprep.subr.mxu0 0.0
    %3461 = vmatpush1.msra.mxu0 %v3334
    %3462 = vmatprep.subr.mxu0 0.0
    %3463 = vmatpush1.msra.mxu0 %v3335
    %3464 = vmatprep.subr.mxu0 0.0
    %3465 = vmatpush1.msra.mxu0 %v3336
    %3466 = vmatprep.subr.mxu0 0.0
    %3467 = vmatpush1.msra.mxu0 %v3337
    %3468 = vmatprep.subr.mxu0 0.0
    %3469 = vmatpush1.msra.mxu0 %v3338
    %3470 = vmatprep.subr.mxu0 0.0
    %3471 = vmatpush1.msra.mxu0 %v3339
    %3472 = vmatprep.subr.mxu0 0.0
    %3473 = vmatpush1.msra.mxu0 %v3340
    %3474 = vmatprep.subr.mxu0 0.0
    %3475 = vmatpush1.msra.mxu0 %v3341
    %3476 = vmatprep.subr.mxu0 0.0
    %3477 = vmatpush1.msra.mxu0 %v3342
    %3478 = vmatprep.mubr.f32.mxu0 %v3278
    %3479 = vmatmul.mubr.f32.gmra.mrb[0].mxu0 %v3277
    %v3480 = vpop.f32.mrb[0].mxu0
    %v3481 = vadd.f32 %v3411, %v3480
    %v3482 = vpop.f32.mrb[0].mxu0
    %3483 = vdwg.mxu0
    %vm3484 = vcmask 8192
    %v3485 = vsel %vm3484, %v3481, -inf
    %3486 = vmax.xlane.f32.xlu0 %v3485
    %v3487 = vpop.xlane.xlu0 %3486
    %v3488 = vsub.f32 %v3481, %v3487
    %v3489 = vmul.f32 %v3488, 1.442695
    %v3490 = vpow.pop %v3489
    %v3491 = vsel %vm3484, %v3490, 0.0
    %3492 = vadd.xlane.f32.xlu0 %v3491
    %v3493 = vpop.xlane.xlu0 %3492
    %v3494 = vrcp.pop %v3493
    %v3495 = vmul.f32 %v3490, %v3494
    %3496 = vst.msk [vmem:[#allocation2] sm:$0x1] %vm3484, %v3495
    // Predicated region
    $region54: #{pong_forward_probs.1} parent=1 // pred_check
      _
    $region55: #{pong_forward_probs.1} parent=1 // pred_check_branch
      %3498 = sbr.rel (0) target = $region57
    $region56: #{pong_forward_probs.1} parent=1 // pred_region
      %s3500 = ssub.s32 16, 16
      %3501 = vsyncadd [#allocation3], %s3500
      %s3503 = sshll.u32 [#allocation2], 4
      %s3504 = int_to_ptr.vmem [resolvable:$true] %s3503
      %3506 = dma.vmem_to_hbm [thread:$0]  %s3504, 16, %s13, [#allocation3]
    $region57: #{pong_forward_probs.1} parent=1 // pred_fallthru
      _
    // Predicated region
    $region58: #{pong_forward_probs.1} parent=1 // pred_check
      _
    $region59: #{pong_forward_probs.1} parent=1 // pred_check_branch
      %3508 = sbr.rel (0) target = $region61
    $region60: #{pong_forward_probs.1} parent=1 // pred_region
      %3509 = dma.done [#allocation3], 16
    $region61: #{pong_forward_probs.1} parent=1 // pred_fallthru
      _
    %3510 = vsyncpa [#allocation3], 1

</llo_original>
